<compile_context>
chip_gen: v7x
topology: tpu7x:2x2x1
jax: 0.10.0
libtpu: 0.0.40
codegen_flags: <defaults>
</compile_context>

<pallas_src>
import numpy as np
import jax
import jax.numpy as jnp
from jax import lax
from jax.experimental import pallas as pl
from jax.experimental.pallas import tpu as pltpu


def lstm_fc_kernel(x_ref,      # (T*B, D)   time-major, flattened input
                   wih0_ref,   # (D, 4H)    W_ih_l0^T
                   whh0_ref,   # (H, 4H)    W_hh_l0^T
                   b0_ref,     # (1, 4H)    b_ih_l0 + b_hh_l0
                   wih1_ref,   # (H, 4H)    W_ih_l1^T
                   whh1_ref,   # (H, 4H)    W_hh_l1^T
                   b1_ref,     # (1, 4H)    b_ih_l1 + b_hh_l1
                   wfc_ref,    # (1, H)     fc weight (row vector)
                   bfc_ref,    # (1, 1)     fc bias
                   out_ref,    # (B, 1)     output
                   xg0_ref):   # (T*B, 4H)  scratch: hoisted layer-0 input proj
    B = out_ref.shape[0]
    TB = x_ref.shape[0]
    T = TB // B
    H = whh0_ref.shape[0]

    whh0 = whh0_ref[...]
    wih1 = wih1_ref[...]
    whh1 = whh1_ref[...]

    # ---- Hoisted layer-0 input projection: one dense matmul, one dense store.
    # xg0[t*B + b, :] = x[b, t, :] @ W_ih0^T + (b_ih0 + b_hh0)
    xg0_ref[...] = (jnp.dot(x_ref[...], wih0_ref[...],
                            preferred_element_type=jnp.float32) + b0_ref[...])

    # Layer-1 bias, broadcast ONCE outside the recurrence (JAX won't CSE it).
    b1b = jnp.broadcast_to(b1_ref[...], (B, 4 * H))

    def sigmoid1(v):
        # Single EUP push (tanh) instead of exp + reciprocal.
        return 0.5 * jnp.tanh(0.5 * v) + 0.5

    def gates_to_hc(gates, c):
        # PyTorch gate order (i, f, g, o); H = 128 so every slice is
        # vreg-lane-aligned.
        i = sigmoid1(gates[:, 0:H])
        f = sigmoid1(gates[:, H:2 * H])
        g = jnp.tanh(gates[:, 2 * H:3 * H])
        o = sigmoid1(gates[:, 3 * H:4 * H])
        c_new = f * c + i * g
        h_new = o * jnp.tanh(c_new)
        return h_new, c_new

    def step(t, carry):
        h0, c0, h1, c1 = carry
        # Layer-1 recurrent matmul FIRST: depends only on the previous
        # iteration, so it overlaps layer 0's matmul + EUP chain when unrolled.
        r1 = jnp.dot(h1, whh1, preferred_element_type=jnp.float32)

        # Layer 0: input projection already hoisted -> ONE serial matmul.
        xg0_t = xg0_ref[pl.ds(pl.multiple_of(t * B, B), B), :]
        g0 = xg0_t + jnp.dot(h0, whh0, preferred_element_type=jnp.float32)
        h0, c0 = gates_to_hc(g0, c0)

        # Layer 1: un-fused; only the h0_t term sits behind layer 0.
        g1 = r1 + jnp.dot(h0, wih1, preferred_element_type=jnp.float32) + b1b
        h1, c1 = gates_to_hc(g1, c1)
        return (h0, c0, h1, c1)

    zeros = jnp.zeros((B, H), jnp.float32)
    _, _, h1, _ = lax.fori_loop(0, T, step, (zeros, zeros, zeros, zeros),
                                unroll=min(T, 8))

    # fc on the last timestep's top-layer hidden state: VPU mul + lane reduce.
    out_ref[...] = (jnp.sum(h1 * wfc_ref[...], axis=-1, keepdims=True)
                    + bfc_ref[...])


def stock_price_lstm_forward(x, params):
    """x: (B, T, D) float32 (PyTorch batch_first) -> (B, 1) float32."""
    B, T, D = x.shape
    H = params["whh0"].shape[1]          # weight_hh_l0 is (4H, H)

    # One tiny wrapper-side reorg: time-major + flatten so the in-kernel
    # hoisted projection is a single dense matmul with dense stores.
    x_tm = jnp.transpose(x.astype(jnp.float32), (1, 0, 2)).reshape(T * B, D)

    wih0_t = params["wih0"].T.astype(jnp.float32)                       # (D, 4H)
    whh0_t = params["whh0"].T.astype(jnp.float32)                       # (H, 4H)
    b0 = (params["bih0"] + params["bhh0"]).reshape(1, -1).astype(jnp.float32)
    wih1_t = params["wih1"].T.astype(jnp.float32)                       # (H, 4H)
    whh1_t = params["whh1"].T.astype(jnp.float32)                       # (H, 4H)
    b1 = (params["bih1"] + params["bhh1"]).reshape(1, -1).astype(jnp.float32)
    wfc = params["wfc"].reshape(1, H).astype(jnp.float32)               # (1, H)
    bfc = params["bfc"].reshape(1, 1).astype(jnp.float32)               # (1, 1)

    vmem = pl.BlockSpec(memory_space=pltpu.MemorySpace.VMEM)
    out = pl.pallas_call(
        lstm_fc_kernel,
        out_shape=jax.ShapeDtypeStruct((B, 1), jnp.float32),
        in_specs=[vmem] * 9,
        out_specs=vmem,
        scratch_shapes=[pltpu.VMEM((T * B, 4 * H), jnp.float32)],
        # For larger shapes: compiler_params=pltpu.CompilerParams(
        #     vmem_limit_bytes=...), grid=(T,) streaming, bf16 weights.
    )(x_tm, wih0_t, whh0_t, b0, wih1_t, whh1_t, b1, wfc, bfc)
    return out


def init_params(key, input_size, hidden_size):
    """Deterministic init mirroring PyTorch's U(-1/sqrt(H), 1/sqrt(H))."""
    H = hidden_size
    k = 1.0 / np.sqrt(H)
    keys = jax.random.split(key, 10)

    def u(kk, shape):
        return jax.random.uniform(kk, shape, jnp.float32, minval=-k, maxval=k)

    return {
        "wih0": u(keys[0], (4 * H, input_size)),
        "whh0": u(keys[1], (4 * H, H)),
        "bih0": u(keys[2], (4 * H,)),
        "bhh0": u(keys[3], (4 * H,)),
        "wih1": u(keys[4], (4 * H, H)),
        "whh1": u(keys[5], (4 * H, H)),
        "bih1": u(keys[6], (4 * H,)),
        "bhh1": u(keys[7], (4 * H,)),
        "wfc":  u(keys[8], (1, H)),
        "bfc":  u(keys[9], (1,)),
    }


def reference_forward(x, params):
    """Pure-JAX reference matching PyTorch nn.LSTM(batch_first) + Linear."""
    B, T, D = x.shape
    H = params["whh0"].shape[1]

    def cell(x_t, h, c, wih, whh, bih, bhh):
        gates = x_t @ wih.T + bih + h @ whh.T + bhh
        i = jax.nn.sigmoid(gates[:, 0:H])
        f = jax.nn.sigmoid(gates[:, H:2 * H])
        g = jnp.tanh(gates[:, 2 * H:3 * H])
        o = jax.nn.sigmoid(gates[:, 3 * H:4 * H])
        c = f * c + i * g
        h = o * jnp.tanh(c)
        return h, c

    h0 = c0 = h1 = c1 = jnp.zeros((B, H), jnp.float32)
    for t in range(T):
        x_t = x[:, t, :]
        h0, c0 = cell(x_t, h0, c0, params["wih0"], params["whh0"],
                      params["bih0"], params["bhh0"])
        h1, c1 = cell(h0, h1, c1, params["wih1"], params["whh1"],
                      params["bih1"], params["bhh1"])
    return h1 @ params["wfc"].T + params["bfc"]


if __name__ == "__main__":
    # batch=8 (one f32 sublane tile), seq=8, input_size=4 (e.g. OHLC features),
    # hidden=128 (the module's default hidden_size).
    B, T, D, H = 8, 8, 4, 128

    key = jax.random.PRNGKey(0)
    k_x, k_p = jax.random.split(key)
    x = jax.random.normal(k_x, (B, T, D), jnp.float32)
    params = init_params(k_p, input_size=D, hidden_size=H)

    out = stock_price_lstm_forward(x, params)
    out = jax.block_until_ready(out)

    ref = reference_forward(x, params)
    assert out.shape == (B, 1)
    np.testing.assert_allclose(np.asarray(out), np.asarray(ref),
                               rtol=1e-4, atol=1e-4)
    print("KERNEL_OK")
</pallas_src>

<mosaic_0001>
module attributes {stable_mosaic.version = 11 : i64} {
  func.func @lstm_fc_kernel(%arg0: memref<64x4xf32, #tpu.memory_space<vmem>>, %arg1: memref<4x512xf32, #tpu.memory_space<vmem>>, %arg2: memref<128x512xf32, #tpu.memory_space<vmem>>, %arg3: memref<1x512xf32, #tpu.memory_space<vmem>>, %arg4: memref<128x512xf32, #tpu.memory_space<vmem>>, %arg5: memref<128x512xf32, #tpu.memory_space<vmem>>, %arg6: memref<1x512xf32, #tpu.memory_space<vmem>>, %arg7: memref<1x128xf32, #tpu.memory_space<vmem>>, %arg8: memref<1x1xf32, #tpu.memory_space<vmem>>, %arg9: memref<8x1xf32, #tpu.memory_space<vmem>>, %arg10: memref<64x512xf32, #tpu.memory_space<vmem>>) attributes {dimension_semantics = [], scalar_prefetch = 0 : i64, scratch_operands = 1 : i64, tpu.core_type = #tpu.core_type<tc>} {
    %c0 = arith.constant 0 : index
    %c0_0 = arith.constant 0 : index
    %0 = vector.load %arg2[%c0, %c0_0] : memref<128x512xf32, #tpu.memory_space<vmem>>, vector<128x512xf32>
    %c0_1 = arith.constant 0 : index
    %c0_2 = arith.constant 0 : index
    %1 = vector.load %arg4[%c0_1, %c0_2] : memref<128x512xf32, #tpu.memory_space<vmem>>, vector<128x512xf32>
    %c0_3 = arith.constant 0 : index
    %c0_4 = arith.constant 0 : index
    %2 = vector.load %arg5[%c0_3, %c0_4] : memref<128x512xf32, #tpu.memory_space<vmem>>, vector<128x512xf32>
    %c0_5 = arith.constant 0 : index
    %c0_6 = arith.constant 0 : index
    %3 = vector.load %arg0[%c0_5, %c0_6] : memref<64x4xf32, #tpu.memory_space<vmem>>, vector<64x4xf32>
    %c0_7 = arith.constant 0 : index
    %c0_8 = arith.constant 0 : index
    %4 = vector.load %arg1[%c0_7, %c0_8] : memref<4x512xf32, #tpu.memory_space<vmem>>, vector<4x512xf32>
    %cst = arith.constant dense<0.000000e+00> : vector<64x512xf32>
    %5 = tpu.matmul %3, %4, %cst {dimension_numbers = #tpu.dot_dimension_numbers<[1], [0], [0], [1], [0, 0, 1, 1], [], []>} : vector<64x4xf32>, vector<4x512xf32>, vector<64x512xf32> -> vector<64x512xf32>
    %c0_9 = arith.constant 0 : index
    %c0_10 = arith.constant 0 : index
    %6 = vector.load %arg3[%c0_9, %c0_10] : memref<1x512xf32, #tpu.memory_space<vmem>>, vector<1x512xf32>
    %7 = vector.broadcast %6 : vector<1x512xf32> to vector<64x512xf32>
    %8 = arith.addf %5, %7 : vector<64x512xf32>
    %c0_11 = arith.constant 0 : index
    %c0_12 = arith.constant 0 : index
    %9 = vector.load %arg10[%c0_11, %c0_12] : memref<64x512xf32, #tpu.memory_space<vmem>>, vector<64x512xf32>
    tpu.vector_store %arg10[%c0_11, %c0_12], %8 {strides = array<i32>} : memref<64x512xf32, #tpu.memory_space<vmem>>, vector<64x512xf32>,
    %c0_13 = arith.constant 0 : index
    %c0_14 = arith.constant 0 : index
    %10 = vector.load %arg6[%c0_13, %c0_14] : memref<1x512xf32, #tpu.memory_space<vmem>>, vector<1x512xf32>
    %11 = vector.shape_cast %10 : vector<1x512xf32> to vector<1x512xf32>
    %12 = vector.broadcast %11 : vector<1x512xf32> to vector<8x512xf32>
    %cst_15 = arith.constant 0.000000e+00 : f32
    %13 = vector.broadcast %cst_15 : f32 to vector<8x128xf32>
    %c0_i32 = arith.constant 0 : i32
    %cst_16 = arith.constant dense<0.000000e+00> : vector<8x512xf32>
    %14 = tpu.matmul %13, %2, %cst_16 {dimension_numbers = #tpu.dot_dimension_numbers<[1], [0], [0], [1], [0, 0, 1, 1], [], []>} : vector<8x128xf32>, vector<128x512xf32>, vector<8x512xf32> -> vector<8x512xf32>
    %c8_i32 = arith.constant 8 : i32
    %15 = arith.muli %c0_i32, %c8_i32 : i32
    %16 = tpu.assume_multiple %15, 8 : i32
    %17 = arith.index_cast %16 : i32 to index
    %c0_17 = arith.constant 0 : index
    %18 = vector.load %arg10[%17, %c0_17] : memref<64x512xf32, #tpu.memory_space<vmem>>, vector<8x512xf32>
    %cst_18 = arith.constant dense<0.000000e+00> : vector<8x512xf32>
    %19 = tpu.matmul %13, %0, %cst_18 {dimension_numbers = #tpu.dot_dimension_numbers<[1], [0], [0], [1], [0, 0, 1, 1], [], []>} : vector<8x128xf32>, vector<128x512xf32>, vector<8x512xf32> -> vector<8x512xf32>
    %20 = arith.addf %18, %19 : vector<8x512xf32>
    %21 = vector.extract_strided_slice %20 {offsets = [0, 0], sizes = [8, 128], strides = [1, 1]} : vector<8x512xf32> to vector<8x128xf32>
    %cst_19 = arith.constant 5.000000e-01 : f32
    %22 = vector.broadcast %cst_19 : f32 to vector<8x128xf32>
    %23 = arith.mulf %22, %21 : vector<8x128xf32>
    %24 = math.tanh %23 : vector<8x128xf32>
    %cst_20 = arith.constant 5.000000e-01 : f32
    %25 = vector.broadcast %cst_20 : f32 to vector<8x128xf32>
    %26 = arith.mulf %25, %24 : vector<8x128xf32>
    %cst_21 = arith.constant 5.000000e-01 : f32
    %27 = vector.broadcast %cst_21 : f32 to vector<8x128xf32>
    %28 = arith.addf %26, %27 : vector<8x128xf32>
    %29 = vector.extract_strided_slice %20 {offsets = [0, 128], sizes = [8, 128], strides = [1, 1]} : vector<8x512xf32> to vector<8x128xf32>
    %cst_22 = arith.constant 5.000000e-01 : f32
    %30 = vector.broadcast %cst_22 : f32 to vector<8x128xf32>
    %31 = arith.mulf %30, %29 : vector<8x128xf32>
    %32 = math.tanh %31 : vector<8x128xf32>
    %cst_23 = arith.constant 5.000000e-01 : f32
    %33 = vector.broadcast %cst_23 : f32 to vector<8x128xf32>
    %34 = arith.mulf %33, %32 : vector<8x128xf32>
    %cst_24 = arith.constant 5.000000e-01 : f32
    %35 = vector.broadcast %cst_24 : f32 to vector<8x128xf32>
    %36 = arith.addf %34, %35 : vector<8x128xf32>
    %37 = vector.extract_strided_slice %20 {offsets = [0, 256], sizes = [8, 128], strides = [1, 1]} : vector<8x512xf32> to vector<8x128xf32>
    %38 = math.tanh %37 : vector<8x128xf32>
    %39 = vector.extract_strided_slice %20 {offsets = [0, 384], sizes = [8, 128], strides = [1, 1]} : vector<8x512xf32> to vector<8x128xf32>
    %cst_25 = arith.constant 5.000000e-01 : f32
    %40 = vector.broadcast %cst_25 : f32 to vector<8x128xf32>
    %41 = arith.mulf %40, %39 : vector<8x128xf32>
    %42 = math.tanh %41 : vector<8x128xf32>
    %cst_26 = arith.constant 5.000000e-01 : f32
    %43 = vector.broadcast %cst_26 : f32 to vector<8x128xf32>
    %44 = arith.mulf %43, %42 : vector<8x128xf32>
    %cst_27 = arith.constant 5.000000e-01 : f32
    %45 = vector.broadcast %cst_27 : f32 to vector<8x128xf32>
    %46 = arith.addf %44, %45 : vector<8x128xf32>
    %47 = arith.mulf %36, %13 : vector<8x128xf32>
    %48 = arith.mulf %28, %38 : vector<8x128xf32>
    %49 = arith.addf %47, %48 : vector<8x128xf32>
    %50 = math.tanh %49 : vector<8x128xf32>
    %51 = arith.mulf %46, %50 : vector<8x128xf32>
    %cst_28 = arith.constant dense<0.000000e+00> : vector<8x512xf32>
    %52 = tpu.matmul %51, %1, %cst_28 {dimension_numbers = #tpu.dot_dimension_numbers<[1], [0], [0], [1], [0, 0, 1, 1], [], []>} : vector<8x128xf32>, vector<128x512xf32>, vector<8x512xf32> -> vector<8x512xf32>
    %53 = arith.addf %14, %52 : vector<8x512xf32>
    %54 = arith.addf %53, %12 : vector<8x512xf32>
    %55 = vector.extract_strided_slice %54 {offsets = [0, 0], sizes = [8, 128], strides = [1, 1]} : vector<8x512xf32> to vector<8x128xf32>
    %cst_29 = arith.constant 5.000000e-01 : f32
    %56 = vector.broadcast %cst_29 : f32 to vector<8x128xf32>
    %57 = arith.mulf %56, %55 : vector<8x128xf32>
    %58 = math.tanh %57 : vector<8x128xf32>
    %cst_30 = arith.constant 5.000000e-01 : f32
    %59 = vector.broadcast %cst_30 : f32 to vector<8x128xf32>
    %60 = arith.mulf %59, %58 : vector<8x128xf32>
    %cst_31 = arith.constant 5.000000e-01 : f32
    %61 = vector.broadcast %cst_31 : f32 to vector<8x128xf32>
    %62 = arith.addf %60, %61 : vector<8x128xf32>
    %63 = vector.extract_strided_slice %54 {offsets = [0, 128], sizes = [8, 128], strides = [1, 1]} : vector<8x512xf32> to vector<8x128xf32>
    %cst_32 = arith.constant 5.000000e-01 : f32
    %64 = vector.broadcast %cst_32 : f32 to vector<8x128xf32>
    %65 = arith.mulf %64, %63 : vector<8x128xf32>
    %66 = math.tanh %65 : vector<8x128xf32>
    %cst_33 = arith.constant 5.000000e-01 : f32
    %67 = vector.broadcast %cst_33 : f32 to vector<8x128xf32>
    %68 = arith.mulf %67, %66 : vector<8x128xf32>
    %cst_34 = arith.constant 5.000000e-01 : f32
    %69 = vector.broadcast %cst_34 : f32 to vector<8x128xf32>
    %70 = arith.addf %68, %69 : vector<8x128xf32>
    %71 = vector.extract_strided_slice %54 {offsets = [0, 256], sizes = [8, 128], strides = [1, 1]} : vector<8x512xf32> to vector<8x128xf32>
    %72 = math.tanh %71 : vector<8x128xf32>
    %73 = vector.extract_strided_slice %54 {offsets = [0, 384], sizes = [8, 128], strides = [1, 1]} : vector<8x512xf32> to vector<8x128xf32>
    %cst_35 = arith.constant 5.000000e-01 : f32
    %74 = vector.broadcast %cst_35 : f32 to vector<8x128xf32>
    %75 = arith.mulf %74, %73 : vector<8x128xf32>
    %76 = math.tanh %75 : vector<8x128xf32>
    %cst_36 = arith.constant 5.000000e-01 : f32
    %77 = vector.broadcast %cst_36 : f32 to vector<8x128xf32>
    %78 = arith.mulf %77, %76 : vector<8x128xf32>
    %cst_37 = arith.constant 5.000000e-01 : f32
    %79 = vector.broadcast %cst_37 : f32 to vector<8x128xf32>
    %80 = arith.addf %78, %79 : vector<8x128xf32>
    %81 = arith.mulf %70, %13 : vector<8x128xf32>
    %82 = arith.mulf %62, %72 : vector<8x128xf32>
    %83 = arith.addf %81, %82 : vector<8x128xf32>
    %84 = math.tanh %83 : vector<8x128xf32>
    %85 = arith.mulf %80, %84 : vector<8x128xf32>
    %c1_i32 = arith.constant 1 : i32
    %cst_38 = arith.constant dense<0.000000e+00> : vector<8x512xf32>
    %86 = tpu.matmul %85, %2, %cst_38 {dimension_numbers = #tpu.dot_dimension_numbers<[1], [0], [0], [1], [0, 0, 1, 1], [], []>} : vector<8x128xf32>, vector<128x512xf32>, vector<8x512xf32> -> vector<8x512xf32>
    %c8_i32_39 = arith.constant 8 : i32
    %87 = arith.muli %c1_i32, %c8_i32_39 : i32
    %88 = tpu.assume_multiple %87, 8 : i32
    %89 = arith.index_cast %88 : i32 to index
    %c0_40 = arith.constant 0 : index
    %90 = vector.load %arg10[%89, %c0_40] : memref<64x512xf32, #tpu.memory_space<vmem>>, vector<8x512xf32>
    %cst_41 = arith.constant dense<0.000000e+00> : vector<8x512xf32>
    %91 = tpu.matmul %51, %0, %cst_41 {dimension_numbers = #tpu.dot_dimension_numbers<[1], [0], [0], [1], [0, 0, 1, 1], [], []>} : vector<8x128xf32>, vector<128x512xf32>, vector<8x512xf32> -> vector<8x512xf32>
    %92 = arith.addf %90, %91 : vector<8x512xf32>
    %93 = vector.extract_strided_slice %92 {offsets = [0, 0], sizes = [8, 128], strides = [1, 1]} : vector<8x512xf32> to vector<8x128xf32>
    %cst_42 = arith.constant 5.000000e-01 : f32
    %94 = vector.broadcast %cst_42 : f32 to vector<8x128xf32>
    %95 = arith.mulf %94, %93 : vector<8x128xf32>
    %96 = math.tanh %95 : vector<8x128xf32>
    %cst_43 = arith.constant 5.000000e-01 : f32
    %97 = vector.broadcast %cst_43 : f32 to vector<8x128xf32>
    %98 = arith.mulf %97, %96 : vector<8x128xf32>
    %cst_44 = arith.constant 5.000000e-01 : f32
    %99 = vector.broadcast %cst_44 : f32 to vector<8x128xf32>
    %100 = arith.addf %98, %99 : vector<8x128xf32>
    %101 = vector.extract_strided_slice %92 {offsets = [0, 128], sizes = [8, 128], strides = [1, 1]} : vector<8x512xf32> to vector<8x128xf32>
    %cst_45 = arith.constant 5.000000e-01 : f32
    %102 = vector.broadcast %cst_45 : f32 to vector<8x128xf32>
    %103 = arith.mulf %102, %101 : vector<8x128xf32>
    %104 = math.tanh %103 : vector<8x128xf32>
    %cst_46 = arith.constant 5.000000e-01 : f32
    %105 = vector.broadcast %cst_46 : f32 to vector<8x128xf32>
    %106 = arith.mulf %105, %104 : vector<8x128xf32>
    %cst_47 = arith.constant 5.000000e-01 : f32
    %107 = vector.broadcast %cst_47 : f32 to vector<8x128xf32>
    %108 = arith.addf %106, %107 : vector<8x128xf32>
    %109 = vector.extract_strided_slice %92 {offsets = [0, 256], sizes = [8, 128], strides = [1, 1]} : vector<8x512xf32> to vector<8x128xf32>
    %110 = math.tanh %109 : vector<8x128xf32>
    %111 = vector.extract_strided_slice %92 {offsets = [0, 384], sizes = [8, 128], strides = [1, 1]} : vector<8x512xf32> to vector<8x128xf32>
    %cst_48 = arith.constant 5.000000e-01 : f32
    %112 = vector.broadcast %cst_48 : f32 to vector<8x128xf32>
    %113 = arith.mulf %112, %111 : vector<8x128xf32>
    %114 = math.tanh %113 : vector<8x128xf32>
    %cst_49 = arith.constant 5.000000e-01 : f32
    %115 = vector.broadcast %cst_49 : f32 to vector<8x128xf32>
    %116 = arith.mulf %115, %114 : vector<8x128xf32>
    %cst_50 = arith.constant 5.000000e-01 : f32
    %117 = vector.broadcast %cst_50 : f32 to vector<8x128xf32>
    %118 = arith.addf %116, %117 : vector<8x128xf32>
    %119 = arith.mulf %108, %49 : vector<8x128xf32>
    %120 = arith.mulf %100, %110 : vector<8x128xf32>
    %121 = arith.addf %119, %120 : vector<8x128xf32>
    %122 = math.tanh %121 : vector<8x128xf32>
    %123 = arith.mulf %118, %122 : vector<8x128xf32>
    %cst_51 = arith.constant dense<0.000000e+00> : vector<8x512xf32>
    %124 = tpu.matmul %123, %1, %cst_51 {dimension_numbers = #tpu.dot_dimension_numbers<[1], [0], [0], [1], [0, 0, 1, 1], [], []>} : vector<8x128xf32>, vector<128x512xf32>, vector<8x512xf32> -> vector<8x512xf32>
    %125 = arith.addf %86, %124 : vector<8x512xf32>
    %126 = arith.addf %125, %12 : vector<8x512xf32>
    %127 = vector.extract_strided_slice %126 {offsets = [0, 0], sizes = [8, 128], strides = [1, 1]} : vector<8x512xf32> to vector<8x128xf32>
    %cst_52 = arith.constant 5.000000e-01 : f32
    %128 = vector.broadcast %cst_52 : f32 to vector<8x128xf32>
    %129 = arith.mulf %128, %127 : vector<8x128xf32>
    %130 = math.tanh %129 : vector<8x128xf32>
    %cst_53 = arith.constant 5.000000e-01 : f32
    %131 = vector.broadcast %cst_53 : f32 to vector<8x128xf32>
    %132 = arith.mulf %131, %130 : vector<8x128xf32>
    %cst_54 = arith.constant 5.000000e-01 : f32
    %133 = vector.broadcast %cst_54 : f32 to vector<8x128xf32>
    %134 = arith.addf %132, %133 : vector<8x128xf32>
    %135 = vector.extract_strided_slice %126 {offsets = [0, 128], sizes = [8, 128], strides = [1, 1]} : vector<8x512xf32> to vector<8x128xf32>
    %cst_55 = arith.constant 5.000000e-01 : f32
    %136 = vector.broadcast %cst_55 : f32 to vector<8x128xf32>
    %137 = arith.mulf %136, %135 : vector<8x128xf32>
    %138 = math.tanh %137 : vector<8x128xf32>
    %cst_56 = arith.constant 5.000000e-01 : f32
    %139 = vector.broadcast %cst_56 : f32 to vector<8x128xf32>
    %140 = arith.mulf %139, %138 : vector<8x128xf32>
    %cst_57 = arith.constant 5.000000e-01 : f32
    %141 = vector.broadcast %cst_57 : f32 to vector<8x128xf32>
    %142 = arith.addf %140, %141 : vector<8x128xf32>
    %143 = vector.extract_strided_slice %126 {offsets = [0, 256], sizes = [8, 128], strides = [1, 1]} : vector<8x512xf32> to vector<8x128xf32>
    %144 = math.tanh %143 : vector<8x128xf32>
    %145 = vector.extract_strided_slice %126 {offsets = [0, 384], sizes = [8, 128], strides = [1, 1]} : vector<8x512xf32> to vector<8x128xf32>
    %cst_58 = arith.constant 5.000000e-01 : f32
    %146 = vector.broadcast %cst_58 : f32 to vector<8x128xf32>
    %147 = arith.mulf %146, %145 : vector<8x128xf32>
    %148 = math.tanh %147 : vector<8x128xf32>
    %cst_59 = arith.constant 5.000000e-01 : f32
    %149 = vector.broadcast %cst_59 : f32 to vector<8x128xf32>
    %150 = arith.mulf %149, %148 : vector<8x128xf32>
    %cst_60 = arith.constant 5.000000e-01 : f32
    %151 = vector.broadcast %cst_60 : f32 to vector<8x128xf32>
    %152 = arith.addf %150, %151 : vector<8x128xf32>
    %153 = arith.mulf %142, %83 : vector<8x128xf32>
    %154 = arith.mulf %134, %144 : vector<8x128xf32>
    %155 = arith.addf %153, %154 : vector<8x128xf32>
    %156 = math.tanh %155 : vector<8x128xf32>
    %157 = arith.mulf %152, %156 : vector<8x128xf32>
    %c2_i32 = arith.constant 2 : i32
    %cst_61 = arith.constant dense<0.000000e+00> : vector<8x512xf32>
    %158 = tpu.matmul %157, %2, %cst_61 {dimension_numbers = #tpu.dot_dimension_numbers<[1], [0], [0], [1], [0, 0, 1, 1], [], []>} : vector<8x128xf32>, vector<128x512xf32>, vector<8x512xf32> -> vector<8x512xf32>
    %c8_i32_62 = arith.constant 8 : i32
    %159 = arith.muli %c2_i32, %c8_i32_62 : i32
    %160 = tpu.assume_multiple %159, 8 : i32
    %161 = arith.index_cast %160 : i32 to index
    %c0_63 = arith.constant 0 : index
    %162 = vector.load %arg10[%161, %c0_63] : memref<64x512xf32, #tpu.memory_space<vmem>>, vector<8x512xf32>
    %cst_64 = arith.constant dense<0.000000e+00> : vector<8x512xf32>
    %163 = tpu.matmul %123, %0, %cst_64 {dimension_numbers = #tpu.dot_dimension_numbers<[1], [0], [0], [1], [0, 0, 1, 1], [], []>} : vector<8x128xf32>, vector<128x512xf32>, vector<8x512xf32> -> vector<8x512xf32>
    %164 = arith.addf %162, %163 : vector<8x512xf32>
    %165 = vector.extract_strided_slice %164 {offsets = [0, 0], sizes = [8, 128], strides = [1, 1]} : vector<8x512xf32> to vector<8x128xf32>
    %cst_65 = arith.constant 5.000000e-01 : f32
    %166 = vector.broadcast %cst_65 : f32 to vector<8x128xf32>
    %167 = arith.mulf %166, %165 : vector<8x128xf32>
    %168 = math.tanh %167 : vector<8x128xf32>
    %cst_66 = arith.constant 5.000000e-01 : f32
    %169 = vector.broadcast %cst_66 : f32 to vector<8x128xf32>
    %170 = arith.mulf %169, %168 : vector<8x128xf32>
    %cst_67 = arith.constant 5.000000e-01 : f32
    %171 = vector.broadcast %cst_67 : f32 to vector<8x128xf32>
    %172 = arith.addf %170, %171 : vector<8x128xf32>
    %173 = vector.extract_strided_slice %164 {offsets = [0, 128], sizes = [8, 128], strides = [1, 1]} : vector<8x512xf32> to vector<8x128xf32>
    %cst_68 = arith.constant 5.000000e-01 : f32
    %174 = vector.broadcast %cst_68 : f32 to vector<8x128xf32>
    %175 = arith.mulf %174, %173 : vector<8x128xf32>
    %176 = math.tanh %175 : vector<8x128xf32>
    %cst_69 = arith.constant 5.000000e-01 : f32
    %177 = vector.broadcast %cst_69 : f32 to vector<8x128xf32>
    %178 = arith.mulf %177, %176 : vector<8x128xf32>
    %cst_70 = arith.constant 5.000000e-01 : f32
    %179 = vector.broadcast %cst_70 : f32 to vector<8x128xf32>
    %180 = arith.addf %178, %179 : vector<8x128xf32>
    %181 = vector.extract_strided_slice %164 {offsets = [0, 256], sizes = [8, 128], strides = [1, 1]} : vector<8x512xf32> to vector<8x128xf32>
    %182 = math.tanh %181 : vector<8x128xf32>
    %183 = vector.extract_strided_slice %164 {offsets = [0, 384], sizes = [8, 128], strides = [1, 1]} : vector<8x512xf32> to vector<8x128xf32>
    %cst_71 = arith.constant 5.000000e-01 : f32
    %184 = vector.broadcast %cst_71 : f32 to vector<8x128xf32>
    %185 = arith.mulf %184, %183 : vector<8x128xf32>
    %186 = math.tanh %185 : vector<8x128xf32>
    %cst_72 = arith.constant 5.000000e-01 : f32
    %187 = vector.broadcast %cst_72 : f32 to vector<8x128xf32>
    %188 = arith.mulf %187, %186 : vector<8x128xf32>
    %cst_73 = arith.constant 5.000000e-01 : f32
    %189 = vector.broadcast %cst_73 : f32 to vector<8x128xf32>
    %190 = arith.addf %188, %189 : vector<8x128xf32>
    %191 = arith.mulf %180, %121 : vector<8x128xf32>
    %192 = arith.mulf %172, %182 : vector<8x128xf32>
    %193 = arith.addf %191, %192 : vector<8x128xf32>
    %194 = math.tanh %193 : vector<8x128xf32>
    %195 = arith.mulf %190, %194 : vector<8x128xf32>
    %cst_74 = arith.constant dense<0.000000e+00> : vector<8x512xf32>
    %196 = tpu.matmul %195, %1, %cst_74 {dimension_numbers = #tpu.dot_dimension_numbers<[1], [0], [0], [1], [0, 0, 1, 1], [], []>} : vector<8x128xf32>, vector<128x512xf32>, vector<8x512xf32> -> vector<8x512xf32>
    %197 = arith.addf %158, %196 : vector<8x512xf32>
    %198 = arith.addf %197, %12 : vector<8x512xf32>
    %199 = vector.extract_strided_slice %198 {offsets = [0, 0], sizes = [8, 128], strides = [1, 1]} : vector<8x512xf32> to vector<8x128xf32>
    %cst_75 = arith.constant 5.000000e-01 : f32
    %200 = vector.broadcast %cst_75 : f32 to vector<8x128xf32>
    %201 = arith.mulf %200, %199 : vector<8x128xf32>
    %202 = math.tanh %201 : vector<8x128xf32>
    %cst_76 = arith.constant 5.000000e-01 : f32
    %203 = vector.broadcast %cst_76 : f32 to vector<8x128xf32>
    %204 = arith.mulf %203, %202 : vector<8x128xf32>
    %cst_77 = arith.constant 5.000000e-01 : f32
    %205 = vector.broadcast %cst_77 : f32 to vector<8x128xf32>
    %206 = arith.addf %204, %205 : vector<8x128xf32>
    %207 = vector.extract_strided_slice %198 {offsets = [0, 128], sizes = [8, 128], strides = [1, 1]} : vector<8x512xf32> to vector<8x128xf32>
    %cst_78 = arith.constant 5.000000e-01 : f32
    %208 = vector.broadcast %cst_78 : f32 to vector<8x128xf32>
    %209 = arith.mulf %208, %207 : vector<8x128xf32>
    %210 = math.tanh %209 : vector<8x128xf32>
    %cst_79 = arith.constant 5.000000e-01 : f32
    %211 = vector.broadcast %cst_79 : f32 to vector<8x128xf32>
    %212 = arith.mulf %211, %210 : vector<8x128xf32>
    %cst_80 = arith.constant 5.000000e-01 : f32
    %213 = vector.broadcast %cst_80 : f32 to vector<8x128xf32>
    %214 = arith.addf %212, %213 : vector<8x128xf32>
    %215 = vector.extract_strided_slice %198 {offsets = [0, 256], sizes = [8, 128], strides = [1, 1]} : vector<8x512xf32> to vector<8x128xf32>
    %216 = math.tanh %215 : vector<8x128xf32>
    %217 = vector.extract_strided_slice %198 {offsets = [0, 384], sizes = [8, 128], strides = [1, 1]} : vector<8x512xf32> to vector<8x128xf32>
    %cst_81 = arith.constant 5.000000e-01 : f32
    %218 = vector.broadcast %cst_81 : f32 to vector<8x128xf32>
    %219 = arith.mulf %218, %217 : vector<8x128xf32>
    %220 = math.tanh %219 : vector<8x128xf32>
    %cst_82 = arith.constant 5.000000e-01 : f32
    %221 = vector.broadcast %cst_82 : f32 to vector<8x128xf32>
    %222 = arith.mulf %221, %220 : vector<8x128xf32>
    %cst_83 = arith.constant 5.000000e-01 : f32
    %223 = vector.broadcast %cst_83 : f32 to vector<8x128xf32>
    %224 = arith.addf %222, %223 : vector<8x128xf32>
    %225 = arith.mulf %214, %155 : vector<8x128xf32>
    %226 = arith.mulf %206, %216 : vector<8x128xf32>
    %227 = arith.addf %225, %226 : vector<8x128xf32>
    %228 = math.tanh %227 : vector<8x128xf32>
    %229 = arith.mulf %224, %228 : vector<8x128xf32>
    %c3_i32 = arith.constant 3 : i32
    %cst_84 = arith.constant dense<0.000000e+00> : vector<8x512xf32>
    %230 = tpu.matmul %229, %2, %cst_84 {dimension_numbers = #tpu.dot_dimension_numbers<[1], [0], [0], [1], [0, 0, 1, 1], [], []>} : vector<8x128xf32>, vector<128x512xf32>, vector<8x512xf32> -> vector<8x512xf32>
    %c8_i32_85 = arith.constant 8 : i32
    %231 = arith.muli %c3_i32, %c8_i32_85 : i32
    %232 = tpu.assume_multiple %231, 8 : i32
    %233 = arith.index_cast %232 : i32 to index
    %c0_86 = arith.constant 0 : index
    %234 = vector.load %arg10[%233, %c0_86] : memref<64x512xf32, #tpu.memory_space<vmem>>, vector<8x512xf32>
    %cst_87 = arith.constant dense<0.000000e+00> : vector<8x512xf32>
    %235 = tpu.matmul %195, %0, %cst_87 {dimension_numbers = #tpu.dot_dimension_numbers<[1], [0], [0], [1], [0, 0, 1, 1], [], []>} : vector<8x128xf32>, vector<128x512xf32>, vector<8x512xf32> -> vector<8x512xf32>
    %236 = arith.addf %234, %235 : vector<8x512xf32>
    %237 = vector.extract_strided_slice %236 {offsets = [0, 0], sizes = [8, 128], strides = [1, 1]} : vector<8x512xf32> to vector<8x128xf32>
    %cst_88 = arith.constant 5.000000e-01 : f32
    %238 = vector.broadcast %cst_88 : f32 to vector<8x128xf32>
    %239 = arith.mulf %238, %237 : vector<8x128xf32>
    %240 = math.tanh %239 : vector<8x128xf32>
    %cst_89 = arith.constant 5.000000e-01 : f32
    %241 = vector.broadcast %cst_89 : f32 to vector<8x128xf32>
    %242 = arith.mulf %241, %240 : vector<8x128xf32>
    %cst_90 = arith.constant 5.000000e-01 : f32
    %243 = vector.broadcast %cst_90 : f32 to vector<8x128xf32>
    %244 = arith.addf %242, %243 : vector<8x128xf32>
    %245 = vector.extract_strided_slice %236 {offsets = [0, 128], sizes = [8, 128], strides = [1, 1]} : vector<8x512xf32> to vector<8x128xf32>
    %cst_91 = arith.constant 5.000000e-01 : f32
    %246 = vector.broadcast %cst_91 : f32 to vector<8x128xf32>
    %247 = arith.mulf %246, %245 : vector<8x128xf32>
    %248 = math.tanh %247 : vector<8x128xf32>
    %cst_92 = arith.constant 5.000000e-01 : f32
    %249 = vector.broadcast %cst_92 : f32 to vector<8x128xf32>
    %250 = arith.mulf %249, %248 : vector<8x128xf32>
    %cst_93 = arith.constant 5.000000e-01 : f32
    %251 = vector.broadcast %cst_93 : f32 to vector<8x128xf32>
    %252 = arith.addf %250, %251 : vector<8x128xf32>
    %253 = vector.extract_strided_slice %236 {offsets = [0, 256], sizes = [8, 128], strides = [1, 1]} : vector<8x512xf32> to vector<8x128xf32>
    %254 = math.tanh %253 : vector<8x128xf32>
    %255 = vector.extract_strided_slice %236 {offsets = [0, 384], sizes = [8, 128], strides = [1, 1]} : vector<8x512xf32> to vector<8x128xf32>
    %cst_94 = arith.constant 5.000000e-01 : f32
    %256 = vector.broadcast %cst_94 : f32 to vector<8x128xf32>
    %257 = arith.mulf %256, %255 : vector<8x128xf32>
    %258 = math.tanh %257 : vector<8x128xf32>
    %cst_95 = arith.constant 5.000000e-01 : f32
    %259 = vector.broadcast %cst_95 : f32 to vector<8x128xf32>
    %260 = arith.mulf %259, %258 : vector<8x128xf32>
    %cst_96 = arith.constant 5.000000e-01 : f32
    %261 = vector.broadcast %cst_96 : f32 to vector<8x128xf32>
    %262 = arith.addf %260, %261 : vector<8x128xf32>
    %263 = arith.mulf %252, %193 : vector<8x128xf32>
    %264 = arith.mulf %244, %254 : vector<8x128xf32>
    %265 = arith.addf %263, %264 : vector<8x128xf32>
    %266 = math.tanh %265 : vector<8x128xf32>
    %267 = arith.mulf %262, %266 : vector<8x128xf32>
    %cst_97 = arith.constant dense<0.000000e+00> : vector<8x512xf32>
    %268 = tpu.matmul %267, %1, %cst_97 {dimension_numbers = #tpu.dot_dimension_numbers<[1], [0], [0], [1], [0, 0, 1, 1], [], []>} : vector<8x128xf32>, vector<128x512xf32>, vector<8x512xf32> -> vector<8x512xf32>
    %269 = arith.addf %230, %268 : vector<8x512xf32>
    %270 = arith.addf %269, %12 : vector<8x512xf32>
    %271 = vector.extract_strided_slice %270 {offsets = [0, 0], sizes = [8, 128], strides = [1, 1]} : vector<8x512xf32> to vector<8x128xf32>
    %cst_98 = arith.constant 5.000000e-01 : f32
    %272 = vector.broadcast %cst_98 : f32 to vector<8x128xf32>
    %273 = arith.mulf %272, %271 : vector<8x128xf32>
    %274 = math.tanh %273 : vector<8x128xf32>
    %cst_99 = arith.constant 5.000000e-01 : f32
    %275 = vector.broadcast %cst_99 : f32 to vector<8x128xf32>
    %276 = arith.mulf %275, %274 : vector<8x128xf32>
    %cst_100 = arith.constant 5.000000e-01 : f32
    %277 = vector.broadcast %cst_100 : f32 to vector<8x128xf32>
    %278 = arith.addf %276, %277 : vector<8x128xf32>
    %279 = vector.extract_strided_slice %270 {offsets = [0, 128], sizes = [8, 128], strides = [1, 1]} : vector<8x512xf32> to vector<8x128xf32>
    %cst_101 = arith.constant 5.000000e-01 : f32
    %280 = vector.broadcast %cst_101 : f32 to vector<8x128xf32>
    %281 = arith.mulf %280, %279 : vector<8x128xf32>
    %282 = math.tanh %281 : vector<8x128xf32>
    %cst_102 = arith.constant 5.000000e-01 : f32
    %283 = vector.broadcast %cst_102 : f32 to vector<8x128xf32>
    %284 = arith.mulf %283, %282 : vector<8x128xf32>
    %cst_103 = arith.constant 5.000000e-01 : f32
    %285 = vector.broadcast %cst_103 : f32 to vector<8x128xf32>
    %286 = arith.addf %284, %285 : vector<8x128xf32>
    %287 = vector.extract_strided_slice %270 {offsets = [0, 256], sizes = [8, 128], strides = [1, 1]} : vector<8x512xf32> to vector<8x128xf32>
    %288 = math.tanh %287 : vector<8x128xf32>
    %289 = vector.extract_strided_slice %270 {offsets = [0, 384], sizes = [8, 128], strides = [1, 1]} : vector<8x512xf32> to vector<8x128xf32>
    %cst_104 = arith.constant 5.000000e-01 : f32
    %290 = vector.broadcast %cst_104 : f32 to vector<8x128xf32>
    %291 = arith.mulf %290, %289 : vector<8x128xf32>
    %292 = math.tanh %291 : vector<8x128xf32>
    %cst_105 = arith.constant 5.000000e-01 : f32
    %293 = vector.broadcast %cst_105 : f32 to vector<8x128xf32>
    %294 = arith.mulf %293, %292 : vector<8x128xf32>
    %cst_106 = arith.constant 5.000000e-01 : f32
    %295 = vector.broadcast %cst_106 : f32 to vector<8x128xf32>
    %296 = arith.addf %294, %295 : vector<8x128xf32>
    %297 = arith.mulf %286, %227 : vector<8x128xf32>
    %298 = arith.mulf %278, %288 : vector<8x128xf32>
    %299 = arith.addf %297, %298 : vector<8x128xf32>
    %300 = math.tanh %299 : vector<8x128xf32>
    %301 = arith.mulf %296, %300 : vector<8x128xf32>
    %c4_i32 = arith.constant 4 : i32
    %cst_107 = arith.constant dense<0.000000e+00> : vector<8x512xf32>
    %302 = tpu.matmul %301, %2, %cst_107 {dimension_numbers = #tpu.dot_dimension_numbers<[1], [0], [0], [1], [0, 0, 1, 1], [], []>} : vector<8x128xf32>, vector<128x512xf32>, vector<8x512xf32> -> vector<8x512xf32>
    %c8_i32_108 = arith.constant 8 : i32
    %303 = arith.muli %c4_i32, %c8_i32_108 : i32
    %304 = tpu.assume_multiple %303, 8 : i32
    %305 = arith.index_cast %304 : i32 to index
    %c0_109 = arith.constant 0 : index
    %306 = vector.load %arg10[%305, %c0_109] : memref<64x512xf32, #tpu.memory_space<vmem>>, vector<8x512xf32>
    %cst_110 = arith.constant dense<0.000000e+00> : vector<8x512xf32>
    %307 = tpu.matmul %267, %0, %cst_110 {dimension_numbers = #tpu.dot_dimension_numbers<[1], [0], [0], [1], [0, 0, 1, 1], [], []>} : vector<8x128xf32>, vector<128x512xf32>, vector<8x512xf32> -> vector<8x512xf32>
    %308 = arith.addf %306, %307 : vector<8x512xf32>
    %309 = vector.extract_strided_slice %308 {offsets = [0, 0], sizes = [8, 128], strides = [1, 1]} : vector<8x512xf32> to vector<8x128xf32>
    %cst_111 = arith.constant 5.000000e-01 : f32
    %310 = vector.broadcast %cst_111 : f32 to vector<8x128xf32>
    %311 = arith.mulf %310, %309 : vector<8x128xf32>
    %312 = math.tanh %311 : vector<8x128xf32>
    %cst_112 = arith.constant 5.000000e-01 : f32
    %313 = vector.broadcast %cst_112 : f32 to vector<8x128xf32>
    %314 = arith.mulf %313, %312 : vector<8x128xf32>
    %cst_113 = arith.constant 5.000000e-01 : f32
    %315 = vector.broadcast %cst_113 : f32 to vector<8x128xf32>
    %316 = arith.addf %314, %315 : vector<8x128xf32>
    %317 = vector.extract_strided_slice %308 {offsets = [0, 128], sizes = [8, 128], strides = [1, 1]} : vector<8x512xf32> to vector<8x128xf32>
    %cst_114 = arith.constant 5.000000e-01 : f32
    %318 = vector.broadcast %cst_114 : f32 to vector<8x128xf32>
    %319 = arith.mulf %318, %317 : vector<8x128xf32>
    %320 = math.tanh %319 : vector<8x128xf32>
    %cst_115 = arith.constant 5.000000e-01 : f32
    %321 = vector.broadcast %cst_115 : f32 to vector<8x128xf32>
    %322 = arith.mulf %321, %320 : vector<8x128xf32>
    %cst_116 = arith.constant 5.000000e-01 : f32
    %323 = vector.broadcast %cst_116 : f32 to vector<8x128xf32>
    %324 = arith.addf %322, %323 : vector<8x128xf32>
    %325 = vector.extract_strided_slice %308 {offsets = [0, 256], sizes = [8, 128], strides = [1, 1]} : vector<8x512xf32> to vector<8x128xf32>
    %326 = math.tanh %325 : vector<8x128xf32>
    %327 = vector.extract_strided_slice %308 {offsets = [0, 384], sizes = [8, 128], strides = [1, 1]} : vector<8x512xf32> to vector<8x128xf32>
    %cst_117 = arith.constant 5.000000e-01 : f32
    %328 = vector.broadcast %cst_117 : f32 to vector<8x128xf32>
    %329 = arith.mulf %328, %327 : vector<8x128xf32>
    %330 = math.tanh %329 : vector<8x128xf32>
    %cst_118 = arith.constant 5.000000e-01 : f32
    %331 = vector.broadcast %cst_118 : f32 to vector<8x128xf32>
    %332 = arith.mulf %331, %330 : vector<8x128xf32>
    %cst_119 = arith.constant 5.000000e-01 : f32
    %333 = vector.broadcast %cst_119 : f32 to vector<8x128xf32>
    %334 = arith.addf %332, %333 : vector<8x128xf32>
    %335 = arith.mulf %324, %265 : vector<8x128xf32>
    %336 = arith.mulf %316, %326 : vector<8x128xf32>
    %337 = arith.addf %335, %336 : vector<8x128xf32>
    %338 = math.tanh %337 : vector<8x128xf32>
    %339 = arith.mulf %334, %338 : vector<8x128xf32>
    %cst_120 = arith.constant dense<0.000000e+00> : vector<8x512xf32>
    %340 = tpu.matmul %339, %1, %cst_120 {dimension_numbers = #tpu.dot_dimension_numbers<[1], [0], [0], [1], [0, 0, 1, 1], [], []>} : vector<8x128xf32>, vector<128x512xf32>, vector<8x512xf32> -> vector<8x512xf32>
    %341 = arith.addf %302, %340 : vector<8x512xf32>
    %342 = arith.addf %341, %12 : vector<8x512xf32>
    %343 = vector.extract_strided_slice %342 {offsets = [0, 0], sizes = [8, 128], strides = [1, 1]} : vector<8x512xf32> to vector<8x128xf32>
    %cst_121 = arith.constant 5.000000e-01 : f32
    %344 = vector.broadcast %cst_121 : f32 to vector<8x128xf32>
    %345 = arith.mulf %344, %343 : vector<8x128xf32>
    %346 = math.tanh %345 : vector<8x128xf32>
    %cst_122 = arith.constant 5.000000e-01 : f32
    %347 = vector.broadcast %cst_122 : f32 to vector<8x128xf32>
    %348 = arith.mulf %347, %346 : vector<8x128xf32>
    %cst_123 = arith.constant 5.000000e-01 : f32
    %349 = vector.broadcast %cst_123 : f32 to vector<8x128xf32>
    %350 = arith.addf %348, %349 : vector<8x128xf32>
    %351 = vector.extract_strided_slice %342 {offsets = [0, 128], sizes = [8, 128], strides = [1, 1]} : vector<8x512xf32> to vector<8x128xf32>
    %cst_124 = arith.constant 5.000000e-01 : f32
    %352 = vector.broadcast %cst_124 : f32 to vector<8x128xf32>
    %353 = arith.mulf %352, %351 : vector<8x128xf32>
    %354 = math.tanh %353 : vector<8x128xf32>
    %cst_125 = arith.constant 5.000000e-01 : f32
    %355 = vector.broadcast %cst_125 : f32 to vector<8x128xf32>
    %356 = arith.mulf %355, %354 : vector<8x128xf32>
    %cst_126 = arith.constant 5.000000e-01 : f32
    %357 = vector.broadcast %cst_126 : f32 to vector<8x128xf32>
    %358 = arith.addf %356, %357 : vector<8x128xf32>
    %359 = vector.extract_strided_slice %342 {offsets = [0, 256], sizes = [8, 128], strides = [1, 1]} : vector<8x512xf32> to vector<8x128xf32>
    %360 = math.tanh %359 : vector<8x128xf32>
    %361 = vector.extract_strided_slice %342 {offsets = [0, 384], sizes = [8, 128], strides = [1, 1]} : vector<8x512xf32> to vector<8x128xf32>
    %cst_127 = arith.constant 5.000000e-01 : f32
    %362 = vector.broadcast %cst_127 : f32 to vector<8x128xf32>
    %363 = arith.mulf %362, %361 : vector<8x128xf32>
    %364 = math.tanh %363 : vector<8x128xf32>
    %cst_128 = arith.constant 5.000000e-01 : f32
    %365 = vector.broadcast %cst_128 : f32 to vector<8x128xf32>
    %366 = arith.mulf %365, %364 : vector<8x128xf32>
    %cst_129 = arith.constant 5.000000e-01 : f32
    %367 = vector.broadcast %cst_129 : f32 to vector<8x128xf32>
    %368 = arith.addf %366, %367 : vector<8x128xf32>
    %369 = arith.mulf %358, %299 : vector<8x128xf32>
    %370 = arith.mulf %350, %360 : vector<8x128xf32>
    %371 = arith.addf %369, %370 : vector<8x128xf32>
    %372 = math.tanh %371 : vector<8x128xf32>
    %373 = arith.mulf %368, %372 : vector<8x128xf32>
    %c5_i32 = arith.constant 5 : i32
    %cst_130 = arith.constant dense<0.000000e+00> : vector<8x512xf32>
    %374 = tpu.matmul %373, %2, %cst_130 {dimension_numbers = #tpu.dot_dimension_numbers<[1], [0], [0], [1], [0, 0, 1, 1], [], []>} : vector<8x128xf32>, vector<128x512xf32>, vector<8x512xf32> -> vector<8x512xf32>
    %c8_i32_131 = arith.constant 8 : i32
    %375 = arith.muli %c5_i32, %c8_i32_131 : i32
    %376 = tpu.assume_multiple %375, 8 : i32
    %377 = arith.index_cast %376 : i32 to index
    %c0_132 = arith.constant 0 : index
    %378 = vector.load %arg10[%377, %c0_132] : memref<64x512xf32, #tpu.memory_space<vmem>>, vector<8x512xf32>
    %cst_133 = arith.constant dense<0.000000e+00> : vector<8x512xf32>
    %379 = tpu.matmul %339, %0, %cst_133 {dimension_numbers = #tpu.dot_dimension_numbers<[1], [0], [0], [1], [0, 0, 1, 1], [], []>} : vector<8x128xf32>, vector<128x512xf32>, vector<8x512xf32> -> vector<8x512xf32>
    %380 = arith.addf %378, %379 : vector<8x512xf32>
    %381 = vector.extract_strided_slice %380 {offsets = [0, 0], sizes = [8, 128], strides = [1, 1]} : vector<8x512xf32> to vector<8x128xf32>
    %cst_134 = arith.constant 5.000000e-01 : f32
    %382 = vector.broadcast %cst_134 : f32 to vector<8x128xf32>
    %383 = arith.mulf %382, %381 : vector<8x128xf32>
    %384 = math.tanh %383 : vector<8x128xf32>
    %cst_135 = arith.constant 5.000000e-01 : f32
    %385 = vector.broadcast %cst_135 : f32 to vector<8x128xf32>
    %386 = arith.mulf %385, %384 : vector<8x128xf32>
    %cst_136 = arith.constant 5.000000e-01 : f32
    %387 = vector.broadcast %cst_136 : f32 to vector<8x128xf32>
    %388 = arith.addf %386, %387 : vector<8x128xf32>
    %389 = vector.extract_strided_slice %380 {offsets = [0, 128], sizes = [8, 128], strides = [1, 1]} : vector<8x512xf32> to vector<8x128xf32>
    %cst_137 = arith.constant 5.000000e-01 : f32
    %390 = vector.broadcast %cst_137 : f32 to vector<8x128xf32>
    %391 = arith.mulf %390, %389 : vector<8x128xf32>
    %392 = math.tanh %391 : vector<8x128xf32>
    %cst_138 = arith.constant 5.000000e-01 : f32
    %393 = vector.broadcast %cst_138 : f32 to vector<8x128xf32>
    %394 = arith.mulf %393, %392 : vector<8x128xf32>
    %cst_139 = arith.constant 5.000000e-01 : f32
    %395 = vector.broadcast %cst_139 : f32 to vector<8x128xf32>
    %396 = arith.addf %394, %395 : vector<8x128xf32>
    %397 = vector.extract_strided_slice %380 {offsets = [0, 256], sizes = [8, 128], strides = [1, 1]} : vector<8x512xf32> to vector<8x128xf32>
    %398 = math.tanh %397 : vector<8x128xf32>
    %399 = vector.extract_strided_slice %380 {offsets = [0, 384], sizes = [8, 128], strides = [1, 1]} : vector<8x512xf32> to vector<8x128xf32>
    %cst_140 = arith.constant 5.000000e-01 : f32
    %400 = vector.broadcast %cst_140 : f32 to vector<8x128xf32>
    %401 = arith.mulf %400, %399 : vector<8x128xf32>
    %402 = math.tanh %401 : vector<8x128xf32>
    %cst_141 = arith.constant 5.000000e-01 : f32
    %403 = vector.broadcast %cst_141 : f32 to vector<8x128xf32>
    %404 = arith.mulf %403, %402 : vector<8x128xf32>
    %cst_142 = arith.constant 5.000000e-01 : f32
    %405 = vector.broadcast %cst_142 : f32 to vector<8x128xf32>
    %406 = arith.addf %404, %405 : vector<8x128xf32>
    %407 = arith.mulf %396, %337 : vector<8x128xf32>
    %408 = arith.mulf %388, %398 : vector<8x128xf32>
    %409 = arith.addf %407, %408 : vector<8x128xf32>
    %410 = math.tanh %409 : vector<8x128xf32>
    %411 = arith.mulf %406, %410 : vector<8x128xf32>
    %cst_143 = arith.constant dense<0.000000e+00> : vector<8x512xf32>
    %412 = tpu.matmul %411, %1, %cst_143 {dimension_numbers = #tpu.dot_dimension_numbers<[1], [0], [0], [1], [0, 0, 1, 1], [], []>} : vector<8x128xf32>, vector<128x512xf32>, vector<8x512xf32> -> vector<8x512xf32>
    %413 = arith.addf %374, %412 : vector<8x512xf32>
    %414 = arith.addf %413, %12 : vector<8x512xf32>
    %415 = vector.extract_strided_slice %414 {offsets = [0, 0], sizes = [8, 128], strides = [1, 1]} : vector<8x512xf32> to vector<8x128xf32>
    %cst_144 = arith.constant 5.000000e-01 : f32
    %416 = vector.broadcast %cst_144 : f32 to vector<8x128xf32>
    %417 = arith.mulf %416, %415 : vector<8x128xf32>
    %418 = math.tanh %417 : vector<8x128xf32>
    %cst_145 = arith.constant 5.000000e-01 : f32
    %419 = vector.broadcast %cst_145 : f32 to vector<8x128xf32>
    %420 = arith.mulf %419, %418 : vector<8x128xf32>
    %cst_146 = arith.constant 5.000000e-01 : f32
    %421 = vector.broadcast %cst_146 : f32 to vector<8x128xf32>
    %422 = arith.addf %420, %421 : vector<8x128xf32>
    %423 = vector.extract_strided_slice %414 {offsets = [0, 128], sizes = [8, 128], strides = [1, 1]} : vector<8x512xf32> to vector<8x128xf32>
    %cst_147 = arith.constant 5.000000e-01 : f32
    %424 = vector.broadcast %cst_147 : f32 to vector<8x128xf32>
    %425 = arith.mulf %424, %423 : vector<8x128xf32>
    %426 = math.tanh %425 : vector<8x128xf32>
    %cst_148 = arith.constant 5.000000e-01 : f32
    %427 = vector.broadcast %cst_148 : f32 to vector<8x128xf32>
    %428 = arith.mulf %427, %426 : vector<8x128xf32>
    %cst_149 = arith.constant 5.000000e-01 : f32
    %429 = vector.broadcast %cst_149 : f32 to vector<8x128xf32>
    %430 = arith.addf %428, %429 : vector<8x128xf32>
    %431 = vector.extract_strided_slice %414 {offsets = [0, 256], sizes = [8, 128], strides = [1, 1]} : vector<8x512xf32> to vector<8x128xf32>
    %432 = math.tanh %431 : vector<8x128xf32>
    %433 = vector.extract_strided_slice %414 {offsets = [0, 384], sizes = [8, 128], strides = [1, 1]} : vector<8x512xf32> to vector<8x128xf32>
    %cst_150 = arith.constant 5.000000e-01 : f32
    %434 = vector.broadcast %cst_150 : f32 to vector<8x128xf32>
    %435 = arith.mulf %434, %433 : vector<8x128xf32>
    %436 = math.tanh %435 : vector<8x128xf32>
    %cst_151 = arith.constant 5.000000e-01 : f32
    %437 = vector.broadcast %cst_151 : f32 to vector<8x128xf32>
    %438 = arith.mulf %437, %436 : vector<8x128xf32>
    %cst_152 = arith.constant 5.000000e-01 : f32
    %439 = vector.broadcast %cst_152 : f32 to vector<8x128xf32>
    %440 = arith.addf %438, %439 : vector<8x128xf32>
    %441 = arith.mulf %430, %371 : vector<8x128xf32>
    %442 = arith.mulf %422, %432 : vector<8x128xf32>
    %443 = arith.addf %441, %442 : vector<8x128xf32>
    %444 = math.tanh %443 : vector<8x128xf32>
    %445 = arith.mulf %440, %444 : vector<8x128xf32>
    %c6_i32 = arith.constant 6 : i32
    %cst_153 = arith.constant dense<0.000000e+00> : vector<8x512xf32>
    %446 = tpu.matmul %445, %2, %cst_153 {dimension_numbers = #tpu.dot_dimension_numbers<[1], [0], [0], [1], [0, 0, 1, 1], [], []>} : vector<8x128xf32>, vector<128x512xf32>, vector<8x512xf32> -> vector<8x512xf32>
    %c8_i32_154 = arith.constant 8 : i32
    %447 = arith.muli %c6_i32, %c8_i32_154 : i32
    %448 = tpu.assume_multiple %447, 8 : i32
    %449 = arith.index_cast %448 : i32 to index
    %c0_155 = arith.constant 0 : index
    %450 = vector.load %arg10[%449, %c0_155] : memref<64x512xf32, #tpu.memory_space<vmem>>, vector<8x512xf32>
    %cst_156 = arith.constant dense<0.000000e+00> : vector<8x512xf32>
    %451 = tpu.matmul %411, %0, %cst_156 {dimension_numbers = #tpu.dot_dimension_numbers<[1], [0], [0], [1], [0, 0, 1, 1], [], []>} : vector<8x128xf32>, vector<128x512xf32>, vector<8x512xf32> -> vector<8x512xf32>
    %452 = arith.addf %450, %451 : vector<8x512xf32>
    %453 = vector.extract_strided_slice %452 {offsets = [0, 0], sizes = [8, 128], strides = [1, 1]} : vector<8x512xf32> to vector<8x128xf32>
    %cst_157 = arith.constant 5.000000e-01 : f32
    %454 = vector.broadcast %cst_157 : f32 to vector<8x128xf32>
    %455 = arith.mulf %454, %453 : vector<8x128xf32>
    %456 = math.tanh %455 : vector<8x128xf32>
    %cst_158 = arith.constant 5.000000e-01 : f32
    %457 = vector.broadcast %cst_158 : f32 to vector<8x128xf32>
    %458 = arith.mulf %457, %456 : vector<8x128xf32>
    %cst_159 = arith.constant 5.000000e-01 : f32
    %459 = vector.broadcast %cst_159 : f32 to vector<8x128xf32>
    %460 = arith.addf %458, %459 : vector<8x128xf32>
    %461 = vector.extract_strided_slice %452 {offsets = [0, 128], sizes = [8, 128], strides = [1, 1]} : vector<8x512xf32> to vector<8x128xf32>
    %cst_160 = arith.constant 5.000000e-01 : f32
    %462 = vector.broadcast %cst_160 : f32 to vector<8x128xf32>
    %463 = arith.mulf %462, %461 : vector<8x128xf32>
    %464 = math.tanh %463 : vector<8x128xf32>
    %cst_161 = arith.constant 5.000000e-01 : f32
    %465 = vector.broadcast %cst_161 : f32 to vector<8x128xf32>
    %466 = arith.mulf %465, %464 : vector<8x128xf32>
    %cst_162 = arith.constant 5.000000e-01 : f32
    %467 = vector.broadcast %cst_162 : f32 to vector<8x128xf32>
    %468 = arith.addf %466, %467 : vector<8x128xf32>
    %469 = vector.extract_strided_slice %452 {offsets = [0, 256], sizes = [8, 128], strides = [1, 1]} : vector<8x512xf32> to vector<8x128xf32>
    %470 = math.tanh %469 : vector<8x128xf32>
    %471 = vector.extract_strided_slice %452 {offsets = [0, 384], sizes = [8, 128], strides = [1, 1]} : vector<8x512xf32> to vector<8x128xf32>
    %cst_163 = arith.constant 5.000000e-01 : f32
    %472 = vector.broadcast %cst_163 : f32 to vector<8x128xf32>
    %473 = arith.mulf %472, %471 : vector<8x128xf32>
    %474 = math.tanh %473 : vector<8x128xf32>
    %cst_164 = arith.constant 5.000000e-01 : f32
    %475 = vector.broadcast %cst_164 : f32 to vector<8x128xf32>
    %476 = arith.mulf %475, %474 : vector<8x128xf32>
    %cst_165 = arith.constant 5.000000e-01 : f32
    %477 = vector.broadcast %cst_165 : f32 to vector<8x128xf32>
    %478 = arith.addf %476, %477 : vector<8x128xf32>
    %479 = arith.mulf %468, %409 : vector<8x128xf32>
    %480 = arith.mulf %460, %470 : vector<8x128xf32>
    %481 = arith.addf %479, %480 : vector<8x128xf32>
    %482 = math.tanh %481 : vector<8x128xf32>
    %483 = arith.mulf %478, %482 : vector<8x128xf32>
    %cst_166 = arith.constant dense<0.000000e+00> : vector<8x512xf32>
    %484 = tpu.matmul %483, %1, %cst_166 {dimension_numbers = #tpu.dot_dimension_numbers<[1], [0], [0], [1], [0, 0, 1, 1], [], []>} : vector<8x128xf32>, vector<128x512xf32>, vector<8x512xf32> -> vector<8x512xf32>
    %485 = arith.addf %446, %484 : vector<8x512xf32>
    %486 = arith.addf %485, %12 : vector<8x512xf32>
    %487 = vector.extract_strided_slice %486 {offsets = [0, 0], sizes = [8, 128], strides = [1, 1]} : vector<8x512xf32> to vector<8x128xf32>
    %cst_167 = arith.constant 5.000000e-01 : f32
    %488 = vector.broadcast %cst_167 : f32 to vector<8x128xf32>
    %489 = arith.mulf %488, %487 : vector<8x128xf32>
    %490 = math.tanh %489 : vector<8x128xf32>
    %cst_168 = arith.constant 5.000000e-01 : f32
    %491 = vector.broadcast %cst_168 : f32 to vector<8x128xf32>
    %492 = arith.mulf %491, %490 : vector<8x128xf32>
    %cst_169 = arith.constant 5.000000e-01 : f32
    %493 = vector.broadcast %cst_169 : f32 to vector<8x128xf32>
    %494 = arith.addf %492, %493 : vector<8x128xf32>
    %495 = vector.extract_strided_slice %486 {offsets = [0, 128], sizes = [8, 128], strides = [1, 1]} : vector<8x512xf32> to vector<8x128xf32>
    %cst_170 = arith.constant 5.000000e-01 : f32
    %496 = vector.broadcast %cst_170 : f32 to vector<8x128xf32>
    %497 = arith.mulf %496, %495 : vector<8x128xf32>
    %498 = math.tanh %497 : vector<8x128xf32>
    %cst_171 = arith.constant 5.000000e-01 : f32
    %499 = vector.broadcast %cst_171 : f32 to vector<8x128xf32>
    %500 = arith.mulf %499, %498 : vector<8x128xf32>
    %cst_172 = arith.constant 5.000000e-01 : f32
    %501 = vector.broadcast %cst_172 : f32 to vector<8x128xf32>
    %502 = arith.addf %500, %501 : vector<8x128xf32>
    %503 = vector.extract_strided_slice %486 {offsets = [0, 256], sizes = [8, 128], strides = [1, 1]} : vector<8x512xf32> to vector<8x128xf32>
    %504 = math.tanh %503 : vector<8x128xf32>
    %505 = vector.extract_strided_slice %486 {offsets = [0, 384], sizes = [8, 128], strides = [1, 1]} : vector<8x512xf32> to vector<8x128xf32>
    %cst_173 = arith.constant 5.000000e-01 : f32
    %506 = vector.broadcast %cst_173 : f32 to vector<8x128xf32>
    %507 = arith.mulf %506, %505 : vector<8x128xf32>
    %508 = math.tanh %507 : vector<8x128xf32>
    %cst_174 = arith.constant 5.000000e-01 : f32
    %509 = vector.broadcast %cst_174 : f32 to vector<8x128xf32>
    %510 = arith.mulf %509, %508 : vector<8x128xf32>
    %cst_175 = arith.constant 5.000000e-01 : f32
    %511 = vector.broadcast %cst_175 : f32 to vector<8x128xf32>
    %512 = arith.addf %510, %511 : vector<8x128xf32>
    %513 = arith.mulf %502, %443 : vector<8x128xf32>
    %514 = arith.mulf %494, %504 : vector<8x128xf32>
    %515 = arith.addf %513, %514 : vector<8x128xf32>
    %516 = math.tanh %515 : vector<8x128xf32>
    %517 = arith.mulf %512, %516 : vector<8x128xf32>
    %c7_i32 = arith.constant 7 : i32
    %cst_176 = arith.constant dense<0.000000e+00> : vector<8x512xf32>
    %518 = tpu.matmul %517, %2, %cst_176 {dimension_numbers = #tpu.dot_dimension_numbers<[1], [0], [0], [1], [0, 0, 1, 1], [], []>} : vector<8x128xf32>, vector<128x512xf32>, vector<8x512xf32> -> vector<8x512xf32>
    %c8_i32_177 = arith.constant 8 : i32
    %519 = arith.muli %c7_i32, %c8_i32_177 : i32
    %520 = tpu.assume_multiple %519, 8 : i32
    %521 = arith.index_cast %520 : i32 to index
    %c0_178 = arith.constant 0 : index
    %522 = vector.load %arg10[%521, %c0_178] : memref<64x512xf32, #tpu.memory_space<vmem>>, vector<8x512xf32>
    %cst_179 = arith.constant dense<0.000000e+00> : vector<8x512xf32>
    %523 = tpu.matmul %483, %0, %cst_179 {dimension_numbers = #tpu.dot_dimension_numbers<[1], [0], [0], [1], [0, 0, 1, 1], [], []>} : vector<8x128xf32>, vector<128x512xf32>, vector<8x512xf32> -> vector<8x512xf32>
    %524 = arith.addf %522, %523 : vector<8x512xf32>
    %525 = vector.extract_strided_slice %524 {offsets = [0, 0], sizes = [8, 128], strides = [1, 1]} : vector<8x512xf32> to vector<8x128xf32>
    %cst_180 = arith.constant 5.000000e-01 : f32
    %526 = vector.broadcast %cst_180 : f32 to vector<8x128xf32>
    %527 = arith.mulf %526, %525 : vector<8x128xf32>
    %528 = math.tanh %527 : vector<8x128xf32>
    %cst_181 = arith.constant 5.000000e-01 : f32
    %529 = vector.broadcast %cst_181 : f32 to vector<8x128xf32>
    %530 = arith.mulf %529, %528 : vector<8x128xf32>
    %cst_182 = arith.constant 5.000000e-01 : f32
    %531 = vector.broadcast %cst_182 : f32 to vector<8x128xf32>
    %532 = arith.addf %530, %531 : vector<8x128xf32>
    %533 = vector.extract_strided_slice %524 {offsets = [0, 128], sizes = [8, 128], strides = [1, 1]} : vector<8x512xf32> to vector<8x128xf32>
    %cst_183 = arith.constant 5.000000e-01 : f32
    %534 = vector.broadcast %cst_183 : f32 to vector<8x128xf32>
    %535 = arith.mulf %534, %533 : vector<8x128xf32>
    %536 = math.tanh %535 : vector<8x128xf32>
    %cst_184 = arith.constant 5.000000e-01 : f32
    %537 = vector.broadcast %cst_184 : f32 to vector<8x128xf32>
    %538 = arith.mulf %537, %536 : vector<8x128xf32>
    %cst_185 = arith.constant 5.000000e-01 : f32
    %539 = vector.broadcast %cst_185 : f32 to vector<8x128xf32>
    %540 = arith.addf %538, %539 : vector<8x128xf32>
    %541 = vector.extract_strided_slice %524 {offsets = [0, 256], sizes = [8, 128], strides = [1, 1]} : vector<8x512xf32> to vector<8x128xf32>
    %542 = math.tanh %541 : vector<8x128xf32>
    %543 = vector.extract_strided_slice %524 {offsets = [0, 384], sizes = [8, 128], strides = [1, 1]} : vector<8x512xf32> to vector<8x128xf32>
    %cst_186 = arith.constant 5.000000e-01 : f32
    %544 = vector.broadcast %cst_186 : f32 to vector<8x128xf32>
    %545 = arith.mulf %544, %543 : vector<8x128xf32>
    %546 = math.tanh %545 : vector<8x128xf32>
    %cst_187 = arith.constant 5.000000e-01 : f32
    %547 = vector.broadcast %cst_187 : f32 to vector<8x128xf32>
    %548 = arith.mulf %547, %546 : vector<8x128xf32>
    %cst_188 = arith.constant 5.000000e-01 : f32
    %549 = vector.broadcast %cst_188 : f32 to vector<8x128xf32>
    %550 = arith.addf %548, %549 : vector<8x128xf32>
    %551 = arith.mulf %540, %481 : vector<8x128xf32>
    %552 = arith.mulf %532, %542 : vector<8x128xf32>
    %553 = arith.addf %551, %552 : vector<8x128xf32>
    %554 = math.tanh %553 : vector<8x128xf32>
    %555 = arith.mulf %550, %554 : vector<8x128xf32>
    %cst_189 = arith.constant dense<0.000000e+00> : vector<8x512xf32>
    %556 = tpu.matmul %555, %1, %cst_189 {dimension_numbers = #tpu.dot_dimension_numbers<[1], [0], [0], [1], [0, 0, 1, 1], [], []>} : vector<8x128xf32>, vector<128x512xf32>, vector<8x512xf32> -> vector<8x512xf32>
    %557 = arith.addf %518, %556 : vector<8x512xf32>
    %558 = arith.addf %557, %12 : vector<8x512xf32>
    %559 = vector.extract_strided_slice %558 {offsets = [0, 0], sizes = [8, 128], strides = [1, 1]} : vector<8x512xf32> to vector<8x128xf32>
    %cst_190 = arith.constant 5.000000e-01 : f32
    %560 = vector.broadcast %cst_190 : f32 to vector<8x128xf32>
    %561 = arith.mulf %560, %559 : vector<8x128xf32>
    %562 = math.tanh %561 : vector<8x128xf32>
    %cst_191 = arith.constant 5.000000e-01 : f32
    %563 = vector.broadcast %cst_191 : f32 to vector<8x128xf32>
    %564 = arith.mulf %563, %562 : vector<8x128xf32>
    %cst_192 = arith.constant 5.000000e-01 : f32
    %565 = vector.broadcast %cst_192 : f32 to vector<8x128xf32>
    %566 = arith.addf %564, %565 : vector<8x128xf32>
    %567 = vector.extract_strided_slice %558 {offsets = [0, 128], sizes = [8, 128], strides = [1, 1]} : vector<8x512xf32> to vector<8x128xf32>
    %cst_193 = arith.constant 5.000000e-01 : f32
    %568 = vector.broadcast %cst_193 : f32 to vector<8x128xf32>
    %569 = arith.mulf %568, %567 : vector<8x128xf32>
    %570 = math.tanh %569 : vector<8x128xf32>
    %cst_194 = arith.constant 5.000000e-01 : f32
    %571 = vector.broadcast %cst_194 : f32 to vector<8x128xf32>
    %572 = arith.mulf %571, %570 : vector<8x128xf32>
    %cst_195 = arith.constant 5.000000e-01 : f32
    %573 = vector.broadcast %cst_195 : f32 to vector<8x128xf32>
    %574 = arith.addf %572, %573 : vector<8x128xf32>
    %575 = vector.extract_strided_slice %558 {offsets = [0, 256], sizes = [8, 128], strides = [1, 1]} : vector<8x512xf32> to vector<8x128xf32>
    %576 = math.tanh %575 : vector<8x128xf32>
    %577 = vector.extract_strided_slice %558 {offsets = [0, 384], sizes = [8, 128], strides = [1, 1]} : vector<8x512xf32> to vector<8x128xf32>
    %cst_196 = arith.constant 5.000000e-01 : f32
    %578 = vector.broadcast %cst_196 : f32 to vector<8x128xf32>
    %579 = arith.mulf %578, %577 : vector<8x128xf32>
    %580 = math.tanh %579 : vector<8x128xf32>
    %cst_197 = arith.constant 5.000000e-01 : f32
    %581 = vector.broadcast %cst_197 : f32 to vector<8x128xf32>
    %582 = arith.mulf %581, %580 : vector<8x128xf32>
    %cst_198 = arith.constant 5.000000e-01 : f32
    %583 = vector.broadcast %cst_198 : f32 to vector<8x128xf32>
    %584 = arith.addf %582, %583 : vector<8x128xf32>
    %585 = arith.mulf %574, %515 : vector<8x128xf32>
    %586 = arith.mulf %566, %576 : vector<8x128xf32>
    %587 = arith.addf %585, %586 : vector<8x128xf32>
    %588 = math.tanh %587 : vector<8x128xf32>
    %589 = arith.mulf %584, %588 : vector<8x128xf32>
    %c8_i32_199 = arith.constant 8 : i32
    %c0_200 = arith.constant 0 : index
    %c0_201 = arith.constant 0 : index
    %590 = vector.load %arg7[%c0_200, %c0_201] : memref<1x128xf32, #tpu.memory_space<vmem>>, vector<1x128xf32>
    %591 = vector.broadcast %590 : vector<1x128xf32> to vector<8x128xf32>
    %592 = arith.mulf %589, %591 : vector<8x128xf32>
    %cst_202 = arith.constant dense<0.000000e+00> : vector<8xf32>
    %593 = vector.multi_reduction <add>, %592, %cst_202 [1] : vector<8x128xf32> to vector<8xf32>
    %594 = vector.shape_cast %593 : vector<8xf32> to vector<8x1xf32>
    %c0_203 = arith.constant 0 : index
    %c0_204 = arith.constant 0 : index
    %595 = vector.load %arg8[%c0_203, %c0_204] : memref<1x1xf32, #tpu.memory_space<vmem>>, vector<1x1xf32>
    %596 = vector.broadcast %595 : vector<1x1xf32> to vector<8x1xf32>
    %597 = arith.addf %594, %596 : vector<8x1xf32>
    %c0_205 = arith.constant 0 : index
    %c0_206 = arith.constant 0 : index
    %598 = vector.load %arg9[%c0_205, %c0_206] : memref<8x1xf32, #tpu.memory_space<vmem>>, vector<8x1xf32>
    tpu.vector_store %arg9[%c0_205, %c0_206], %597 {strides = array<i32>} : memref<8x1xf32, #tpu.memory_space<vmem>>, vector<8x1xf32>,
    return
  }
}

</mosaic_0001>

<llo_original>
// kernel: tpu_custom_call.1
$region0: #{tpu_custom_call.1}
  #allocation0 [shape = 'u32[]', space=smem, size = 0x4, offset = 0x4, fixed_abs, tag = 'smem constant byte address 0x4 - core index']
  #allocation1 [shape = 'u32[144,128]{1,0:T(1,128)}', space=vmem, size = 0x12000, scoped, tag = 'internal scratch']
  #allocation2 [shape = 'f32[64,512]{1,0:T(8,128)}', space=vmem, size = 0x20000, scoped, tag = 'scratch operand']
  #allocation3 [shape = 'f32[1,1]{1,0:T(1,128)S(1)}', space=vmem, size = 0x200, scoped, tag = 'scoped memory for tpu_custom_call.1']
  %s0 = inlined_call_operand.vmem [shape: f32[64,4], index: 0, kind: input, shape index: {}]
  %s1 = inlined_call_operand.vmem [shape: f32[4,512], index: 1, kind: input, shape index: {}]
  %s2 = inlined_call_operand.hbm [shape: f32[128,512], index: 2, kind: input, shape index: {}]
  %s3 = inlined_call_operand.vmem [shape: f32[1,512], index: 3, kind: input, shape index: {}]
  %s4 = inlined_call_operand.hbm [shape: f32[128,512], index: 4, kind: input, shape index: {}]
  %s5 = inlined_call_operand.hbm [shape: f32[128,512], index: 5, kind: input, shape index: {}]
  %s6 = inlined_call_operand.vmem [shape: f32[1,512], index: 6, kind: input, shape index: {}]
  %s7 = inlined_call_operand.vmem [shape: f32[1,128], index: 7, kind: input, shape index: {}]
  %s8 = inlined_call_operand.<no memory space> [shape: f32[1,1], index: 8, kind: input, shape index: {}]
  %s9 = inlined_call_operand.vmem [shape: f32[8,1], index: 9, kind: output, shape index: {}]
  %s10 = sld [smem:[#allocation0]]
  $region58: #{tpu_custom_call.1} parent=0
    _
  %s12 = ssub.s32 1, %s10
  %s13 = scalar_select 0, %s12, %s10
  %v14 = vstv %s8
  %15 = vst [vmem:[#allocation3] sm:$0x1] %v14
  $region1: #{tpu_custom_call.1} parent=0
    #allocation4 [shape = 'u8[262144]{0}', space=vmem, size = 0x40000, scoped, tag = 'input window, operand 2, single buffered']
    #allocation5 [shape = 's32[1]{0}', space=sflag, size = 0x4, scoped, tag = 'scoped memory for tpu_custom_call.1']
    #allocation6 [shape = 'u8[262144]{0}', space=vmem, size = 0x40000, scoped, tag = 'input window, operand 4, single buffered']
    #allocation7 [shape = 's32[1]{0}', space=sflag, size = 0x4, scoped, tag = 'scoped memory for tpu_custom_call.1']
    #allocation8 [shape = 'u8[262144]{0}', space=vmem, size = 0x40000, scoped, tag = 'input window, operand 5, single buffered']
    %16 = vsyncpa [#allocation5], 0
    %17 = vsyncpa [#allocation7], 0
    // Predicated region
    $region2: #{tpu_custom_call.1} parent=1 // pred_check
      _
    $region3: #{tpu_custom_call.1} parent=1 // pred_check_branch
      %19 = sbr.rel (0) target = $region5
    $region4: #{tpu_custom_call.1} parent=1 // pred_region
      _
    $region5: #{tpu_custom_call.1} parent=1 // pred_fallthru
      _
    // Predicated region
    $region6: #{tpu_custom_call.1} parent=1 // pred_check
      _
    $region7: #{tpu_custom_call.1} parent=1 // pred_check_branch
      %21 = sbr.rel (0) target = $region9
    $region8: #{tpu_custom_call.1} parent=1 // pred_region
      _
    $region9: #{tpu_custom_call.1} parent=1 // pred_fallthru
      _
    // Predicated region
    $region10: #{tpu_custom_call.1} parent=1 // pred_check
      _
    $region11: #{tpu_custom_call.1} parent=1 // pred_check_branch
      %23 = sbr.rel (0) target = $region13
    $region12: #{tpu_custom_call.1} parent=1 // pred_region
      %s25 = ssub.s32 8192, 8192
      %26 = vsyncadd [#allocation5], %s25
      %s27 = sshll.u32 [#allocation4], 4
      %s28 = int_to_ptr.vmem [resolvable:$true] %s27
      %33 = dma.hbm_to_vmem [thread:$0]  %s2, 8192, %s28, [#allocation5], 512, 512, 32
    $region13: #{tpu_custom_call.1} parent=1 // pred_fallthru
      _
    // Predicated region
    $region14: #{tpu_custom_call.1} parent=1 // pred_check
      _
    $region15: #{tpu_custom_call.1} parent=1 // pred_check_branch
      %35 = sbr.rel (0) target = $region17
    $region16: #{tpu_custom_call.1} parent=1 // pred_region
      _
    $region17: #{tpu_custom_call.1} parent=1 // pred_fallthru
      _
    // Predicated region
    $region18: #{tpu_custom_call.1} parent=1 // pred_check
      _
    $region19: #{tpu_custom_call.1} parent=1 // pred_check_branch
      %37 = sbr.rel (0) target = $region21
    $region20: #{tpu_custom_call.1} parent=1 // pred_region
      %s39 = ssub.s32 8192, 8192
      %40 = vsyncadd [#allocation7], %s39
      %s41 = sshll.u32 [#allocation6], 4
      %s42 = int_to_ptr.vmem [resolvable:$true] %s41
      %47 = dma.hbm_to_vmem [thread:$0]  %s4, 8192, %s42, [#allocation7], 512, 512, 32
    $region21: #{tpu_custom_call.1} parent=1 // pred_fallthru
      _
    // Predicated region
    $region22: #{tpu_custom_call.1} parent=1 // pred_check
      _
    $region23: #{tpu_custom_call.1} parent=1 // pred_check_branch
      %49 = sbr.rel (0) target = $region25
    $region24: #{tpu_custom_call.1} parent=1 // pred_region
      %s51 = ssub.s32 8192, 8192
      %52 = vsyncadd [#allocation7], %s51
      %s53 = sshll.u32 [#allocation8], 4
      %s54 = int_to_ptr.vmem [resolvable:$true] %s53
      %59 = dma.hbm_to_vmem [thread:$0]  %s5, 8192, %s54, [#allocation7], 512, 512, 32
    $region25: #{tpu_custom_call.1} parent=1 // pred_fallthru
      _
    // Predicated region
    $region26: #{tpu_custom_call.1} parent=1 // pred_check
      _
    $region27: #{tpu_custom_call.1} parent=1 // pred_check_branch
      %61 = sbr.rel (0) target = $region29
    $region28: #{tpu_custom_call.1} parent=1 // pred_region
      _
    $region29: #{tpu_custom_call.1} parent=1 // pred_fallthru
      _
    // Predicated region
    $region30: #{tpu_custom_call.1} parent=1 // pred_check
      _
    $region31: #{tpu_custom_call.1} parent=1 // pred_check_branch
      %63 = sbr.rel (0) target = $region33
    $region32: #{tpu_custom_call.1} parent=1 // pred_region
      _
    $region33: #{tpu_custom_call.1} parent=1 // pred_fallthru
      _
    // Predicated region
    $region34: #{tpu_custom_call.1} parent=1 // pred_check
      _
    $region35: #{tpu_custom_call.1} parent=1 // pred_check_branch
      %65 = sbr.rel (0) target = $region37
    $region36: #{tpu_custom_call.1} parent=1 // pred_region
      _
    $region37: #{tpu_custom_call.1} parent=1 // pred_fallthru
      _
    // Predicated region
    $region38: #{tpu_custom_call.1} parent=1 // pred_check
      _
    $region39: #{tpu_custom_call.1} parent=1 // pred_check_branch
      %67 = sbr.rel (0) target = $region41
    $region40: #{tpu_custom_call.1} parent=1 // pred_region
      %68 = dma.done [#allocation5], 8192
    $region41: #{tpu_custom_call.1} parent=1 // pred_fallthru
      _
    // Predicated region
    $region42: #{tpu_custom_call.1} parent=1 // pred_check
      _
    $region43: #{tpu_custom_call.1} parent=1 // pred_check_branch
      %70 = sbr.rel (0) target = $region45
    $region44: #{tpu_custom_call.1} parent=1 // pred_region
      %71 = dma.done [#allocation7], 8192
    $region45: #{tpu_custom_call.1} parent=1 // pred_fallthru
      _
    // Predicated region
    $region46: #{tpu_custom_call.1} parent=1 // pred_check
      _
    $region47: #{tpu_custom_call.1} parent=1 // pred_check_branch
      %73 = sbr.rel (0) target = $region49
    $region48: #{tpu_custom_call.1} parent=1 // pred_region
      %74 = dma.done [#allocation7], 8192
    $region49: #{tpu_custom_call.1} parent=1 // pred_fallthru
      _
    %v75 = vld [vmem:[#allocation4] sm:$0xff]
    %v76 = vld [vmem:[#allocation4 + $0x8] sm:$0xff]
    %v77 = vld [vmem:[#allocation4 + $0x10] sm:$0xff]
    %v78 = vld [vmem:[#allocation4 + $0x18] sm:$0xff]
    %v79 = vld [vmem:[#allocation4 + $0x20] sm:$0xff]
    %v80 = vld [vmem:[#allocation4 + $0x28] sm:$0xff]
    %v81 = vld [vmem:[#allocation4 + $0x30] sm:$0xff]
    %v82 = vld [vmem:[#allocation4 + $0x38] sm:$0xff]
    %v83 = vld [vmem:[#allocation4 + $0x40] sm:$0xff]
    %v84 = vld [vmem:[#allocation4 + $0x48] sm:$0xff]
    %v85 = vld [vmem:[#allocation4 + $0x50] sm:$0xff]
    %v86 = vld [vmem:[#allocation4 + $0x58] sm:$0xff]
    %v87 = vld [vmem:[#allocation4 + $0x60] sm:$0xff]
    %v88 = vld [vmem:[#allocation4 + $0x68] sm:$0xff]
    %v89 = vld [vmem:[#allocation4 + $0x70] sm:$0xff]
    %v90 = vld [vmem:[#allocation4 + $0x78] sm:$0xff]
    %v91 = vld [vmem:[#allocation4 + $0x80] sm:$0xff]
    %v92 = vld [vmem:[#allocation4 + $0x88] sm:$0xff]
    %v93 = vld [vmem:[#allocation4 + $0x90] sm:$0xff]
    %v94 = vld [vmem:[#allocation4 + $0x98] sm:$0xff]
    %v95 = vld [vmem:[#allocation4 + $0xa0] sm:$0xff]
    %v96 = vld [vmem:[#allocation4 + $0xa8] sm:$0xff]
    %v97 = vld [vmem:[#allocation4 + $0xb0] sm:$0xff]
    %v98 = vld [vmem:[#allocation4 + $0xb8] sm:$0xff]
    %v99 = vld [vmem:[#allocation4 + $0xc0] sm:$0xff]
    %v100 = vld [vmem:[#allocation4 + $0xc8] sm:$0xff]
    %v101 = vld [vmem:[#allocation4 + $0xd0] sm:$0xff]
    %v102 = vld [vmem:[#allocation4 + $0xd8] sm:$0xff]
    %v103 = vld [vmem:[#allocation4 + $0xe0] sm:$0xff]
    %v104 = vld [vmem:[#allocation4 + $0xe8] sm:$0xff]
    %v105 = vld [vmem:[#allocation4 + $0xf0] sm:$0xff]
    %v106 = vld [vmem:[#allocation4 + $0xf8] sm:$0xff]
    %v107 = vld [vmem:[#allocation4 + $0x100] sm:$0xff]
    %v108 = vld [vmem:[#allocation4 + $0x108] sm:$0xff]
    %v109 = vld [vmem:[#allocation4 + $0x110] sm:$0xff]
    %v110 = vld [vmem:[#allocation4 + $0x118] sm:$0xff]
    %v111 = vld [vmem:[#allocation4 + $0x120] sm:$0xff]
    %v112 = vld [vmem:[#allocation4 + $0x128] sm:$0xff]
    %v113 = vld [vmem:[#allocation4 + $0x130] sm:$0xff]
    %v114 = vld [vmem:[#allocation4 + $0x138] sm:$0xff]
    %v115 = vld [vmem:[#allocation4 + $0x140] sm:$0xff]
    %v116 = vld [vmem:[#allocation4 + $0x148] sm:$0xff]
    %v117 = vld [vmem:[#allocation4 + $0x150] sm:$0xff]
    %v118 = vld [vmem:[#allocation4 + $0x158] sm:$0xff]
    %v119 = vld [vmem:[#allocation4 + $0x160] sm:$0xff]
    %v120 = vld [vmem:[#allocation4 + $0x168] sm:$0xff]
    %v121 = vld [vmem:[#allocation4 + $0x170] sm:$0xff]
    %v122 = vld [vmem:[#allocation4 + $0x178] sm:$0xff]
    %v123 = vld [vmem:[#allocation4 + $0x180] sm:$0xff]
    %v124 = vld [vmem:[#allocation4 + $0x188] sm:$0xff]
    %v125 = vld [vmem:[#allocation4 + $0x190] sm:$0xff]
    %v126 = vld [vmem:[#allocation4 + $0x198] sm:$0xff]
    %v127 = vld [vmem:[#allocation4 + $0x1a0] sm:$0xff]
    %v128 = vld [vmem:[#allocation4 + $0x1a8] sm:$0xff]
    %v129 = vld [vmem:[#allocation4 + $0x1b0] sm:$0xff]
    %v130 = vld [vmem:[#allocation4 + $0x1b8] sm:$0xff]
    %v131 = vld [vmem:[#allocation4 + $0x1c0] sm:$0xff]
    %v132 = vld [vmem:[#allocation4 + $0x1c8] sm:$0xff]
    %v133 = vld [vmem:[#allocation4 + $0x1d0] sm:$0xff]
    %v134 = vld [vmem:[#allocation4 + $0x1d8] sm:$0xff]
    %v135 = vld [vmem:[#allocation4 + $0x1e0] sm:$0xff]
    %v136 = vld [vmem:[#allocation4 + $0x1e8] sm:$0xff]
    %v137 = vld [vmem:[#allocation4 + $0x1f0] sm:$0xff]
    %v138 = vld [vmem:[#allocation4 + $0x1f8] sm:$0xff]
    %v139 = vld [vmem:[#allocation6] sm:$0xff]
    %v140 = vld [vmem:[#allocation6 + $0x8] sm:$0xff]
    %v141 = vld [vmem:[#allocation6 + $0x10] sm:$0xff]
    %v142 = vld [vmem:[#allocation6 + $0x18] sm:$0xff]
    %v143 = vld [vmem:[#allocation6 + $0x20] sm:$0xff]
    %v144 = vld [vmem:[#allocation6 + $0x28] sm:$0xff]
    %v145 = vld [vmem:[#allocation6 + $0x30] sm:$0xff]
    %v146 = vld [vmem:[#allocation6 + $0x38] sm:$0xff]
    %v147 = vld [vmem:[#allocation6 + $0x40] sm:$0xff]
    %v148 = vld [vmem:[#allocation6 + $0x48] sm:$0xff]
    %v149 = vld [vmem:[#allocation6 + $0x50] sm:$0xff]
    %v150 = vld [vmem:[#allocation6 + $0x58] sm:$0xff]
    %v151 = vld [vmem:[#allocation6 + $0x60] sm:$0xff]
    %v152 = vld [vmem:[#allocation6 + $0x68] sm:$0xff]
    %v153 = vld [vmem:[#allocation6 + $0x70] sm:$0xff]
    %v154 = vld [vmem:[#allocation6 + $0x78] sm:$0xff]
    %v155 = vld [vmem:[#allocation6 + $0x80] sm:$0xff]
    %v156 = vld [vmem:[#allocation6 + $0x88] sm:$0xff]
    %v157 = vld [vmem:[#allocation6 + $0x90] sm:$0xff]
    %v158 = vld [vmem:[#allocation6 + $0x98] sm:$0xff]
    %v159 = vld [vmem:[#allocation6 + $0xa0] sm:$0xff]
    %v160 = vld [vmem:[#allocation6 + $0xa8] sm:$0xff]
    %v161 = vld [vmem:[#allocation6 + $0xb0] sm:$0xff]
    %v162 = vld [vmem:[#allocation6 + $0xb8] sm:$0xff]
    %v163 = vld [vmem:[#allocation6 + $0xc0] sm:$0xff]
    %v164 = vld [vmem:[#allocation6 + $0xc8] sm:$0xff]
    %v165 = vld [vmem:[#allocation6 + $0xd0] sm:$0xff]
    %v166 = vld [vmem:[#allocation6 + $0xd8] sm:$0xff]
    %v167 = vld [vmem:[#allocation6 + $0xe0] sm:$0xff]
    %v168 = vld [vmem:[#allocation6 + $0xe8] sm:$0xff]
    %v169 = vld [vmem:[#allocation6 + $0xf0] sm:$0xff]
    %v170 = vld [vmem:[#allocation6 + $0xf8] sm:$0xff]
    %v171 = vld [vmem:[#allocation6 + $0x100] sm:$0xff]
    %v172 = vld [vmem:[#allocation6 + $0x108] sm:$0xff]
    %v173 = vld [vmem:[#allocation6 + $0x110] sm:$0xff]
    %v174 = vld [vmem:[#allocation6 + $0x118] sm:$0xff]
    %v175 = vld [vmem:[#allocation6 + $0x120] sm:$0xff]
    %v176 = vld [vmem:[#allocation6 + $0x128] sm:$0xff]
    %v177 = vld [vmem:[#allocation6 + $0x130] sm:$0xff]
    %v178 = vld [vmem:[#allocation6 + $0x138] sm:$0xff]
    %v179 = vld [vmem:[#allocation6 + $0x140] sm:$0xff]
    %v180 = vld [vmem:[#allocation6 + $0x148] sm:$0xff]
    %v181 = vld [vmem:[#allocation6 + $0x150] sm:$0xff]
    %v182 = vld [vmem:[#allocation6 + $0x158] sm:$0xff]
    %v183 = vld [vmem:[#allocation6 + $0x160] sm:$0xff]
    %v184 = vld [vmem:[#allocation6 + $0x168] sm:$0xff]
    %v185 = vld [vmem:[#allocation6 + $0x170] sm:$0xff]
    %v186 = vld [vmem:[#allocation6 + $0x178] sm:$0xff]
    %v187 = vld [vmem:[#allocation6 + $0x180] sm:$0xff]
    %v188 = vld [vmem:[#allocation6 + $0x188] sm:$0xff]
    %v189 = vld [vmem:[#allocation6 + $0x190] sm:$0xff]
    %v190 = vld [vmem:[#allocation6 + $0x198] sm:$0xff]
    %v191 = vld [vmem:[#allocation6 + $0x1a0] sm:$0xff]
    %v192 = vld [vmem:[#allocation6 + $0x1a8] sm:$0xff]
    %v193 = vld [vmem:[#allocation6 + $0x1b0] sm:$0xff]
    %v194 = vld [vmem:[#allocation6 + $0x1b8] sm:$0xff]
    %v195 = vld [vmem:[#allocation6 + $0x1c0] sm:$0xff]
    %v196 = vld [vmem:[#allocation6 + $0x1c8] sm:$0xff]
    %v197 = vld [vmem:[#allocation6 + $0x1d0] sm:$0xff]
    %v198 = vld [vmem:[#allocation6 + $0x1d8] sm:$0xff]
    %v199 = vld [vmem:[#allocation6 + $0x1e0] sm:$0xff]
    %v200 = vld [vmem:[#allocation6 + $0x1e8] sm:$0xff]
    %v201 = vld [vmem:[#allocation6 + $0x1f0] sm:$0xff]
    %v202 = vld [vmem:[#allocation6 + $0x1f8] sm:$0xff]
    %v203 = vld [vmem:[#allocation8] sm:$0xff]
    %v204 = vld [vmem:[#allocation8 + $0x8] sm:$0xff]
    %v205 = vld [vmem:[#allocation8 + $0x10] sm:$0xff]
    %v206 = vld [vmem:[#allocation8 + $0x18] sm:$0xff]
    %v207 = vld [vmem:[#allocation8 + $0x20] sm:$0xff]
    %v208 = vld [vmem:[#allocation8 + $0x28] sm:$0xff]
    %v209 = vld [vmem:[#allocation8 + $0x30] sm:$0xff]
    %v210 = vld [vmem:[#allocation8 + $0x38] sm:$0xff]
    %v211 = vld [vmem:[#allocation8 + $0x40] sm:$0xff]
    %v212 = vld [vmem:[#allocation8 + $0x48] sm:$0xff]
    %v213 = vld [vmem:[#allocation8 + $0x50] sm:$0xff]
    %v214 = vld [vmem:[#allocation8 + $0x58] sm:$0xff]
    %v215 = vld [vmem:[#allocation8 + $0x60] sm:$0xff]
    %v216 = vld [vmem:[#allocation8 + $0x68] sm:$0xff]
    %v217 = vld [vmem:[#allocation8 + $0x70] sm:$0xff]
    %v218 = vld [vmem:[#allocation8 + $0x78] sm:$0xff]
    %v219 = vld [vmem:[#allocation8 + $0x80] sm:$0xff]
    %v220 = vld [vmem:[#allocation8 + $0x88] sm:$0xff]
    %v221 = vld [vmem:[#allocation8 + $0x90] sm:$0xff]
    %v222 = vld [vmem:[#allocation8 + $0x98] sm:$0xff]
    %v223 = vld [vmem:[#allocation8 + $0xa0] sm:$0xff]
    %v224 = vld [vmem:[#allocation8 + $0xa8] sm:$0xff]
    %v225 = vld [vmem:[#allocation8 + $0xb0] sm:$0xff]
    %v226 = vld [vmem:[#allocation8 + $0xb8] sm:$0xff]
    %v227 = vld [vmem:[#allocation8 + $0xc0] sm:$0xff]
    %v228 = vld [vmem:[#allocation8 + $0xc8] sm:$0xff]
    %v229 = vld [vmem:[#allocation8 + $0xd0] sm:$0xff]
    %v230 = vld [vmem:[#allocation8 + $0xd8] sm:$0xff]
    %v231 = vld [vmem:[#allocation8 + $0xe0] sm:$0xff]
    %v232 = vld [vmem:[#allocation8 + $0xe8] sm:$0xff]
    %v233 = vld [vmem:[#allocation8 + $0xf0] sm:$0xff]
    %v234 = vld [vmem:[#allocation8 + $0xf8] sm:$0xff]
    %v235 = vld [vmem:[#allocation8 + $0x100] sm:$0xff]
    %v236 = vld [vmem:[#allocation8 + $0x108] sm:$0xff]
    %v237 = vld [vmem:[#allocation8 + $0x110] sm:$0xff]
    %v238 = vld [vmem:[#allocation8 + $0x118] sm:$0xff]
    %v239 = vld [vmem:[#allocation8 + $0x120] sm:$0xff]
    %v240 = vld [vmem:[#allocation8 + $0x128] sm:$0xff]
    %v241 = vld [vmem:[#allocation8 + $0x130] sm:$0xff]
    %v242 = vld [vmem:[#allocation8 + $0x138] sm:$0xff]
    %v243 = vld [vmem:[#allocation8 + $0x140] sm:$0xff]
    %v244 = vld [vmem:[#allocation8 + $0x148] sm:$0xff]
    %v245 = vld [vmem:[#allocation8 + $0x150] sm:$0xff]
    %v246 = vld [vmem:[#allocation8 + $0x158] sm:$0xff]
    %v247 = vld [vmem:[#allocation8 + $0x160] sm:$0xff]
    %v248 = vld [vmem:[#allocation8 + $0x168] sm:$0xff]
    %v249 = vld [vmem:[#allocation8 + $0x170] sm:$0xff]
    %v250 = vld [vmem:[#allocation8 + $0x178] sm:$0xff]
    %v251 = vld [vmem:[#allocation8 + $0x180] sm:$0xff]
    %v252 = vld [vmem:[#allocation8 + $0x188] sm:$0xff]
    %v253 = vld [vmem:[#allocation8 + $0x190] sm:$0xff]
    %v254 = vld [vmem:[#allocation8 + $0x198] sm:$0xff]
    %v255 = vld [vmem:[#allocation8 + $0x1a0] sm:$0xff]
    %v256 = vld [vmem:[#allocation8 + $0x1a8] sm:$0xff]
    %v257 = vld [vmem:[#allocation8 + $0x1b0] sm:$0xff]
    %v258 = vld [vmem:[#allocation8 + $0x1b8] sm:$0xff]
    %v259 = vld [vmem:[#allocation8 + $0x1c0] sm:$0xff]
    %v260 = vld [vmem:[#allocation8 + $0x1c8] sm:$0xff]
    %v261 = vld [vmem:[#allocation8 + $0x1d0] sm:$0xff]
    %v262 = vld [vmem:[#allocation8 + $0x1d8] sm:$0xff]
    %v263 = vld [vmem:[#allocation8 + $0x1e0] sm:$0xff]
    %v264 = vld [vmem:[#allocation8 + $0x1e8] sm:$0xff]
    %v265 = vld [vmem:[#allocation8 + $0x1f0] sm:$0xff]
    %v266 = vld [vmem:[#allocation8 + $0x1f8] sm:$0xff]
    %v267 = vld [vmem:[%s0] sm:$0xff]
    %v268 = vld [vmem:[%s0 + $0x8] sm:$0xff]
    %v269 = vld [vmem:[%s0 + $0x10] sm:$0xff]
    %v270 = vld [vmem:[%s0 + $0x18] sm:$0xff]
    %v271 = vld [vmem:[%s0 + $0x20] sm:$0xff]
    %v272 = vld [vmem:[%s0 + $0x28] sm:$0xff]
    %v273 = vld [vmem:[%s0 + $0x30] sm:$0xff]
    %v274 = vld [vmem:[%s0 + $0x38] sm:$0xff]
    %v275 = vld [vmem:[%s1] sm:$0xff]
    %v276 = vld [vmem:[%s1 + $0x8] sm:$0xff]
    %v277 = vld [vmem:[%s3] sm:$0xf]
    %v279 = vlaneseq
    %v280 = vshrl.u32 %v279, 7
    %v281 = vsub.s32 0, %v280
    %v282 = vrot.slane %v277, %v281
    %v283 = vlaneseq
    %v284 = vshrl.u32 %v283, 7
    %v285 = vsub.s32 1, %v284
    %v286 = vrot.slane %v277, %v285
    %v287 = vlaneseq
    %v288 = vshrl.u32 %v287, 7
    %v289 = vsub.s32 2, %v288
    %v290 = vrot.slane %v277, %v289
    %v291 = vlaneseq
    %v292 = vshrl.u32 %v291, 7
    %v293 = vsub.s32 3, %v292
    %v294 = vrot.slane %v277, %v293
    %v301 = vcombine.high %v275, %v275
    %v302 = vcombine.high %v276, %v276
    %vm303 = vcmask 31744
    %v305 = vsel %vm303, %v267, 0
    %v308 = vsel %vm303, %v268, 0
    %v311 = vsel %vm303, %v269, 0
    %v314 = vsel %vm303, %v270, 0
    %v317 = vsel %vm303, %v271, 0
    %v320 = vsel %vm303, %v272, 0
    %v323 = vsel %vm303, %v273, 0
    %v326 = vsel %vm303, %v274, 0
    %vm328 = vcmask 1043456
    %v329 = vsel %vm328, %v275, 0
    %v331 = vsel %vm328, %v301, 0
    %v333 = vsel %vm328, %v276, 0
    %v335 = vsel %vm328, %v302, 0
    %337 = vmatprep.subr.mxu0 %v331
    %338 = vmatpush1.msra.mxu0 %v329
    %339 = vmatprep.subr.mxu0 0.0
    %340 = vmatpush1.msra.mxu0 0.0
    %341 = vmatprep.subr.mxu0 0.0
    %342 = vmatpush1.msra.mxu0 0.0
    %343 = vmatprep.subr.mxu0 0.0
    %344 = vmatpush1.msra.mxu0 0.0
    %345 = vmatprep.subr.mxu0 0.0
    %346 = vmatpush1.msra.mxu0 0.0
    %347 = vmatprep.subr.mxu0 0.0
    %348 = vmatpush1.msra.mxu0 0.0
    %349 = vmatprep.subr.mxu0 0.0
    %350 = vmatpush1.msra.mxu0 0.0
    %351 = vmatprep.subr.mxu0 0.0
    %352 = vmatpush1.msra.mxu0 0.0
    %353 = vmatprep.subr.mxu0 0.0
    %354 = vmatpush1.msra.mxu0 0.0
    %355 = vmatprep.subr.mxu0 0.0
    %356 = vmatpush1.msra.mxu0 0.0
    %357 = vmatprep.subr.mxu0 0.0
    %358 = vmatpush1.msra.mxu0 0.0
    %359 = vmatprep.subr.mxu0 0.0
    %360 = vmatpush1.msra.mxu0 0.0
    %361 = vmatprep.subr.mxu0 0.0
    %362 = vmatpush1.msra.mxu0 0.0
    %363 = vmatprep.subr.mxu0 0.0
    %364 = vmatpush1.msra.mxu0 0.0
    %365 = vmatprep.subr.mxu0 0.0
    %366 = vmatpush1.msra.mxu0 0.0
    %367 = vmatprep.subr.mxu0 0.0
    %368 = vmatpush1.msra.mxu0 0.0
    %369 = vmatprep.subr.mxu0 0.0
    %370 = vmatpush1.msra.mxu0 0.0
    %371 = vmatprep.subr.mxu0 0.0
    %372 = vmatpush1.msra.mxu0 0.0
    %373 = vmatprep.subr.mxu0 0.0
    %374 = vmatpush1.msra.mxu0 0.0
    %375 = vmatprep.subr.mxu0 0.0
    %376 = vmatpush1.msra.mxu0 0.0
    %377 = vmatprep.subr.mxu0 0.0
    %378 = vmatpush1.msra.mxu0 0.0
    %379 = vmatprep.subr.mxu0 0.0
    %380 = vmatpush1.msra.mxu0 0.0
    %381 = vmatprep.subr.mxu0 0.0
    %382 = vmatpush1.msra.mxu0 0.0
    %383 = vmatprep.subr.mxu0 0.0
    %384 = vmatpush1.msra.mxu0 0.0
    %385 = vmatprep.subr.mxu0 0.0
    %386 = vmatpush1.msra.mxu0 0.0
    %387 = vmatprep.subr.mxu0 0.0
    %388 = vmatpush1.msra.mxu0 0.0
    %389 = vmatprep.subr.mxu0 0.0
    %390 = vmatpush1.msra.mxu0 0.0
    %391 = vmatprep.subr.mxu0 0.0
    %392 = vmatpush1.msra.mxu0 0.0
    %393 = vmatprep.subr.mxu0 0.0
    %394 = vmatpush1.msra.mxu0 0.0
    %395 = vmatprep.subr.mxu0 0.0
    %396 = vmatpush1.msra.mxu0 0.0
    %397 = vmatprep.subr.mxu0 0.0
    %398 = vmatpush1.msra.mxu0 0.0
    %399 = vmatprep.subr.mxu0 0.0
    %400 = vmatpush1.msra.mxu0 0.0
    %401 = vmatprep.mubr.f32.mxu0 0.0
    %402 = vmatmul.mubr.f32.gmra.mrb[0].mxu0 %v305
    %v403 = vpop.f32.mrb[0].mxu0
    %v404 = vadd.f32 %v282, %v403
    %v405 = vpop.f32.mrb[0].mxu0
    %v406 = vadd.f32 %v286, %v405
    %407 = vmatprep.mubr.f32.mxu0 0.0
    %408 = vmatmul.mubr.f32.gmra.mrb[0].mxu0 %v308
    %v409 = vpop.f32.mrb[0].mxu0
    %v410 = vadd.f32 %v282, %v409
    %v411 = vpop.f32.mrb[0].mxu0
    %v412 = vadd.f32 %v286, %v411
    %413 = vmatprep.mubr.f32.mxu0 0.0
    %414 = vmatmul.mubr.f32.gmra.mrb[0].mxu0 %v311
    %v415 = vpop.f32.mrb[0].mxu0
    %v416 = vadd.f32 %v282, %v415
    %v417 = vpop.f32.mrb[0].mxu0
    %v418 = vadd.f32 %v286, %v417
    %419 = vmatprep.mubr.f32.mxu0 0.0
    %420 = vmatmul.mubr.f32.gmra.mrb[0].mxu0 %v314
    %v421 = vpop.f32.mrb[0].mxu0
    %v422 = vadd.f32 %v282, %v421
    %v423 = vpop.f32.mrb[0].mxu0
    %v424 = vadd.f32 %v286, %v423
    %425 = vmatprep.mubr.f32.mxu0 0.0
    %426 = vmatmul.mubr.f32.gmra.mrb[0].mxu0 %v317
    %v427 = vpop.f32.mrb[0].mxu0
    %v428 = vadd.f32 %v282, %v427
    %v429 = vpop.f32.mrb[0].mxu0
    %v430 = vadd.f32 %v286, %v429
    %431 = vmatprep.mubr.f32.mxu0 0.0
    %432 = vmatmul.mubr.f32.gmra.mrb[0].mxu0 %v320
    %v433 = vpop.f32.mrb[0].mxu0
    %v434 = vadd.f32 %v282, %v433
    %v435 = vpop.f32.mrb[0].mxu0
    %v436 = vadd.f32 %v286, %v435
    %437 = vmatprep.mubr.f32.mxu0 0.0
    %438 = vmatmul.mubr.f32.gmra.mrb[0].mxu0 %v323
    %v439 = vpop.f32.mrb[0].mxu0
    %v440 = vadd.f32 %v282, %v439
    %v441 = vpop.f32.mrb[0].mxu0
    %v442 = vadd.f32 %v286, %v441
    %443 = vmatprep.mubr.f32.mxu0 0.0
    %444 = vmatmul.mubr.f32.gmra.mrb[0].mxu0 %v326
    %v445 = vpop.f32.mrb[0].mxu0
    %v446 = vadd.f32 %v282, %v445
    %v447 = vpop.f32.mrb[0].mxu0
    %v448 = vadd.f32 %v286, %v447
    %449 = vdwg.mxu0
    %450 = vmatprep.subr.mxu0 %v335
    %451 = vmatpush1.msra.mxu0 %v333
    %452 = vmatprep.subr.mxu0 0.0
    %453 = vmatpush1.msra.mxu0 0.0
    %454 = vmatprep.subr.mxu0 0.0
    %455 = vmatpush1.msra.mxu0 0.0
    %456 = vmatprep.subr.mxu0 0.0
    %457 = vmatpush1.msra.mxu0 0.0
    %458 = vmatprep.subr.mxu0 0.0
    %459 = vmatpush1.msra.mxu0 0.0
    %460 = vmatprep.subr.mxu0 0.0
    %461 = vmatpush1.msra.mxu0 0.0
    %462 = vmatprep.subr.mxu0 0.0
    %463 = vmatpush1.msra.mxu0 0.0
    %464 = vmatprep.subr.mxu0 0.0
    %465 = vmatpush1.msra.mxu0 0.0
    %466 = vmatprep.subr.mxu0 0.0
    %467 = vmatpush1.msra.mxu0 0.0
    %468 = vmatprep.subr.mxu0 0.0
    %469 = vmatpush1.msra.mxu0 0.0
    %470 = vmatprep.subr.mxu0 0.0
    %471 = vmatpush1.msra.mxu0 0.0
    %472 = vmatprep.subr.mxu0 0.0
    %473 = vmatpush1.msra.mxu0 0.0
    %474 = vmatprep.subr.mxu0 0.0
    %475 = vmatpush1.msra.mxu0 0.0
    %476 = vmatprep.subr.mxu0 0.0
    %477 = vmatpush1.msra.mxu0 0.0
    %478 = vmatprep.subr.mxu0 0.0
    %479 = vmatpush1.msra.mxu0 0.0
    %480 = vmatprep.subr.mxu0 0.0
    %481 = vmatpush1.msra.mxu0 0.0
    %482 = vmatprep.subr.mxu0 0.0
    %483 = vmatpush1.msra.mxu0 0.0
    %484 = vmatprep.subr.mxu0 0.0
    %485 = vmatpush1.msra.mxu0 0.0
    %486 = vmatprep.subr.mxu0 0.0
    %487 = vmatpush1.msra.mxu0 0.0
    %488 = vmatprep.subr.mxu0 0.0
    %489 = vmatpush1.msra.mxu0 0.0
    %490 = vmatprep.subr.mxu0 0.0
    %491 = vmatpush1.msra.mxu0 0.0
    %492 = vmatprep.subr.mxu0 0.0
    %493 = vmatpush1.msra.mxu0 0.0
    %494 = vmatprep.subr.mxu0 0.0
    %495 = vmatpush1.msra.mxu0 0.0
    %496 = vmatprep.subr.mxu0 0.0
    %497 = vmatpush1.msra.mxu0 0.0
    %498 = vmatprep.subr.mxu0 0.0
    %499 = vmatpush1.msra.mxu0 0.0
    %500 = vmatprep.subr.mxu0 0.0
    %501 = vmatpush1.msra.mxu0 0.0
    %502 = vmatprep.subr.mxu0 0.0
    %503 = vmatpush1.msra.mxu0 0.0
    %504 = vmatprep.subr.mxu0 0.0
    %505 = vmatpush1.msra.mxu0 0.0
    %506 = vmatprep.subr.mxu0 0.0
    %507 = vmatpush1.msra.mxu0 0.0
    %508 = vmatprep.subr.mxu0 0.0
    %509 = vmatpush1.msra.mxu0 0.0
    %510 = vmatprep.subr.mxu0 0.0
    %511 = vmatpush1.msra.mxu0 0.0
    %512 = vmatprep.subr.mxu0 0.0
    %513 = vmatpush1.msra.mxu0 0.0
    %514 = vmatprep.mubr.f32.mxu0 0.0
    %515 = vmatmul.mubr.f32.gmra.mrb[0].mxu0 %v305
    %v516 = vpop.f32.mrb[0].mxu0
    %v517 = vadd.f32 %v290, %v516
    %v518 = vpop.f32.mrb[0].mxu0
    %v519 = vadd.f32 %v294, %v518
    %520 = vmatprep.mubr.f32.mxu0 0.0
    %521 = vmatmul.mubr.f32.gmra.mrb[0].mxu0 %v308
    %v522 = vpop.f32.mrb[0].mxu0
    %v523 = vadd.f32 %v290, %v522
    %v524 = vpop.f32.mrb[0].mxu0
    %v525 = vadd.f32 %v294, %v524
    %526 = vmatprep.mubr.f32.mxu0 0.0
    %527 = vmatmul.mubr.f32.gmra.mrb[0].mxu0 %v311
    %v528 = vpop.f32.mrb[0].mxu0
    %v529 = vadd.f32 %v290, %v528
    %v530 = vpop.f32.mrb[0].mxu0
    %v531 = vadd.f32 %v294, %v530
    %532 = vmatprep.mubr.f32.mxu0 0.0
    %533 = vmatmul.mubr.f32.gmra.mrb[0].mxu0 %v314
    %v534 = vpop.f32.mrb[0].mxu0
    %v535 = vadd.f32 %v290, %v534
    %v536 = vpop.f32.mrb[0].mxu0
    %v537 = vadd.f32 %v294, %v536
    %538 = vmatprep.mubr.f32.mxu0 0.0
    %539 = vmatmul.mubr.f32.gmra.mrb[0].mxu0 %v317
    %v540 = vpop.f32.mrb[0].mxu0
    %v541 = vadd.f32 %v290, %v540
    %v542 = vpop.f32.mrb[0].mxu0
    %v543 = vadd.f32 %v294, %v542
    %544 = vmatprep.mubr.f32.mxu0 0.0
    %545 = vmatmul.mubr.f32.gmra.mrb[0].mxu0 %v320
    %v546 = vpop.f32.mrb[0].mxu0
    %v547 = vadd.f32 %v290, %v546
    %v548 = vpop.f32.mrb[0].mxu0
    %v549 = vadd.f32 %v294, %v548
    %550 = vmatprep.mubr.f32.mxu0 0.0
    %551 = vmatmul.mubr.f32.gmra.mrb[0].mxu0 %v323
    %v552 = vpop.f32.mrb[0].mxu0
    %v553 = vadd.f32 %v290, %v552
    %v554 = vpop.f32.mrb[0].mxu0
    %v555 = vadd.f32 %v294, %v554
    %556 = vmatprep.mubr.f32.mxu0 0.0
    %557 = vmatmul.mubr.f32.gmra.mrb[0].mxu0 %v326
    %v558 = vpop.f32.mrb[0].mxu0
    %v559 = vadd.f32 %v290, %v558
    %v560 = vpop.f32.mrb[0].mxu0
    %v561 = vadd.f32 %v294, %v560
    %562 = vdwg.mxu0
    %563 = vst [vmem:[#allocation2] sm:$0xff] %v404
    %564 = vst [vmem:[#allocation2 + $0x8] sm:$0xff] %v406
    %565 = vst [vmem:[#allocation2 + $0x10] sm:$0xff] %v517
    %566 = vst [vmem:[#allocation2 + $0x18] sm:$0xff] %v519
    %567 = vst [vmem:[#allocation2 + $0x20] sm:$0xff] %v410
    %568 = vst [vmem:[#allocation2 + $0x28] sm:$0xff] %v412
    %569 = vst [vmem:[#allocation2 + $0x30] sm:$0xff] %v523
    %570 = vst [vmem:[#allocation2 + $0x38] sm:$0xff] %v525
    %571 = vst [vmem:[#allocation2 + $0x40] sm:$0xff] %v416
    %572 = vst [vmem:[#allocation2 + $0x48] sm:$0xff] %v418
    %573 = vst [vmem:[#allocation2 + $0x50] sm:$0xff] %v529
    %574 = vst [vmem:[#allocation2 + $0x58] sm:$0xff] %v531
    %575 = vst [vmem:[#allocation2 + $0x60] sm:$0xff] %v422
    %576 = vst [vmem:[#allocation2 + $0x68] sm:$0xff] %v424
    %577 = vst [vmem:[#allocation2 + $0x70] sm:$0xff] %v535
    %578 = vst [vmem:[#allocation2 + $0x78] sm:$0xff] %v537
    %579 = vst [vmem:[#allocation2 + $0x80] sm:$0xff] %v428
    %580 = vst [vmem:[#allocation2 + $0x88] sm:$0xff] %v430
    %581 = vst [vmem:[#allocation2 + $0x90] sm:$0xff] %v541
    %582 = vst [vmem:[#allocation2 + $0x98] sm:$0xff] %v543
    %583 = vst [vmem:[#allocation2 + $0xa0] sm:$0xff] %v434
    %584 = vst [vmem:[#allocation2 + $0xa8] sm:$0xff] %v436
    %585 = vst [vmem:[#allocation2 + $0xb0] sm:$0xff] %v547
    %586 = vst [vmem:[#allocation2 + $0xb8] sm:$0xff] %v549
    %587 = vst [vmem:[#allocation2 + $0xc0] sm:$0xff] %v440
    %588 = vst [vmem:[#allocation2 + $0xc8] sm:$0xff] %v442
    %589 = vst [vmem:[#allocation2 + $0xd0] sm:$0xff] %v553
    %590 = vst [vmem:[#allocation2 + $0xd8] sm:$0xff] %v555
    %591 = vst [vmem:[#allocation2 + $0xe0] sm:$0xff] %v446
    %592 = vst [vmem:[#allocation2 + $0xe8] sm:$0xff] %v448
    %593 = vst [vmem:[#allocation2 + $0xf0] sm:$0xff] %v559
    %594 = vst [vmem:[#allocation2 + $0xf8] sm:$0xff] %v561
    %v595 = vld [vmem:[%s6] sm:$0xf]
    %v597 = vlaneseq
    %v598 = vshrl.u32 %v597, 7
    %v599 = vsub.s32 0, %v598
    %v600 = vrot.slane %v595, %v599
    %v601 = vlaneseq
    %v602 = vshrl.u32 %v601, 7
    %v603 = vsub.s32 1, %v602
    %v604 = vrot.slane %v595, %v603
    %v605 = vlaneseq
    %v606 = vshrl.u32 %v605, 7
    %v607 = vsub.s32 2, %v606
    %v608 = vrot.slane %v595, %v607
    %v609 = vlaneseq
    %v610 = vshrl.u32 %v609, 7
    %v611 = vsub.s32 3, %v610
    %v612 = vrot.slane %v595, %v611
    %s617 = smul.u32 0, 4
    %s618 = smul.addr %s617, 8
    %s619 = scalar_lea.vmem [#allocation2], %s618
    %v620 = vld [vmem:[%s619] sm:$0xff]
    %v621 = vld [vmem:[%s619 + $0x8] sm:$0xff]
    %v622 = vld [vmem:[%s619 + $0x10] sm:$0xff]
    %v623 = vld [vmem:[%s619 + $0x18] sm:$0xff]
    %624 = vmatprep.subr.mxu0 %v76
    %625 = vmatpush1.msra.mxu0 %v75
    %626 = vmatprep.subr.mxu0 %v80
    %627 = vmatpush1.msra.mxu0 %v79
    %628 = vmatprep.subr.mxu0 %v84
    %629 = vmatpush1.msra.mxu0 %v83
    %630 = vmatprep.subr.mxu0 %v88
    %631 = vmatpush1.msra.mxu0 %v87
    %632 = vmatprep.subr.mxu0 %v92
    %633 = vmatpush1.msra.mxu0 %v91
    %634 = vmatprep.subr.mxu0 %v96
    %635 = vmatpush1.msra.mxu0 %v95
    %636 = vmatprep.subr.mxu0 %v100
    %637 = vmatpush1.msra.mxu0 %v99
    %638 = vmatprep.subr.mxu0 %v104
    %639 = vmatpush1.msra.mxu0 %v103
    %640 = vmatprep.subr.mxu0 %v108
    %641 = vmatpush1.msra.mxu0 %v107
    %642 = vmatprep.subr.mxu0 %v112
    %643 = vmatpush1.msra.mxu0 %v111
    %644 = vmatprep.subr.mxu0 %v116
    %645 = vmatpush1.msra.mxu0 %v115
    %646 = vmatprep.subr.mxu0 %v120
    %647 = vmatpush1.msra.mxu0 %v119
    %648 = vmatprep.subr.mxu0 %v124
    %649 = vmatpush1.msra.mxu0 %v123
    %650 = vmatprep.subr.mxu0 %v128
    %651 = vmatpush1.msra.mxu0 %v127
    %652 = vmatprep.subr.mxu0 %v132
    %653 = vmatpush1.msra.mxu0 %v131
    %654 = vmatprep.subr.mxu0 %v136
    %655 = vmatpush1.msra.mxu0 %v135
    %656 = vmatprep.subr.mxu0 0.0
    %657 = vmatpush1.msra.mxu0 0.0
    %658 = vmatprep.subr.mxu0 0.0
    %659 = vmatpush1.msra.mxu0 0.0
    %660 = vmatprep.subr.mxu0 0.0
    %661 = vmatpush1.msra.mxu0 0.0
    %662 = vmatprep.subr.mxu0 0.0
    %663 = vmatpush1.msra.mxu0 0.0
    %664 = vmatprep.subr.mxu0 0.0
    %665 = vmatpush1.msra.mxu0 0.0
    %666 = vmatprep.subr.mxu0 0.0
    %667 = vmatpush1.msra.mxu0 0.0
    %668 = vmatprep.subr.mxu0 0.0
    %669 = vmatpush1.msra.mxu0 0.0
    %670 = vmatprep.subr.mxu0 0.0
    %671 = vmatpush1.msra.mxu0 0.0
    %672 = vmatprep.subr.mxu0 0.0
    %673 = vmatpush1.msra.mxu0 0.0
    %674 = vmatprep.subr.mxu0 0.0
    %675 = vmatpush1.msra.mxu0 0.0
    %676 = vmatprep.subr.mxu0 0.0
    %677 = vmatpush1.msra.mxu0 0.0
    %678 = vmatprep.subr.mxu0 0.0
    %679 = vmatpush1.msra.mxu0 0.0
    %680 = vmatprep.subr.mxu0 0.0
    %681 = vmatpush1.msra.mxu0 0.0
    %682 = vmatprep.subr.mxu0 0.0
    %683 = vmatpush1.msra.mxu0 0.0
    %684 = vmatprep.subr.mxu0 0.0
    %685 = vmatpush1.msra.mxu0 0.0
    %686 = vmatprep.subr.mxu0 0.0
    %687 = vmatpush1.msra.mxu0 0.0
    %688 = vmatprep.mubr.f32.mxu0 0.0
    %689 = vmatmul.mubr.f32.gmra.mrb[0].mxu0 0.0
    %v690 = vpop.f32.mrb[0].mxu0
    %v691 = vadd.f32 0.0, %v690
    %v692 = vpop.f32.mrb[0].mxu0
    %v693 = vadd.f32 0.0, %v692
    %694 = vdwg.mxu0
    %695 = vmatprep.subr.mxu0 %v78
    %696 = vmatpush1.msra.mxu0 %v77
    %697 = vmatprep.subr.mxu0 %v82
    %698 = vmatpush1.msra.mxu0 %v81
    %699 = vmatprep.subr.mxu0 %v86
    %700 = vmatpush1.msra.mxu0 %v85
    %701 = vmatprep.subr.mxu0 %v90
    %702 = vmatpush1.msra.mxu0 %v89
    %703 = vmatprep.subr.mxu0 %v94
    %704 = vmatpush1.msra.mxu0 %v93
    %705 = vmatprep.subr.mxu0 %v98
    %706 = vmatpush1.msra.mxu0 %v97
    %707 = vmatprep.subr.mxu0 %v102
    %708 = vmatpush1.msra.mxu0 %v101
    %709 = vmatprep.subr.mxu0 %v106
    %710 = vmatpush1.msra.mxu0 %v105
    %711 = vmatprep.subr.mxu0 %v110
    %712 = vmatpush1.msra.mxu0 %v109
    %713 = vmatprep.subr.mxu0 %v114
    %714 = vmatpush1.msra.mxu0 %v113
    %715 = vmatprep.subr.mxu0 %v118
    %716 = vmatpush1.msra.mxu0 %v117
    %717 = vmatprep.subr.mxu0 %v122
    %718 = vmatpush1.msra.mxu0 %v121
    %719 = vmatprep.subr.mxu0 %v126
    %720 = vmatpush1.msra.mxu0 %v125
    %721 = vmatprep.subr.mxu0 %v130
    %722 = vmatpush1.msra.mxu0 %v129
    %723 = vmatprep.subr.mxu0 %v134
    %724 = vmatpush1.msra.mxu0 %v133
    %725 = vmatprep.subr.mxu0 %v138
    %726 = vmatpush1.msra.mxu0 %v137
    %727 = vmatprep.subr.mxu0 0.0
    %728 = vmatpush1.msra.mxu0 0.0
    %729 = vmatprep.subr.mxu0 0.0
    %730 = vmatpush1.msra.mxu0 0.0
    %731 = vmatprep.subr.mxu0 0.0
    %732 = vmatpush1.msra.mxu0 0.0
    %733 = vmatprep.subr.mxu0 0.0
    %734 = vmatpush1.msra.mxu0 0.0
    %735 = vmatprep.subr.mxu0 0.0
    %736 = vmatpush1.msra.mxu0 0.0
    %737 = vmatprep.subr.mxu0 0.0
    %738 = vmatpush1.msra.mxu0 0.0
    %739 = vmatprep.subr.mxu0 0.0
    %740 = vmatpush1.msra.mxu0 0.0
    %741 = vmatprep.subr.mxu0 0.0
    %742 = vmatpush1.msra.mxu0 0.0
    %743 = vmatprep.subr.mxu0 0.0
    %744 = vmatpush1.msra.mxu0 0.0
    %745 = vmatprep.subr.mxu0 0.0
    %746 = vmatpush1.msra.mxu0 0.0
    %747 = vmatprep.subr.mxu0 0.0
    %748 = vmatpush1.msra.mxu0 0.0
    %749 = vmatprep.subr.mxu0 0.0
    %750 = vmatpush1.msra.mxu0 0.0
    %751 = vmatprep.subr.mxu0 0.0
    %752 = vmatpush1.msra.mxu0 0.0
    %753 = vmatprep.subr.mxu0 0.0
    %754 = vmatpush1.msra.mxu0 0.0
    %755 = vmatprep.subr.mxu0 0.0
    %756 = vmatpush1.msra.mxu0 0.0
    %757 = vmatprep.subr.mxu0 0.0
    %758 = vmatpush1.msra.mxu0 0.0
    %759 = vmatprep.mubr.f32.mxu0 0.0
    %760 = vmatmul.mubr.f32.gmra.mrb[0].mxu0 0.0
    %v761 = vpop.f32.mrb[0].mxu0
    %v762 = vadd.f32 0.0, %v761
    %v763 = vpop.f32.mrb[0].mxu0
    %v764 = vadd.f32 0.0, %v763
    %765 = vdwg.mxu0
    %v766 = vadd.f32 %v620, %v691
    %v767 = vadd.f32 %v621, %v693
    %v768 = vadd.f32 %v622, %v762
    %v769 = vadd.f32 %v623, %v764
    %v770 = vmul.f32 %v766, 0.5
    %v771 = vtanh.pop %v770
    %v772 = vmul.f32 %v771, 0.5
    %v773 = vadd.f32 %v772, 0.5
    %v774 = vmul.f32 %v767, 0.5
    %v775 = vtanh.pop %v774
    %v776 = vmul.f32 %v775, 0.5
    %v777 = vadd.f32 %v776, 0.5
    %v778 = vtanh.pop %v768
    %v779 = vmul.f32 %v769, 0.5
    %v780 = vtanh.pop %v779
    %v781 = vmul.f32 %v780, 0.5
    %v782 = vadd.f32 %v781, 0.5
    %v783 = vmul.f32 %v777, 0.0
    %v784 = vmul.f32 %v773, %v778
    %v785 = vadd.f32 %v783, %v784
    %v786 = vtanh.pop %v785
    %v787 = vmul.f32 %v782, %v786
    %788 = vmatprep.subr.mxu0 %v140
    %789 = vmatpush1.msra.mxu0 %v139
    %790 = vmatprep.subr.mxu0 %v144
    %791 = vmatpush1.msra.mxu0 %v143
    %792 = vmatprep.subr.mxu0 %v148
    %793 = vmatpush1.msra.mxu0 %v147
    %794 = vmatprep.subr.mxu0 %v152
    %795 = vmatpush1.msra.mxu0 %v151
    %796 = vmatprep.subr.mxu0 %v156
    %797 = vmatpush1.msra.mxu0 %v155
    %798 = vmatprep.subr.mxu0 %v160
    %799 = vmatpush1.msra.mxu0 %v159
    %800 = vmatprep.subr.mxu0 %v164
    %801 = vmatpush1.msra.mxu0 %v163
    %802 = vmatprep.subr.mxu0 %v168
    %803 = vmatpush1.msra.mxu0 %v167
    %804 = vmatprep.subr.mxu0 %v172
    %805 = vmatpush1.msra.mxu0 %v171
    %806 = vmatprep.subr.mxu0 %v176
    %807 = vmatpush1.msra.mxu0 %v175
    %808 = vmatprep.subr.mxu0 %v180
    %809 = vmatpush1.msra.mxu0 %v179
    %810 = vmatprep.subr.mxu0 %v184
    %811 = vmatpush1.msra.mxu0 %v183
    %812 = vmatprep.subr.mxu0 %v188
    %813 = vmatpush1.msra.mxu0 %v187
    %814 = vmatprep.subr.mxu0 %v192
    %815 = vmatpush1.msra.mxu0 %v191
    %816 = vmatprep.subr.mxu0 %v196
    %817 = vmatpush1.msra.mxu0 %v195
    %818 = vmatprep.subr.mxu0 %v200
    %819 = vmatpush1.msra.mxu0 %v199
    %820 = vmatprep.subr.mxu0 0.0
    %821 = vmatpush1.msra.mxu0 0.0
    %822 = vmatprep.subr.mxu0 0.0
    %823 = vmatpush1.msra.mxu0 0.0
    %824 = vmatprep.subr.mxu0 0.0
    %825 = vmatpush1.msra.mxu0 0.0
    %826 = vmatprep.subr.mxu0 0.0
    %827 = vmatpush1.msra.mxu0 0.0
    %828 = vmatprep.subr.mxu0 0.0
    %829 = vmatpush1.msra.mxu0 0.0
    %830 = vmatprep.subr.mxu0 0.0
    %831 = vmatpush1.msra.mxu0 0.0
    %832 = vmatprep.subr.mxu0 0.0
    %833 = vmatpush1.msra.mxu0 0.0
    %834 = vmatprep.subr.mxu0 0.0
    %835 = vmatpush1.msra.mxu0 0.0
    %836 = vmatprep.subr.mxu0 0.0
    %837 = vmatpush1.msra.mxu0 0.0
    %838 = vmatprep.subr.mxu0 0.0
    %839 = vmatpush1.msra.mxu0 0.0
    %840 = vmatprep.subr.mxu0 0.0
    %841 = vmatpush1.msra.mxu0 0.0
    %842 = vmatprep.subr.mxu0 0.0
    %843 = vmatpush1.msra.mxu0 0.0
    %844 = vmatprep.subr.mxu0 0.0
    %845 = vmatpush1.msra.mxu0 0.0
    %846 = vmatprep.subr.mxu0 0.0
    %847 = vmatpush1.msra.mxu0 0.0
    %848 = vmatprep.subr.mxu0 0.0
    %849 = vmatpush1.msra.mxu0 0.0
    %850 = vmatprep.subr.mxu0 0.0
    %851 = vmatpush1.msra.mxu0 0.0
    %852 = vmatprep.mubr.f32.mxu0 0.0
    %853 = vmatmul.mubr.f32.gmra.mrb[0].mxu0 %v787
    %v854 = vpop.f32.mrb[0].mxu0
    %v855 = vadd.f32 0.0, %v854
    %v856 = vpop.f32.mrb[0].mxu0
    %v857 = vadd.f32 0.0, %v856
    %858 = vdwg.mxu0
    %859 = vmatprep.subr.mxu0 %v142
    %860 = vmatpush1.msra.mxu0 %v141
    %861 = vmatprep.subr.mxu0 %v146
    %862 = vmatpush1.msra.mxu0 %v145
    %863 = vmatprep.subr.mxu0 %v150
    %864 = vmatpush1.msra.mxu0 %v149
    %865 = vmatprep.subr.mxu0 %v154
    %866 = vmatpush1.msra.mxu0 %v153
    %867 = vmatprep.subr.mxu0 %v158
    %868 = vmatpush1.msra.mxu0 %v157
    %869 = vmatprep.subr.mxu0 %v162
    %870 = vmatpush1.msra.mxu0 %v161
    %871 = vmatprep.subr.mxu0 %v166
    %872 = vmatpush1.msra.mxu0 %v165
    %873 = vmatprep.subr.mxu0 %v170
    %874 = vmatpush1.msra.mxu0 %v169
    %875 = vmatprep.subr.mxu0 %v174
    %876 = vmatpush1.msra.mxu0 %v173
    %877 = vmatprep.subr.mxu0 %v178
    %878 = vmatpush1.msra.mxu0 %v177
    %879 = vmatprep.subr.mxu0 %v182
    %880 = vmatpush1.msra.mxu0 %v181
    %881 = vmatprep.subr.mxu0 %v186
    %882 = vmatpush1.msra.mxu0 %v185
    %883 = vmatprep.subr.mxu0 %v190
    %884 = vmatpush1.msra.mxu0 %v189
    %885 = vmatprep.subr.mxu0 %v194
    %886 = vmatpush1.msra.mxu0 %v193
    %887 = vmatprep.subr.mxu0 %v198
    %888 = vmatpush1.msra.mxu0 %v197
    %889 = vmatprep.subr.mxu0 %v202
    %890 = vmatpush1.msra.mxu0 %v201
    %891 = vmatprep.subr.mxu0 0.0
    %892 = vmatpush1.msra.mxu0 0.0
    %893 = vmatprep.subr.mxu0 0.0
    %894 = vmatpush1.msra.mxu0 0.0
    %895 = vmatprep.subr.mxu0 0.0
    %896 = vmatpush1.msra.mxu0 0.0
    %897 = vmatprep.subr.mxu0 0.0
    %898 = vmatpush1.msra.mxu0 0.0
    %899 = vmatprep.subr.mxu0 0.0
    %900 = vmatpush1.msra.mxu0 0.0
    %901 = vmatprep.subr.mxu0 0.0
    %902 = vmatpush1.msra.mxu0 0.0
    %903 = vmatprep.subr.mxu0 0.0
    %904 = vmatpush1.msra.mxu0 0.0
    %905 = vmatprep.subr.mxu0 0.0
    %906 = vmatpush1.msra.mxu0 0.0
    %907 = vmatprep.subr.mxu0 0.0
    %908 = vmatpush1.msra.mxu0 0.0
    %909 = vmatprep.subr.mxu0 0.0
    %910 = vmatpush1.msra.mxu0 0.0
    %911 = vmatprep.subr.mxu0 0.0
    %912 = vmatpush1.msra.mxu0 0.0
    %913 = vmatprep.subr.mxu0 0.0
    %914 = vmatpush1.msra.mxu0 0.0
    %915 = vmatprep.subr.mxu0 0.0
    %916 = vmatpush1.msra.mxu0 0.0
    %917 = vmatprep.subr.mxu0 0.0
    %918 = vmatpush1.msra.mxu0 0.0
    %919 = vmatprep.subr.mxu0 0.0
    %920 = vmatpush1.msra.mxu0 0.0
    %921 = vmatprep.subr.mxu0 0.0
    %922 = vmatpush1.msra.mxu0 0.0
    %923 = vmatprep.mubr.f32.mxu0 0.0
    %924 = vmatmul.mubr.f32.gmra.mrb[0].mxu0 %v787
    %v925 = vpop.f32.mrb[0].mxu0
    %v926 = vadd.f32 0.0, %v925
    %v927 = vpop.f32.mrb[0].mxu0
    %v928 = vadd.f32 0.0, %v927
    %929 = vdwg.mxu0
    %930 = vmatprep.subr.mxu0 %v204
    %931 = vmatpush1.msra.mxu0 %v203
    %932 = vmatprep.subr.mxu0 %v208
    %933 = vmatpush1.msra.mxu0 %v207
    %934 = vmatprep.subr.mxu0 %v212
    %935 = vmatpush1.msra.mxu0 %v211
    %936 = vmatprep.subr.mxu0 %v216
    %937 = vmatpush1.msra.mxu0 %v215
    %938 = vmatprep.subr.mxu0 %v220
    %939 = vmatpush1.msra.mxu0 %v219
    %940 = vmatprep.subr.mxu0 %v224
    %941 = vmatpush1.msra.mxu0 %v223
    %942 = vmatprep.subr.mxu0 %v228
    %943 = vmatpush1.msra.mxu0 %v227
    %944 = vmatprep.subr.mxu0 %v232
    %945 = vmatpush1.msra.mxu0 %v231
    %946 = vmatprep.subr.mxu0 %v236
    %947 = vmatpush1.msra.mxu0 %v235
    %948 = vmatprep.subr.mxu0 %v240
    %949 = vmatpush1.msra.mxu0 %v239
    %950 = vmatprep.subr.mxu0 %v244
    %951 = vmatpush1.msra.mxu0 %v243
    %952 = vmatprep.subr.mxu0 %v248
    %953 = vmatpush1.msra.mxu0 %v247
    %954 = vmatprep.subr.mxu0 %v252
    %955 = vmatpush1.msra.mxu0 %v251
    %956 = vmatprep.subr.mxu0 %v256
    %957 = vmatpush1.msra.mxu0 %v255
    %958 = vmatprep.subr.mxu0 %v260
    %959 = vmatpush1.msra.mxu0 %v259
    %960 = vmatprep.subr.mxu0 %v264
    %961 = vmatpush1.msra.mxu0 %v263
    %962 = vmatprep.subr.mxu0 0.0
    %963 = vmatpush1.msra.mxu0 0.0
    %964 = vmatprep.subr.mxu0 0.0
    %965 = vmatpush1.msra.mxu0 0.0
    %966 = vmatprep.subr.mxu0 0.0
    %967 = vmatpush1.msra.mxu0 0.0
    %968 = vmatprep.subr.mxu0 0.0
    %969 = vmatpush1.msra.mxu0 0.0
    %970 = vmatprep.subr.mxu0 0.0
    %971 = vmatpush1.msra.mxu0 0.0
    %972 = vmatprep.subr.mxu0 0.0
    %973 = vmatpush1.msra.mxu0 0.0
    %974 = vmatprep.subr.mxu0 0.0
    %975 = vmatpush1.msra.mxu0 0.0
    %976 = vmatprep.subr.mxu0 0.0
    %977 = vmatpush1.msra.mxu0 0.0
    %978 = vmatprep.subr.mxu0 0.0
    %979 = vmatpush1.msra.mxu0 0.0
    %980 = vmatprep.subr.mxu0 0.0
    %981 = vmatpush1.msra.mxu0 0.0
    %982 = vmatprep.subr.mxu0 0.0
    %983 = vmatpush1.msra.mxu0 0.0
    %984 = vmatprep.subr.mxu0 0.0
    %985 = vmatpush1.msra.mxu0 0.0
    %986 = vmatprep.subr.mxu0 0.0
    %987 = vmatpush1.msra.mxu0 0.0
    %988 = vmatprep.subr.mxu0 0.0
    %989 = vmatpush1.msra.mxu0 0.0
    %990 = vmatprep.subr.mxu0 0.0
    %991 = vmatpush1.msra.mxu0 0.0
    %992 = vmatprep.subr.mxu0 0.0
    %993 = vmatpush1.msra.mxu0 0.0
    %994 = vmatprep.mubr.f32.mxu0 0.0
    %995 = vmatmul.mubr.f32.gmra.mrb[0].mxu0 0.0
    %v996 = vpop.f32.mrb[0].mxu0
    %v997 = vadd.f32 %v855, %v996
    %v998 = vpop.f32.mrb[0].mxu0
    %v999 = vadd.f32 %v857, %v998
    %1000 = vdwg.mxu0
    %1001 = vmatprep.subr.mxu0 %v206
    %1002 = vmatpush1.msra.mxu0 %v205
    %1003 = vmatprep.subr.mxu0 %v210
    %1004 = vmatpush1.msra.mxu0 %v209
    %1005 = vmatprep.subr.mxu0 %v214
    %1006 = vmatpush1.msra.mxu0 %v213
    %1007 = vmatprep.subr.mxu0 %v218
    %1008 = vmatpush1.msra.mxu0 %v217
    %1009 = vmatprep.subr.mxu0 %v222
    %1010 = vmatpush1.msra.mxu0 %v221
    %1011 = vmatprep.subr.mxu0 %v226
    %1012 = vmatpush1.msra.mxu0 %v225
    %1013 = vmatprep.subr.mxu0 %v230
    %1014 = vmatpush1.msra.mxu0 %v229
    %1015 = vmatprep.subr.mxu0 %v234
    %1016 = vmatpush1.msra.mxu0 %v233
    %1017 = vmatprep.subr.mxu0 %v238
    %1018 = vmatpush1.msra.mxu0 %v237
    %1019 = vmatprep.subr.mxu0 %v242
    %1020 = vmatpush1.msra.mxu0 %v241
    %1021 = vmatprep.subr.mxu0 %v246
    %1022 = vmatpush1.msra.mxu0 %v245
    %1023 = vmatprep.subr.mxu0 %v250
    %1024 = vmatpush1.msra.mxu0 %v249
    %1025 = vmatprep.subr.mxu0 %v254
    %1026 = vmatpush1.msra.mxu0 %v253
    %1027 = vmatprep.subr.mxu0 %v258
    %1028 = vmatpush1.msra.mxu0 %v257
    %1029 = vmatprep.subr.mxu0 %v262
    %1030 = vmatpush1.msra.mxu0 %v261
    %1031 = vmatprep.subr.mxu0 %v266
    %1032 = vmatpush1.msra.mxu0 %v265
    %1033 = vmatprep.subr.mxu0 0.0
    %1034 = vmatpush1.msra.mxu0 0.0
    %1035 = vmatprep.subr.mxu0 0.0
    %1036 = vmatpush1.msra.mxu0 0.0
    %1037 = vmatprep.subr.mxu0 0.0
    %1038 = vmatpush1.msra.mxu0 0.0
    %1039 = vmatprep.subr.mxu0 0.0
    %1040 = vmatpush1.msra.mxu0 0.0
    %1041 = vmatprep.subr.mxu0 0.0
    %1042 = vmatpush1.msra.mxu0 0.0
    %1043 = vmatprep.subr.mxu0 0.0
    %1044 = vmatpush1.msra.mxu0 0.0
    %1045 = vmatprep.subr.mxu0 0.0
    %1046 = vmatpush1.msra.mxu0 0.0
    %1047 = vmatprep.subr.mxu0 0.0
    %1048 = vmatpush1.msra.mxu0 0.0
    %1049 = vmatprep.subr.mxu0 0.0
    %1050 = vmatpush1.msra.mxu0 0.0
    %1051 = vmatprep.subr.mxu0 0.0
    %1052 = vmatpush1.msra.mxu0 0.0
    %1053 = vmatprep.subr.mxu0 0.0
    %1054 = vmatpush1.msra.mxu0 0.0
    %1055 = vmatprep.subr.mxu0 0.0
    %1056 = vmatpush1.msra.mxu0 0.0
    %1057 = vmatprep.subr.mxu0 0.0
    %1058 = vmatpush1.msra.mxu0 0.0
    %1059 = vmatprep.subr.mxu0 0.0
    %1060 = vmatpush1.msra.mxu0 0.0
    %1061 = vmatprep.subr.mxu0 0.0
    %1062 = vmatpush1.msra.mxu0 0.0
    %1063 = vmatprep.subr.mxu0 0.0
    %1064 = vmatpush1.msra.mxu0 0.0
    %1065 = vmatprep.mubr.f32.mxu0 0.0
    %1066 = vmatmul.mubr.f32.gmra.mrb[0].mxu0 0.0
    %v1067 = vpop.f32.mrb[0].mxu0
    %v1068 = vadd.f32 %v926, %v1067
    %v1069 = vpop.f32.mrb[0].mxu0
    %v1070 = vadd.f32 %v928, %v1069
    %1071 = vdwg.mxu0
    %v1072 = vadd.f32 %v997, %v600
    %v1073 = vadd.f32 %v999, %v604
    %v1074 = vadd.f32 %v1068, %v608
    %v1075 = vadd.f32 %v1070, %v612
    %v1076 = vmul.f32 %v1072, 0.5
    %v1077 = vtanh.pop %v1076
    %v1078 = vmul.f32 %v1077, 0.5
    %v1079 = vadd.f32 %v1078, 0.5
    %v1080 = vmul.f32 %v1073, 0.5
    %v1081 = vtanh.pop %v1080
    %v1082 = vmul.f32 %v1081, 0.5
    %v1083 = vadd.f32 %v1082, 0.5
    %v1084 = vtanh.pop %v1074
    %v1085 = vmul.f32 %v1075, 0.5
    %v1086 = vtanh.pop %v1085
    %v1087 = vmul.f32 %v1086, 0.5
    %v1088 = vadd.f32 %v1087, 0.5
    %v1089 = vmul.f32 %v1083, 0.0
    %v1090 = vmul.f32 %v1079, %v1084
    %v1091 = vadd.f32 %v1089, %v1090
    %v1092 = vtanh.pop %v1091
    %v1093 = vmul.f32 %v1088, %v1092
    %s1094 = smul.u32 1, 4
    %s1095 = smul.addr %s1094, 8
    %s1096 = scalar_lea.vmem [#allocation2], %s1095
    %v1097 = vld [vmem:[%s1096] sm:$0xff]
    %v1098 = vld [vmem:[%s1096 + $0x8] sm:$0xff]
    %v1099 = vld [vmem:[%s1096 + $0x10] sm:$0xff]
    %v1100 = vld [vmem:[%s1096 + $0x18] sm:$0xff]
    %1101 = vmatprep.subr.mxu0 %v76
    %1102 = vmatpush1.msra.mxu0 %v75
    %1103 = vmatprep.subr.mxu0 %v80
    %1104 = vmatpush1.msra.mxu0 %v79
    %1105 = vmatprep.subr.mxu0 %v84
    %1106 = vmatpush1.msra.mxu0 %v83
    %1107 = vmatprep.subr.mxu0 %v88
    %1108 = vmatpush1.msra.mxu0 %v87
    %1109 = vmatprep.subr.mxu0 %v92
    %1110 = vmatpush1.msra.mxu0 %v91
    %1111 = vmatprep.subr.mxu0 %v96
    %1112 = vmatpush1.msra.mxu0 %v95
    %1113 = vmatprep.subr.mxu0 %v100
    %1114 = vmatpush1.msra.mxu0 %v99
    %1115 = vmatprep.subr.mxu0 %v104
    %1116 = vmatpush1.msra.mxu0 %v103
    %1117 = vmatprep.subr.mxu0 %v108
    %1118 = vmatpush1.msra.mxu0 %v107
    %1119 = vmatprep.subr.mxu0 %v112
    %1120 = vmatpush1.msra.mxu0 %v111
    %1121 = vmatprep.subr.mxu0 %v116
    %1122 = vmatpush1.msra.mxu0 %v115
    %1123 = vmatprep.subr.mxu0 %v120
    %1124 = vmatpush1.msra.mxu0 %v119
    %1125 = vmatprep.subr.mxu0 %v124
    %1126 = vmatpush1.msra.mxu0 %v123
    %1127 = vmatprep.subr.mxu0 %v128
    %1128 = vmatpush1.msra.mxu0 %v127
    %1129 = vmatprep.subr.mxu0 %v132
    %1130 = vmatpush1.msra.mxu0 %v131
    %1131 = vmatprep.subr.mxu0 %v136
    %1132 = vmatpush1.msra.mxu0 %v135
    %1133 = vmatprep.subr.mxu0 0.0
    %1134 = vmatpush1.msra.mxu0 0.0
    %1135 = vmatprep.subr.mxu0 0.0
    %1136 = vmatpush1.msra.mxu0 0.0
    %1137 = vmatprep.subr.mxu0 0.0
    %1138 = vmatpush1.msra.mxu0 0.0
    %1139 = vmatprep.subr.mxu0 0.0
    %1140 = vmatpush1.msra.mxu0 0.0
    %1141 = vmatprep.subr.mxu0 0.0
    %1142 = vmatpush1.msra.mxu0 0.0
    %1143 = vmatprep.subr.mxu0 0.0
    %1144 = vmatpush1.msra.mxu0 0.0
    %1145 = vmatprep.subr.mxu0 0.0
    %1146 = vmatpush1.msra.mxu0 0.0
    %1147 = vmatprep.subr.mxu0 0.0
    %1148 = vmatpush1.msra.mxu0 0.0
    %1149 = vmatprep.subr.mxu0 0.0
    %1150 = vmatpush1.msra.mxu0 0.0
    %1151 = vmatprep.subr.mxu0 0.0
    %1152 = vmatpush1.msra.mxu0 0.0
    %1153 = vmatprep.subr.mxu0 0.0
    %1154 = vmatpush1.msra.mxu0 0.0
    %1155 = vmatprep.subr.mxu0 0.0
    %1156 = vmatpush1.msra.mxu0 0.0
    %1157 = vmatprep.subr.mxu0 0.0
    %1158 = vmatpush1.msra.mxu0 0.0
    %1159 = vmatprep.subr.mxu0 0.0
    %1160 = vmatpush1.msra.mxu0 0.0
    %1161 = vmatprep.subr.mxu0 0.0
    %1162 = vmatpush1.msra.mxu0 0.0
    %1163 = vmatprep.subr.mxu0 0.0
    %1164 = vmatpush1.msra.mxu0 0.0
    %1165 = vmatprep.mubr.f32.mxu0 0.0
    %1166 = vmatmul.mubr.f32.gmra.mrb[0].mxu0 %v787
    %v1167 = vpop.f32.mrb[0].mxu0
    %v1168 = vadd.f32 0.0, %v1167
    %v1169 = vpop.f32.mrb[0].mxu0
    %v1170 = vadd.f32 0.0, %v1169
    %1171 = vdwg.mxu0
    %1172 = vmatprep.subr.mxu0 %v78
    %1173 = vmatpush1.msra.mxu0 %v77
    %1174 = vmatprep.subr.mxu0 %v82
    %1175 = vmatpush1.msra.mxu0 %v81
    %1176 = vmatprep.subr.mxu0 %v86
    %1177 = vmatpush1.msra.mxu0 %v85
    %1178 = vmatprep.subr.mxu0 %v90
    %1179 = vmatpush1.msra.mxu0 %v89
    %1180 = vmatprep.subr.mxu0 %v94
    %1181 = vmatpush1.msra.mxu0 %v93
    %1182 = vmatprep.subr.mxu0 %v98
    %1183 = vmatpush1.msra.mxu0 %v97
    %1184 = vmatprep.subr.mxu0 %v102
    %1185 = vmatpush1.msra.mxu0 %v101
    %1186 = vmatprep.subr.mxu0 %v106
    %1187 = vmatpush1.msra.mxu0 %v105
    %1188 = vmatprep.subr.mxu0 %v110
    %1189 = vmatpush1.msra.mxu0 %v109
    %1190 = vmatprep.subr.mxu0 %v114
    %1191 = vmatpush1.msra.mxu0 %v113
    %1192 = vmatprep.subr.mxu0 %v118
    %1193 = vmatpush1.msra.mxu0 %v117
    %1194 = vmatprep.subr.mxu0 %v122
    %1195 = vmatpush1.msra.mxu0 %v121
    %1196 = vmatprep.subr.mxu0 %v126
    %1197 = vmatpush1.msra.mxu0 %v125
    %1198 = vmatprep.subr.mxu0 %v130
    %1199 = vmatpush1.msra.mxu0 %v129
    %1200 = vmatprep.subr.mxu0 %v134
    %1201 = vmatpush1.msra.mxu0 %v133
    %1202 = vmatprep.subr.mxu0 %v138
    %1203 = vmatpush1.msra.mxu0 %v137
    %1204 = vmatprep.subr.mxu0 0.0
    %1205 = vmatpush1.msra.mxu0 0.0
    %1206 = vmatprep.subr.mxu0 0.0
    %1207 = vmatpush1.msra.mxu0 0.0
    %1208 = vmatprep.subr.mxu0 0.0
    %1209 = vmatpush1.msra.mxu0 0.0
    %1210 = vmatprep.subr.mxu0 0.0
    %1211 = vmatpush1.msra.mxu0 0.0
    %1212 = vmatprep.subr.mxu0 0.0
    %1213 = vmatpush1.msra.mxu0 0.0
    %1214 = vmatprep.subr.mxu0 0.0
    %1215 = vmatpush1.msra.mxu0 0.0
    %1216 = vmatprep.subr.mxu0 0.0
    %1217 = vmatpush1.msra.mxu0 0.0
    %1218 = vmatprep.subr.mxu0 0.0
    %1219 = vmatpush1.msra.mxu0 0.0
    %1220 = vmatprep.subr.mxu0 0.0
    %1221 = vmatpush1.msra.mxu0 0.0
    %1222 = vmatprep.subr.mxu0 0.0
    %1223 = vmatpush1.msra.mxu0 0.0
    %1224 = vmatprep.subr.mxu0 0.0
    %1225 = vmatpush1.msra.mxu0 0.0
    %1226 = vmatprep.subr.mxu0 0.0
    %1227 = vmatpush1.msra.mxu0 0.0
    %1228 = vmatprep.subr.mxu0 0.0
    %1229 = vmatpush1.msra.mxu0 0.0
    %1230 = vmatprep.subr.mxu0 0.0
    %1231 = vmatpush1.msra.mxu0 0.0
    %1232 = vmatprep.subr.mxu0 0.0
    %1233 = vmatpush1.msra.mxu0 0.0
    %1234 = vmatprep.subr.mxu0 0.0
    %1235 = vmatpush1.msra.mxu0 0.0
    %1236 = vmatprep.mubr.f32.mxu0 0.0
    %1237 = vmatmul.mubr.f32.gmra.mrb[0].mxu0 %v787
    %v1238 = vpop.f32.mrb[0].mxu0
    %v1239 = vadd.f32 0.0, %v1238
    %v1240 = vpop.f32.mrb[0].mxu0
    %v1241 = vadd.f32 0.0, %v1240
    %1242 = vdwg.mxu0
    %v1243 = vadd.f32 %v1097, %v1168
    %v1244 = vadd.f32 %v1098, %v1170
    %v1245 = vadd.f32 %v1099, %v1239
    %v1246 = vadd.f32 %v1100, %v1241
    %v1247 = vmul.f32 %v1243, 0.5
    %v1248 = vtanh.pop %v1247
    %v1249 = vmul.f32 %v1248, 0.5
    %v1250 = vadd.f32 %v1249, 0.5
    %v1251 = vmul.f32 %v1244, 0.5
    %v1252 = vtanh.pop %v1251
    %v1253 = vmul.f32 %v1252, 0.5
    %v1254 = vadd.f32 %v1253, 0.5
    %v1255 = vtanh.pop %v1245
    %v1256 = vmul.f32 %v1246, 0.5
    %v1257 = vtanh.pop %v1256
    %v1258 = vmul.f32 %v1257, 0.5
    %v1259 = vadd.f32 %v1258, 0.5
    %v1260 = vmul.f32 %v1254, %v785
    %v1261 = vmul.f32 %v1250, %v1255
    %v1262 = vadd.f32 %v1260, %v1261
    %v1263 = vtanh.pop %v1262
    %v1264 = vmul.f32 %v1259, %v1263
    %1265 = vmatprep.subr.mxu0 %v140
    %1266 = vmatpush1.msra.mxu0 %v139
    %1267 = vmatprep.subr.mxu0 %v144
    %1268 = vmatpush1.msra.mxu0 %v143
    %1269 = vmatprep.subr.mxu0 %v148
    %1270 = vmatpush1.msra.mxu0 %v147
    %1271 = vmatprep.subr.mxu0 %v152
    %1272 = vmatpush1.msra.mxu0 %v151
    %1273 = vmatprep.subr.mxu0 %v156
    %1274 = vmatpush1.msra.mxu0 %v155
    %1275 = vmatprep.subr.mxu0 %v160
    %1276 = vmatpush1.msra.mxu0 %v159
    %1277 = vmatprep.subr.mxu0 %v164
    %1278 = vmatpush1.msra.mxu0 %v163
    %1279 = vmatprep.subr.mxu0 %v168
    %1280 = vmatpush1.msra.mxu0 %v167
    %1281 = vmatprep.subr.mxu0 %v172
    %1282 = vmatpush1.msra.mxu0 %v171
    %1283 = vmatprep.subr.mxu0 %v176
    %1284 = vmatpush1.msra.mxu0 %v175
    %1285 = vmatprep.subr.mxu0 %v180
    %1286 = vmatpush1.msra.mxu0 %v179
    %1287 = vmatprep.subr.mxu0 %v184
    %1288 = vmatpush1.msra.mxu0 %v183
    %1289 = vmatprep.subr.mxu0 %v188
    %1290 = vmatpush1.msra.mxu0 %v187
    %1291 = vmatprep.subr.mxu0 %v192
    %1292 = vmatpush1.msra.mxu0 %v191
    %1293 = vmatprep.subr.mxu0 %v196
    %1294 = vmatpush1.msra.mxu0 %v195
    %1295 = vmatprep.subr.mxu0 %v200
    %1296 = vmatpush1.msra.mxu0 %v199
    %1297 = vmatprep.subr.mxu0 0.0
    %1298 = vmatpush1.msra.mxu0 0.0
    %1299 = vmatprep.subr.mxu0 0.0
    %1300 = vmatpush1.msra.mxu0 0.0
    %1301 = vmatprep.subr.mxu0 0.0
    %1302 = vmatpush1.msra.mxu0 0.0
    %1303 = vmatprep.subr.mxu0 0.0
    %1304 = vmatpush1.msra.mxu0 0.0
    %1305 = vmatprep.subr.mxu0 0.0
    %1306 = vmatpush1.msra.mxu0 0.0
    %1307 = vmatprep.subr.mxu0 0.0
    %1308 = vmatpush1.msra.mxu0 0.0
    %1309 = vmatprep.subr.mxu0 0.0
    %1310 = vmatpush1.msra.mxu0 0.0
    %1311 = vmatprep.subr.mxu0 0.0
    %1312 = vmatpush1.msra.mxu0 0.0
    %1313 = vmatprep.subr.mxu0 0.0
    %1314 = vmatpush1.msra.mxu0 0.0
    %1315 = vmatprep.subr.mxu0 0.0
    %1316 = vmatpush1.msra.mxu0 0.0
    %1317 = vmatprep.subr.mxu0 0.0
    %1318 = vmatpush1.msra.mxu0 0.0
    %1319 = vmatprep.subr.mxu0 0.0
    %1320 = vmatpush1.msra.mxu0 0.0
    %1321 = vmatprep.subr.mxu0 0.0
    %1322 = vmatpush1.msra.mxu0 0.0
    %1323 = vmatprep.subr.mxu0 0.0
    %1324 = vmatpush1.msra.mxu0 0.0
    %1325 = vmatprep.subr.mxu0 0.0
    %1326 = vmatpush1.msra.mxu0 0.0
    %1327 = vmatprep.subr.mxu0 0.0
    %1328 = vmatpush1.msra.mxu0 0.0
    %1329 = vmatprep.mubr.f32.mxu0 0.0
    %1330 = vmatmul.mubr.f32.gmra.mrb[0].mxu0 %v1264
    %v1331 = vpop.f32.mrb[0].mxu0
    %v1332 = vadd.f32 0.0, %v1331
    %v1333 = vpop.f32.mrb[0].mxu0
    %v1334 = vadd.f32 0.0, %v1333
    %1335 = vdwg.mxu0
    %1336 = vmatprep.subr.mxu0 %v142
    %1337 = vmatpush1.msra.mxu0 %v141
    %1338 = vmatprep.subr.mxu0 %v146
    %1339 = vmatpush1.msra.mxu0 %v145
    %1340 = vmatprep.subr.mxu0 %v150
    %1341 = vmatpush1.msra.mxu0 %v149
    %1342 = vmatprep.subr.mxu0 %v154
    %1343 = vmatpush1.msra.mxu0 %v153
    %1344 = vmatprep.subr.mxu0 %v158
    %1345 = vmatpush1.msra.mxu0 %v157
    %1346 = vmatprep.subr.mxu0 %v162
    %1347 = vmatpush1.msra.mxu0 %v161
    %1348 = vmatprep.subr.mxu0 %v166
    %1349 = vmatpush1.msra.mxu0 %v165
    %1350 = vmatprep.subr.mxu0 %v170
    %1351 = vmatpush1.msra.mxu0 %v169
    %1352 = vmatprep.subr.mxu0 %v174
    %1353 = vmatpush1.msra.mxu0 %v173
    %1354 = vmatprep.subr.mxu0 %v178
    %1355 = vmatpush1.msra.mxu0 %v177
    %1356 = vmatprep.subr.mxu0 %v182
    %1357 = vmatpush1.msra.mxu0 %v181
    %1358 = vmatprep.subr.mxu0 %v186
    %1359 = vmatpush1.msra.mxu0 %v185
    %1360 = vmatprep.subr.mxu0 %v190
    %1361 = vmatpush1.msra.mxu0 %v189
    %1362 = vmatprep.subr.mxu0 %v194
    %1363 = vmatpush1.msra.mxu0 %v193
    %1364 = vmatprep.subr.mxu0 %v198
    %1365 = vmatpush1.msra.mxu0 %v197
    %1366 = vmatprep.subr.mxu0 %v202
    %1367 = vmatpush1.msra.mxu0 %v201
    %1368 = vmatprep.subr.mxu0 0.0
    %1369 = vmatpush1.msra.mxu0 0.0
    %1370 = vmatprep.subr.mxu0 0.0
    %1371 = vmatpush1.msra.mxu0 0.0
    %1372 = vmatprep.subr.mxu0 0.0
    %1373 = vmatpush1.msra.mxu0 0.0
    %1374 = vmatprep.subr.mxu0 0.0
    %1375 = vmatpush1.msra.mxu0 0.0
    %1376 = vmatprep.subr.mxu0 0.0
    %1377 = vmatpush1.msra.mxu0 0.0
    %1378 = vmatprep.subr.mxu0 0.0
    %1379 = vmatpush1.msra.mxu0 0.0
    %1380 = vmatprep.subr.mxu0 0.0
    %1381 = vmatpush1.msra.mxu0 0.0
    %1382 = vmatprep.subr.mxu0 0.0
    %1383 = vmatpush1.msra.mxu0 0.0
    %1384 = vmatprep.subr.mxu0 0.0
    %1385 = vmatpush1.msra.mxu0 0.0
    %1386 = vmatprep.subr.mxu0 0.0
    %1387 = vmatpush1.msra.mxu0 0.0
    %1388 = vmatprep.subr.mxu0 0.0
    %1389 = vmatpush1.msra.mxu0 0.0
    %1390 = vmatprep.subr.mxu0 0.0
    %1391 = vmatpush1.msra.mxu0 0.0
    %1392 = vmatprep.subr.mxu0 0.0
    %1393 = vmatpush1.msra.mxu0 0.0
    %1394 = vmatprep.subr.mxu0 0.0
    %1395 = vmatpush1.msra.mxu0 0.0
    %1396 = vmatprep.subr.mxu0 0.0
    %1397 = vmatpush1.msra.mxu0 0.0
    %1398 = vmatprep.subr.mxu0 0.0
    %1399 = vmatpush1.msra.mxu0 0.0
    %1400 = vmatprep.mubr.f32.mxu0 0.0
    %1401 = vmatmul.mubr.f32.gmra.mrb[0].mxu0 %v1264
    %v1402 = vpop.f32.mrb[0].mxu0
    %v1403 = vadd.f32 0.0, %v1402
    %v1404 = vpop.f32.mrb[0].mxu0
    %v1405 = vadd.f32 0.0, %v1404
    %1406 = vdwg.mxu0
    %1407 = vmatprep.subr.mxu0 %v204
    %1408 = vmatpush1.msra.mxu0 %v203
    %1409 = vmatprep.subr.mxu0 %v208
    %1410 = vmatpush1.msra.mxu0 %v207
    %1411 = vmatprep.subr.mxu0 %v212
    %1412 = vmatpush1.msra.mxu0 %v211
    %1413 = vmatprep.subr.mxu0 %v216
    %1414 = vmatpush1.msra.mxu0 %v215
    %1415 = vmatprep.subr.mxu0 %v220
    %1416 = vmatpush1.msra.mxu0 %v219
    %1417 = vmatprep.subr.mxu0 %v224
    %1418 = vmatpush1.msra.mxu0 %v223
    %1419 = vmatprep.subr.mxu0 %v228
    %1420 = vmatpush1.msra.mxu0 %v227
    %1421 = vmatprep.subr.mxu0 %v232
    %1422 = vmatpush1.msra.mxu0 %v231
    %1423 = vmatprep.subr.mxu0 %v236
    %1424 = vmatpush1.msra.mxu0 %v235
    %1425 = vmatprep.subr.mxu0 %v240
    %1426 = vmatpush1.msra.mxu0 %v239
    %1427 = vmatprep.subr.mxu0 %v244
    %1428 = vmatpush1.msra.mxu0 %v243
    %1429 = vmatprep.subr.mxu0 %v248
    %1430 = vmatpush1.msra.mxu0 %v247
    %1431 = vmatprep.subr.mxu0 %v252
    %1432 = vmatpush1.msra.mxu0 %v251
    %1433 = vmatprep.subr.mxu0 %v256
    %1434 = vmatpush1.msra.mxu0 %v255
    %1435 = vmatprep.subr.mxu0 %v260
    %1436 = vmatpush1.msra.mxu0 %v259
    %1437 = vmatprep.subr.mxu0 %v264
    %1438 = vmatpush1.msra.mxu0 %v263
    %1439 = vmatprep.subr.mxu0 0.0
    %1440 = vmatpush1.msra.mxu0 0.0
    %1441 = vmatprep.subr.mxu0 0.0
    %1442 = vmatpush1.msra.mxu0 0.0
    %1443 = vmatprep.subr.mxu0 0.0
    %1444 = vmatpush1.msra.mxu0 0.0
    %1445 = vmatprep.subr.mxu0 0.0
    %1446 = vmatpush1.msra.mxu0 0.0
    %1447 = vmatprep.subr.mxu0 0.0
    %1448 = vmatpush1.msra.mxu0 0.0
    %1449 = vmatprep.subr.mxu0 0.0
    %1450 = vmatpush1.msra.mxu0 0.0
    %1451 = vmatprep.subr.mxu0 0.0
    %1452 = vmatpush1.msra.mxu0 0.0
    %1453 = vmatprep.subr.mxu0 0.0
    %1454 = vmatpush1.msra.mxu0 0.0
    %1455 = vmatprep.subr.mxu0 0.0
    %1456 = vmatpush1.msra.mxu0 0.0
    %1457 = vmatprep.subr.mxu0 0.0
    %1458 = vmatpush1.msra.mxu0 0.0
    %1459 = vmatprep.subr.mxu0 0.0
    %1460 = vmatpush1.msra.mxu0 0.0
    %1461 = vmatprep.subr.mxu0 0.0
    %1462 = vmatpush1.msra.mxu0 0.0
    %1463 = vmatprep.subr.mxu0 0.0
    %1464 = vmatpush1.msra.mxu0 0.0
    %1465 = vmatprep.subr.mxu0 0.0
    %1466 = vmatpush1.msra.mxu0 0.0
    %1467 = vmatprep.subr.mxu0 0.0
    %1468 = vmatpush1.msra.mxu0 0.0
    %1469 = vmatprep.subr.mxu0 0.0
    %1470 = vmatpush1.msra.mxu0 0.0
    %1471 = vmatprep.mubr.f32.mxu0 0.0
    %1472 = vmatmul.mubr.f32.gmra.mrb[0].mxu0 %v1093
    %v1473 = vpop.f32.mrb[0].mxu0
    %v1474 = vadd.f32 %v1332, %v1473
    %v1475 = vpop.f32.mrb[0].mxu0
    %v1476 = vadd.f32 %v1334, %v1475
    %1477 = vdwg.mxu0
    %1478 = vmatprep.subr.mxu0 %v206
    %1479 = vmatpush1.msra.mxu0 %v205
    %1480 = vmatprep.subr.mxu0 %v210
    %1481 = vmatpush1.msra.mxu0 %v209
    %1482 = vmatprep.subr.mxu0 %v214
    %1483 = vmatpush1.msra.mxu0 %v213
    %1484 = vmatprep.subr.mxu0 %v218
    %1485 = vmatpush1.msra.mxu0 %v217
    %1486 = vmatprep.subr.mxu0 %v222
    %1487 = vmatpush1.msra.mxu0 %v221
    %1488 = vmatprep.subr.mxu0 %v226
    %1489 = vmatpush1.msra.mxu0 %v225
    %1490 = vmatprep.subr.mxu0 %v230
    %1491 = vmatpush1.msra.mxu0 %v229
    %1492 = vmatprep.subr.mxu0 %v234
    %1493 = vmatpush1.msra.mxu0 %v233
    %1494 = vmatprep.subr.mxu0 %v238
    %1495 = vmatpush1.msra.mxu0 %v237
    %1496 = vmatprep.subr.mxu0 %v242
    %1497 = vmatpush1.msra.mxu0 %v241
    %1498 = vmatprep.subr.mxu0 %v246
    %1499 = vmatpush1.msra.mxu0 %v245
    %1500 = vmatprep.subr.mxu0 %v250
    %1501 = vmatpush1.msra.mxu0 %v249
    %1502 = vmatprep.subr.mxu0 %v254
    %1503 = vmatpush1.msra.mxu0 %v253
    %1504 = vmatprep.subr.mxu0 %v258
    %1505 = vmatpush1.msra.mxu0 %v257
    %1506 = vmatprep.subr.mxu0 %v262
    %1507 = vmatpush1.msra.mxu0 %v261
    %1508 = vmatprep.subr.mxu0 %v266
    %1509 = vmatpush1.msra.mxu0 %v265
    %1510 = vmatprep.subr.mxu0 0.0
    %1511 = vmatpush1.msra.mxu0 0.0
    %1512 = vmatprep.subr.mxu0 0.0
    %1513 = vmatpush1.msra.mxu0 0.0
    %1514 = vmatprep.subr.mxu0 0.0
    %1515 = vmatpush1.msra.mxu0 0.0
    %1516 = vmatprep.subr.mxu0 0.0
    %1517 = vmatpush1.msra.mxu0 0.0
    %1518 = vmatprep.subr.mxu0 0.0
    %1519 = vmatpush1.msra.mxu0 0.0
    %1520 = vmatprep.subr.mxu0 0.0
    %1521 = vmatpush1.msra.mxu0 0.0
    %1522 = vmatprep.subr.mxu0 0.0
    %1523 = vmatpush1.msra.mxu0 0.0
    %1524 = vmatprep.subr.mxu0 0.0
    %1525 = vmatpush1.msra.mxu0 0.0
    %1526 = vmatprep.subr.mxu0 0.0
    %1527 = vmatpush1.msra.mxu0 0.0
    %1528 = vmatprep.subr.mxu0 0.0
    %1529 = vmatpush1.msra.mxu0 0.0
    %1530 = vmatprep.subr.mxu0 0.0
    %1531 = vmatpush1.msra.mxu0 0.0
    %1532 = vmatprep.subr.mxu0 0.0
    %1533 = vmatpush1.msra.mxu0 0.0
    %1534 = vmatprep.subr.mxu0 0.0
    %1535 = vmatpush1.msra.mxu0 0.0
    %1536 = vmatprep.subr.mxu0 0.0
    %1537 = vmatpush1.msra.mxu0 0.0
    %1538 = vmatprep.subr.mxu0 0.0
    %1539 = vmatpush1.msra.mxu0 0.0
    %1540 = vmatprep.subr.mxu0 0.0
    %1541 = vmatpush1.msra.mxu0 0.0
    %1542 = vmatprep.mubr.f32.mxu0 0.0
    %1543 = vmatmul.mubr.f32.gmra.mrb[0].mxu0 %v1093
    %v1544 = vpop.f32.mrb[0].mxu0
    %v1545 = vadd.f32 %v1403, %v1544
    %v1546 = vpop.f32.mrb[0].mxu0
    %v1547 = vadd.f32 %v1405, %v1546
    %1548 = vdwg.mxu0
    %v1549 = vadd.f32 %v1474, %v600
    %v1550 = vadd.f32 %v1476, %v604
    %v1551 = vadd.f32 %v1545, %v608
    %v1552 = vadd.f32 %v1547, %v612
    %v1553 = vmul.f32 %v1549, 0.5
    %v1554 = vtanh.pop %v1553
    %v1555 = vmul.f32 %v1554, 0.5
    %v1556 = vadd.f32 %v1555, 0.5
    %v1557 = vmul.f32 %v1550, 0.5
    %v1558 = vtanh.pop %v1557
    %v1559 = vmul.f32 %v1558, 0.5
    %v1560 = vadd.f32 %v1559, 0.5
    %v1561 = vtanh.pop %v1551
    %v1562 = vmul.f32 %v1552, 0.5
    %v1563 = vtanh.pop %v1562
    %v1564 = vmul.f32 %v1563, 0.5
    %v1565 = vadd.f32 %v1564, 0.5
    %v1566 = vmul.f32 %v1560, %v1091
    %v1567 = vmul.f32 %v1556, %v1561
    %v1568 = vadd.f32 %v1566, %v1567
    %v1569 = vtanh.pop %v1568
    %v1570 = vmul.f32 %v1565, %v1569
    %s1571 = smul.u32 2, 4
    %s1572 = smul.addr %s1571, 8
    %s1573 = scalar_lea.vmem [#allocation2], %s1572
    %v1574 = vld [vmem:[%s1573] sm:$0xff]
    %v1575 = vld [vmem:[%s1573 + $0x8] sm:$0xff]
    %v1576 = vld [vmem:[%s1573 + $0x10] sm:$0xff]
    %v1577 = vld [vmem:[%s1573 + $0x18] sm:$0xff]
    %1578 = vmatprep.subr.mxu0 %v76
    %1579 = vmatpush1.msra.mxu0 %v75
    %1580 = vmatprep.subr.mxu0 %v80
    %1581 = vmatpush1.msra.mxu0 %v79
    %1582 = vmatprep.subr.mxu0 %v84
    %1583 = vmatpush1.msra.mxu0 %v83
    %1584 = vmatprep.subr.mxu0 %v88
    %1585 = vmatpush1.msra.mxu0 %v87
    %1586 = vmatprep.subr.mxu0 %v92
    %1587 = vmatpush1.msra.mxu0 %v91
    %1588 = vmatprep.subr.mxu0 %v96
    %1589 = vmatpush1.msra.mxu0 %v95
    %1590 = vmatprep.subr.mxu0 %v100
    %1591 = vmatpush1.msra.mxu0 %v99
    %1592 = vmatprep.subr.mxu0 %v104
    %1593 = vmatpush1.msra.mxu0 %v103
    %1594 = vmatprep.subr.mxu0 %v108
    %1595 = vmatpush1.msra.mxu0 %v107
    %1596 = vmatprep.subr.mxu0 %v112
    %1597 = vmatpush1.msra.mxu0 %v111
    %1598 = vmatprep.subr.mxu0 %v116
    %1599 = vmatpush1.msra.mxu0 %v115
    %1600 = vmatprep.subr.mxu0 %v120
    %1601 = vmatpush1.msra.mxu0 %v119
    %1602 = vmatprep.subr.mxu0 %v124
    %1603 = vmatpush1.msra.mxu0 %v123
    %1604 = vmatprep.subr.mxu0 %v128
    %1605 = vmatpush1.msra.mxu0 %v127
    %1606 = vmatprep.subr.mxu0 %v132
    %1607 = vmatpush1.msra.mxu0 %v131
    %1608 = vmatprep.subr.mxu0 %v136
    %1609 = vmatpush1.msra.mxu0 %v135
    %1610 = vmatprep.subr.mxu0 0.0
    %1611 = vmatpush1.msra.mxu0 0.0
    %1612 = vmatprep.subr.mxu0 0.0
    %1613 = vmatpush1.msra.mxu0 0.0
    %1614 = vmatprep.subr.mxu0 0.0
    %1615 = vmatpush1.msra.mxu0 0.0
    %1616 = vmatprep.subr.mxu0 0.0
    %1617 = vmatpush1.msra.mxu0 0.0
    %1618 = vmatprep.subr.mxu0 0.0
    %1619 = vmatpush1.msra.mxu0 0.0
    %1620 = vmatprep.subr.mxu0 0.0
    %1621 = vmatpush1.msra.mxu0 0.0
    %1622 = vmatprep.subr.mxu0 0.0
    %1623 = vmatpush1.msra.mxu0 0.0
    %1624 = vmatprep.subr.mxu0 0.0
    %1625 = vmatpush1.msra.mxu0 0.0
    %1626 = vmatprep.subr.mxu0 0.0
    %1627 = vmatpush1.msra.mxu0 0.0
    %1628 = vmatprep.subr.mxu0 0.0
    %1629 = vmatpush1.msra.mxu0 0.0
    %1630 = vmatprep.subr.mxu0 0.0
    %1631 = vmatpush1.msra.mxu0 0.0
    %1632 = vmatprep.subr.mxu0 0.0
    %1633 = vmatpush1.msra.mxu0 0.0
    %1634 = vmatprep.subr.mxu0 0.0
    %1635 = vmatpush1.msra.mxu0 0.0
    %1636 = vmatprep.subr.mxu0 0.0
    %1637 = vmatpush1.msra.mxu0 0.0
    %1638 = vmatprep.subr.mxu0 0.0
    %1639 = vmatpush1.msra.mxu0 0.0
    %1640 = vmatprep.subr.mxu0 0.0
    %1641 = vmatpush1.msra.mxu0 0.0
    %1642 = vmatprep.mubr.f32.mxu0 0.0
    %1643 = vmatmul.mubr.f32.gmra.mrb[0].mxu0 %v1264
    %v1644 = vpop.f32.mrb[0].mxu0
    %v1645 = vadd.f32 0.0, %v1644
    %v1646 = vpop.f32.mrb[0].mxu0
    %v1647 = vadd.f32 0.0, %v1646
    %1648 = vdwg.mxu0
    %1649 = vmatprep.subr.mxu0 %v78
    %1650 = vmatpush1.msra.mxu0 %v77
    %1651 = vmatprep.subr.mxu0 %v82
    %1652 = vmatpush1.msra.mxu0 %v81
    %1653 = vmatprep.subr.mxu0 %v86
    %1654 = vmatpush1.msra.mxu0 %v85
    %1655 = vmatprep.subr.mxu0 %v90
    %1656 = vmatpush1.msra.mxu0 %v89
    %1657 = vmatprep.subr.mxu0 %v94
    %1658 = vmatpush1.msra.mxu0 %v93
    %1659 = vmatprep.subr.mxu0 %v98
    %1660 = vmatpush1.msra.mxu0 %v97
    %1661 = vmatprep.subr.mxu0 %v102
    %1662 = vmatpush1.msra.mxu0 %v101
    %1663 = vmatprep.subr.mxu0 %v106
    %1664 = vmatpush1.msra.mxu0 %v105
    %1665 = vmatprep.subr.mxu0 %v110
    %1666 = vmatpush1.msra.mxu0 %v109
    %1667 = vmatprep.subr.mxu0 %v114
    %1668 = vmatpush1.msra.mxu0 %v113
    %1669 = vmatprep.subr.mxu0 %v118
    %1670 = vmatpush1.msra.mxu0 %v117
    %1671 = vmatprep.subr.mxu0 %v122
    %1672 = vmatpush1.msra.mxu0 %v121
    %1673 = vmatprep.subr.mxu0 %v126
    %1674 = vmatpush1.msra.mxu0 %v125
    %1675 = vmatprep.subr.mxu0 %v130
    %1676 = vmatpush1.msra.mxu0 %v129
    %1677 = vmatprep.subr.mxu0 %v134
    %1678 = vmatpush1.msra.mxu0 %v133
    %1679 = vmatprep.subr.mxu0 %v138
    %1680 = vmatpush1.msra.mxu0 %v137
    %1681 = vmatprep.subr.mxu0 0.0
    %1682 = vmatpush1.msra.mxu0 0.0
    %1683 = vmatprep.subr.mxu0 0.0
    %1684 = vmatpush1.msra.mxu0 0.0
    %1685 = vmatprep.subr.mxu0 0.0
    %1686 = vmatpush1.msra.mxu0 0.0
    %1687 = vmatprep.subr.mxu0 0.0
    %1688 = vmatpush1.msra.mxu0 0.0
    %1689 = vmatprep.subr.mxu0 0.0
    %1690 = vmatpush1.msra.mxu0 0.0
    %1691 = vmatprep.subr.mxu0 0.0
    %1692 = vmatpush1.msra.mxu0 0.0
    %1693 = vmatprep.subr.mxu0 0.0
    %1694 = vmatpush1.msra.mxu0 0.0
    %1695 = vmatprep.subr.mxu0 0.0
    %1696 = vmatpush1.msra.mxu0 0.0
    %1697 = vmatprep.subr.mxu0 0.0
    %1698 = vmatpush1.msra.mxu0 0.0
    %1699 = vmatprep.subr.mxu0 0.0
    %1700 = vmatpush1.msra.mxu0 0.0
    %1701 = vmatprep.subr.mxu0 0.0
    %1702 = vmatpush1.msra.mxu0 0.0
    %1703 = vmatprep.subr.mxu0 0.0
    %1704 = vmatpush1.msra.mxu0 0.0
    %1705 = vmatprep.subr.mxu0 0.0
    %1706 = vmatpush1.msra.mxu0 0.0
    %1707 = vmatprep.subr.mxu0 0.0
    %1708 = vmatpush1.msra.mxu0 0.0
    %1709 = vmatprep.subr.mxu0 0.0
    %1710 = vmatpush1.msra.mxu0 0.0
    %1711 = vmatprep.subr.mxu0 0.0
    %1712 = vmatpush1.msra.mxu0 0.0
    %1713 = vmatprep.mubr.f32.mxu0 0.0
    %1714 = vmatmul.mubr.f32.gmra.mrb[0].mxu0 %v1264
    %v1715 = vpop.f32.mrb[0].mxu0
    %v1716 = vadd.f32 0.0, %v1715
    %v1717 = vpop.f32.mrb[0].mxu0
    %v1718 = vadd.f32 0.0, %v1717
    %1719 = vdwg.mxu0
    %v1720 = vadd.f32 %v1574, %v1645
    %v1721 = vadd.f32 %v1575, %v1647
    %v1722 = vadd.f32 %v1576, %v1716
    %v1723 = vadd.f32 %v1577, %v1718
    %v1724 = vmul.f32 %v1720, 0.5
    %v1725 = vtanh.pop %v1724
    %v1726 = vmul.f32 %v1725, 0.5
    %v1727 = vadd.f32 %v1726, 0.5
    %v1728 = vmul.f32 %v1721, 0.5
    %v1729 = vtanh.pop %v1728
    %v1730 = vmul.f32 %v1729, 0.5
    %v1731 = vadd.f32 %v1730, 0.5
    %v1732 = vtanh.pop %v1722
    %v1733 = vmul.f32 %v1723, 0.5
    %v1734 = vtanh.pop %v1733
    %v1735 = vmul.f32 %v1734, 0.5
    %v1736 = vadd.f32 %v1735, 0.5
    %v1737 = vmul.f32 %v1731, %v1262
    %v1738 = vmul.f32 %v1727, %v1732
    %v1739 = vadd.f32 %v1737, %v1738
    %v1740 = vtanh.pop %v1739
    %v1741 = vmul.f32 %v1736, %v1740
    %1742 = vmatprep.subr.mxu0 %v140
    %1743 = vmatpush1.msra.mxu0 %v139
    %1744 = vmatprep.subr.mxu0 %v144
    %1745 = vmatpush1.msra.mxu0 %v143
    %1746 = vmatprep.subr.mxu0 %v148
    %1747 = vmatpush1.msra.mxu0 %v147
    %1748 = vmatprep.subr.mxu0 %v152
    %1749 = vmatpush1.msra.mxu0 %v151
    %1750 = vmatprep.subr.mxu0 %v156
    %1751 = vmatpush1.msra.mxu0 %v155
    %1752 = vmatprep.subr.mxu0 %v160
    %1753 = vmatpush1.msra.mxu0 %v159
    %1754 = vmatprep.subr.mxu0 %v164
    %1755 = vmatpush1.msra.mxu0 %v163
    %1756 = vmatprep.subr.mxu0 %v168
    %1757 = vmatpush1.msra.mxu0 %v167
    %1758 = vmatprep.subr.mxu0 %v172
    %1759 = vmatpush1.msra.mxu0 %v171
    %1760 = vmatprep.subr.mxu0 %v176
    %1761 = vmatpush1.msra.mxu0 %v175
    %1762 = vmatprep.subr.mxu0 %v180
    %1763 = vmatpush1.msra.mxu0 %v179
    %1764 = vmatprep.subr.mxu0 %v184
    %1765 = vmatpush1.msra.mxu0 %v183
    %1766 = vmatprep.subr.mxu0 %v188
    %1767 = vmatpush1.msra.mxu0 %v187
    %1768 = vmatprep.subr.mxu0 %v192
    %1769 = vmatpush1.msra.mxu0 %v191
    %1770 = vmatprep.subr.mxu0 %v196
    %1771 = vmatpush1.msra.mxu0 %v195
    %1772 = vmatprep.subr.mxu0 %v200
    %1773 = vmatpush1.msra.mxu0 %v199
    %1774 = vmatprep.subr.mxu0 0.0
    %1775 = vmatpush1.msra.mxu0 0.0
    %1776 = vmatprep.subr.mxu0 0.0
    %1777 = vmatpush1.msra.mxu0 0.0
    %1778 = vmatprep.subr.mxu0 0.0
    %1779 = vmatpush1.msra.mxu0 0.0
    %1780 = vmatprep.subr.mxu0 0.0
    %1781 = vmatpush1.msra.mxu0 0.0
    %1782 = vmatprep.subr.mxu0 0.0
    %1783 = vmatpush1.msra.mxu0 0.0
    %1784 = vmatprep.subr.mxu0 0.0
    %1785 = vmatpush1.msra.mxu0 0.0
    %1786 = vmatprep.subr.mxu0 0.0
    %1787 = vmatpush1.msra.mxu0 0.0
    %1788 = vmatprep.subr.mxu0 0.0
    %1789 = vmatpush1.msra.mxu0 0.0
    %1790 = vmatprep.subr.mxu0 0.0
    %1791 = vmatpush1.msra.mxu0 0.0
    %1792 = vmatprep.subr.mxu0 0.0
    %1793 = vmatpush1.msra.mxu0 0.0
    %1794 = vmatprep.subr.mxu0 0.0
    %1795 = vmatpush1.msra.mxu0 0.0
    %1796 = vmatprep.subr.mxu0 0.0
    %1797 = vmatpush1.msra.mxu0 0.0
    %1798 = vmatprep.subr.mxu0 0.0
    %1799 = vmatpush1.msra.mxu0 0.0
    %1800 = vmatprep.subr.mxu0 0.0
    %1801 = vmatpush1.msra.mxu0 0.0
    %1802 = vmatprep.subr.mxu0 0.0
    %1803 = vmatpush1.msra.mxu0 0.0
    %1804 = vmatprep.subr.mxu0 0.0
    %1805 = vmatpush1.msra.mxu0 0.0
    %1806 = vmatprep.mubr.f32.mxu0 0.0
    %1807 = vmatmul.mubr.f32.gmra.mrb[0].mxu0 %v1741
    %v1808 = vpop.f32.mrb[0].mxu0
    %v1809 = vadd.f32 0.0, %v1808
    %v1810 = vpop.f32.mrb[0].mxu0
    %v1811 = vadd.f32 0.0, %v1810
    %1812 = vdwg.mxu0
    %1813 = vmatprep.subr.mxu0 %v142
    %1814 = vmatpush1.msra.mxu0 %v141
    %1815 = vmatprep.subr.mxu0 %v146
    %1816 = vmatpush1.msra.mxu0 %v145
    %1817 = vmatprep.subr.mxu0 %v150
    %1818 = vmatpush1.msra.mxu0 %v149
    %1819 = vmatprep.subr.mxu0 %v154
    %1820 = vmatpush1.msra.mxu0 %v153
    %1821 = vmatprep.subr.mxu0 %v158
    %1822 = vmatpush1.msra.mxu0 %v157
    %1823 = vmatprep.subr.mxu0 %v162
    %1824 = vmatpush1.msra.mxu0 %v161
    %1825 = vmatprep.subr.mxu0 %v166
    %1826 = vmatpush1.msra.mxu0 %v165
    %1827 = vmatprep.subr.mxu0 %v170
    %1828 = vmatpush1.msra.mxu0 %v169
    %1829 = vmatprep.subr.mxu0 %v174
    %1830 = vmatpush1.msra.mxu0 %v173
    %1831 = vmatprep.subr.mxu0 %v178
    %1832 = vmatpush1.msra.mxu0 %v177
    %1833 = vmatprep.subr.mxu0 %v182
    %1834 = vmatpush1.msra.mxu0 %v181
    %1835 = vmatprep.subr.mxu0 %v186
    %1836 = vmatpush1.msra.mxu0 %v185
    %1837 = vmatprep.subr.mxu0 %v190
    %1838 = vmatpush1.msra.mxu0 %v189
    %1839 = vmatprep.subr.mxu0 %v194
    %1840 = vmatpush1.msra.mxu0 %v193
    %1841 = vmatprep.subr.mxu0 %v198
    %1842 = vmatpush1.msra.mxu0 %v197
    %1843 = vmatprep.subr.mxu0 %v202
    %1844 = vmatpush1.msra.mxu0 %v201
    %1845 = vmatprep.subr.mxu0 0.0
    %1846 = vmatpush1.msra.mxu0 0.0
    %1847 = vmatprep.subr.mxu0 0.0
    %1848 = vmatpush1.msra.mxu0 0.0
    %1849 = vmatprep.subr.mxu0 0.0
    %1850 = vmatpush1.msra.mxu0 0.0
    %1851 = vmatprep.subr.mxu0 0.0
    %1852 = vmatpush1.msra.mxu0 0.0
    %1853 = vmatprep.subr.mxu0 0.0
    %1854 = vmatpush1.msra.mxu0 0.0
    %1855 = vmatprep.subr.mxu0 0.0
    %1856 = vmatpush1.msra.mxu0 0.0
    %1857 = vmatprep.subr.mxu0 0.0
    %1858 = vmatpush1.msra.mxu0 0.0
    %1859 = vmatprep.subr.mxu0 0.0
    %1860 = vmatpush1.msra.mxu0 0.0
    %1861 = vmatprep.subr.mxu0 0.0
    %1862 = vmatpush1.msra.mxu0 0.0
    %1863 = vmatprep.subr.mxu0 0.0
    %1864 = vmatpush1.msra.mxu0 0.0
    %1865 = vmatprep.subr.mxu0 0.0
    %1866 = vmatpush1.msra.mxu0 0.0
    %1867 = vmatprep.subr.mxu0 0.0
    %1868 = vmatpush1.msra.mxu0 0.0
    %1869 = vmatprep.subr.mxu0 0.0
    %1870 = vmatpush1.msra.mxu0 0.0
    %1871 = vmatprep.subr.mxu0 0.0
    %1872 = vmatpush1.msra.mxu0 0.0
    %1873 = vmatprep.subr.mxu0 0.0
    %1874 = vmatpush1.msra.mxu0 0.0
    %1875 = vmatprep.subr.mxu0 0.0
    %1876 = vmatpush1.msra.mxu0 0.0
    %1877 = vmatprep.mubr.f32.mxu0 0.0
    %1878 = vmatmul.mubr.f32.gmra.mrb[0].mxu0 %v1741
    %v1879 = vpop.f32.mrb[0].mxu0
    %v1880 = vadd.f32 0.0, %v1879
    %v1881 = vpop.f32.mrb[0].mxu0
    %v1882 = vadd.f32 0.0, %v1881
    %1883 = vdwg.mxu0
    %1884 = vmatprep.subr.mxu0 %v204
    %1885 = vmatpush1.msra.mxu0 %v203
    %1886 = vmatprep.subr.mxu0 %v208
    %1887 = vmatpush1.msra.mxu0 %v207
    %1888 = vmatprep.subr.mxu0 %v212
    %1889 = vmatpush1.msra.mxu0 %v211
    %1890 = vmatprep.subr.mxu0 %v216
    %1891 = vmatpush1.msra.mxu0 %v215
    %1892 = vmatprep.subr.mxu0 %v220
    %1893 = vmatpush1.msra.mxu0 %v219
    %1894 = vmatprep.subr.mxu0 %v224
    %1895 = vmatpush1.msra.mxu0 %v223
    %1896 = vmatprep.subr.mxu0 %v228
    %1897 = vmatpush1.msra.mxu0 %v227
    %1898 = vmatprep.subr.mxu0 %v232
    %1899 = vmatpush1.msra.mxu0 %v231
    %1900 = vmatprep.subr.mxu0 %v236
    %1901 = vmatpush1.msra.mxu0 %v235
    %1902 = vmatprep.subr.mxu0 %v240
    %1903 = vmatpush1.msra.mxu0 %v239
    %1904 = vmatprep.subr.mxu0 %v244
    %1905 = vmatpush1.msra.mxu0 %v243
    %1906 = vmatprep.subr.mxu0 %v248
    %1907 = vmatpush1.msra.mxu0 %v247
    %1908 = vmatprep.subr.mxu0 %v252
    %1909 = vmatpush1.msra.mxu0 %v251
    %1910 = vmatprep.subr.mxu0 %v256
    %1911 = vmatpush1.msra.mxu0 %v255
    %1912 = vmatprep.subr.mxu0 %v260
    %1913 = vmatpush1.msra.mxu0 %v259
    %1914 = vmatprep.subr.mxu0 %v264
    %1915 = vmatpush1.msra.mxu0 %v263
    %1916 = vmatprep.subr.mxu0 0.0
    %1917 = vmatpush1.msra.mxu0 0.0
    %1918 = vmatprep.subr.mxu0 0.0
    %1919 = vmatpush1.msra.mxu0 0.0
    %1920 = vmatprep.subr.mxu0 0.0
    %1921 = vmatpush1.msra.mxu0 0.0
    %1922 = vmatprep.subr.mxu0 0.0
    %1923 = vmatpush1.msra.mxu0 0.0
    %1924 = vmatprep.subr.mxu0 0.0
    %1925 = vmatpush1.msra.mxu0 0.0
    %1926 = vmatprep.subr.mxu0 0.0
    %1927 = vmatpush1.msra.mxu0 0.0
    %1928 = vmatprep.subr.mxu0 0.0
    %1929 = vmatpush1.msra.mxu0 0.0
    %1930 = vmatprep.subr.mxu0 0.0
    %1931 = vmatpush1.msra.mxu0 0.0
    %1932 = vmatprep.subr.mxu0 0.0
    %1933 = vmatpush1.msra.mxu0 0.0
    %1934 = vmatprep.subr.mxu0 0.0
    %1935 = vmatpush1.msra.mxu0 0.0
    %1936 = vmatprep.subr.mxu0 0.0
    %1937 = vmatpush1.msra.mxu0 0.0
    %1938 = vmatprep.subr.mxu0 0.0
    %1939 = vmatpush1.msra.mxu0 0.0
    %1940 = vmatprep.subr.mxu0 0.0
    %1941 = vmatpush1.msra.mxu0 0.0
    %1942 = vmatprep.subr.mxu0 0.0
    %1943 = vmatpush1.msra.mxu0 0.0
    %1944 = vmatprep.subr.mxu0 0.0
    %1945 = vmatpush1.msra.mxu0 0.0
    %1946 = vmatprep.subr.mxu0 0.0
    %1947 = vmatpush1.msra.mxu0 0.0
    %1948 = vmatprep.mubr.f32.mxu0 0.0
    %1949 = vmatmul.mubr.f32.gmra.mrb[0].mxu0 %v1570
    %v1950 = vpop.f32.mrb[0].mxu0
    %v1951 = vadd.f32 %v1809, %v1950
    %v1952 = vpop.f32.mrb[0].mxu0
    %v1953 = vadd.f32 %v1811, %v1952
    %1954 = vdwg.mxu0
    %1955 = vmatprep.subr.mxu0 %v206
    %1956 = vmatpush1.msra.mxu0 %v205
    %1957 = vmatprep.subr.mxu0 %v210
    %1958 = vmatpush1.msra.mxu0 %v209
    %1959 = vmatprep.subr.mxu0 %v214
    %1960 = vmatpush1.msra.mxu0 %v213
    %1961 = vmatprep.subr.mxu0 %v218
    %1962 = vmatpush1.msra.mxu0 %v217
    %1963 = vmatprep.subr.mxu0 %v222
    %1964 = vmatpush1.msra.mxu0 %v221
    %1965 = vmatprep.subr.mxu0 %v226
    %1966 = vmatpush1.msra.mxu0 %v225
    %1967 = vmatprep.subr.mxu0 %v230
    %1968 = vmatpush1.msra.mxu0 %v229
    %1969 = vmatprep.subr.mxu0 %v234
    %1970 = vmatpush1.msra.mxu0 %v233
    %1971 = vmatprep.subr.mxu0 %v238
    %1972 = vmatpush1.msra.mxu0 %v237
    %1973 = vmatprep.subr.mxu0 %v242
    %1974 = vmatpush1.msra.mxu0 %v241
    %1975 = vmatprep.subr.mxu0 %v246
    %1976 = vmatpush1.msra.mxu0 %v245
    %1977 = vmatprep.subr.mxu0 %v250
    %1978 = vmatpush1.msra.mxu0 %v249
    %1979 = vmatprep.subr.mxu0 %v254
    %1980 = vmatpush1.msra.mxu0 %v253
    %1981 = vmatprep.subr.mxu0 %v258
    %1982 = vmatpush1.msra.mxu0 %v257
    %1983 = vmatprep.subr.mxu0 %v262
    %1984 = vmatpush1.msra.mxu0 %v261
    %1985 = vmatprep.subr.mxu0 %v266
    %1986 = vmatpush1.msra.mxu0 %v265
    %1987 = vmatprep.subr.mxu0 0.0
    %1988 = vmatpush1.msra.mxu0 0.0
    %1989 = vmatprep.subr.mxu0 0.0
    %1990 = vmatpush1.msra.mxu0 0.0
    %1991 = vmatprep.subr.mxu0 0.0
    %1992 = vmatpush1.msra.mxu0 0.0
    %1993 = vmatprep.subr.mxu0 0.0
    %1994 = vmatpush1.msra.mxu0 0.0
    %1995 = vmatprep.subr.mxu0 0.0
    %1996 = vmatpush1.msra.mxu0 0.0
    %1997 = vmatprep.subr.mxu0 0.0
    %1998 = vmatpush1.msra.mxu0 0.0
    %1999 = vmatprep.subr.mxu0 0.0
    %2000 = vmatpush1.msra.mxu0 0.0
    %2001 = vmatprep.subr.mxu0 0.0
    %2002 = vmatpush1.msra.mxu0 0.0
    %2003 = vmatprep.subr.mxu0 0.0
    %2004 = vmatpush1.msra.mxu0 0.0
    %2005 = vmatprep.subr.mxu0 0.0
    %2006 = vmatpush1.msra.mxu0 0.0
    %2007 = vmatprep.subr.mxu0 0.0
    %2008 = vmatpush1.msra.mxu0 0.0
    %2009 = vmatprep.subr.mxu0 0.0
    %2010 = vmatpush1.msra.mxu0 0.0
    %2011 = vmatprep.subr.mxu0 0.0
    %2012 = vmatpush1.msra.mxu0 0.0
    %2013 = vmatprep.subr.mxu0 0.0
    %2014 = vmatpush1.msra.mxu0 0.0
    %2015 = vmatprep.subr.mxu0 0.0
    %2016 = vmatpush1.msra.mxu0 0.0
    %2017 = vmatprep.subr.mxu0 0.0
    %2018 = vmatpush1.msra.mxu0 0.0
    %2019 = vmatprep.mubr.f32.mxu0 0.0
    %2020 = vmatmul.mubr.f32.gmra.mrb[0].mxu0 %v1570
    %v2021 = vpop.f32.mrb[0].mxu0
    %v2022 = vadd.f32 %v1880, %v2021
    %v2023 = vpop.f32.mrb[0].mxu0
    %v2024 = vadd.f32 %v1882, %v2023
    %2025 = vdwg.mxu0
    %v2026 = vadd.f32 %v1951, %v600
    %v2027 = vadd.f32 %v1953, %v604
    %v2028 = vadd.f32 %v2022, %v608
    %v2029 = vadd.f32 %v2024, %v612
    %v2030 = vmul.f32 %v2026, 0.5
    %v2031 = vtanh.pop %v2030
    %v2032 = vmul.f32 %v2031, 0.5
    %v2033 = vadd.f32 %v2032, 0.5
    %v2034 = vmul.f32 %v2027, 0.5
    %v2035 = vtanh.pop %v2034
    %v2036 = vmul.f32 %v2035, 0.5
    %v2037 = vadd.f32 %v2036, 0.5
    %v2038 = vtanh.pop %v2028
    %v2039 = vmul.f32 %v2029, 0.5
    %v2040 = vtanh.pop %v2039
    %v2041 = vmul.f32 %v2040, 0.5
    %v2042 = vadd.f32 %v2041, 0.5
    %v2043 = vmul.f32 %v2037, %v1568
    %v2044 = vmul.f32 %v2033, %v2038
    %v2045 = vadd.f32 %v2043, %v2044
    %v2046 = vtanh.pop %v2045
    %v2047 = vmul.f32 %v2042, %v2046
    %s2048 = smul.u32 3, 4
    %s2049 = smul.addr %s2048, 8
    %s2050 = scalar_lea.vmem [#allocation2], %s2049
    %v2051 = vld [vmem:[%s2050] sm:$0xff]
    %v2052 = vld [vmem:[%s2050 + $0x8] sm:$0xff]
    %v2053 = vld [vmem:[%s2050 + $0x10] sm:$0xff]
    %v2054 = vld [vmem:[%s2050 + $0x18] sm:$0xff]
    %2055 = vmatprep.subr.mxu0 %v76
    %2056 = vmatpush1.msra.mxu0 %v75
    %2057 = vmatprep.subr.mxu0 %v80
    %2058 = vmatpush1.msra.mxu0 %v79
    %2059 = vmatprep.subr.mxu0 %v84
    %2060 = vmatpush1.msra.mxu0 %v83
    %2061 = vmatprep.subr.mxu0 %v88
    %2062 = vmatpush1.msra.mxu0 %v87
    %2063 = vmatprep.subr.mxu0 %v92
    %2064 = vmatpush1.msra.mxu0 %v91
    %2065 = vmatprep.subr.mxu0 %v96
    %2066 = vmatpush1.msra.mxu0 %v95
    %2067 = vmatprep.subr.mxu0 %v100
    %2068 = vmatpush1.msra.mxu0 %v99
    %2069 = vmatprep.subr.mxu0 %v104
    %2070 = vmatpush1.msra.mxu0 %v103
    %2071 = vmatprep.subr.mxu0 %v108
    %2072 = vmatpush1.msra.mxu0 %v107
    %2073 = vmatprep.subr.mxu0 %v112
    %2074 = vmatpush1.msra.mxu0 %v111
    %2075 = vmatprep.subr.mxu0 %v116
    %2076 = vmatpush1.msra.mxu0 %v115
    %2077 = vmatprep.subr.mxu0 %v120
    %2078 = vmatpush1.msra.mxu0 %v119
    %2079 = vmatprep.subr.mxu0 %v124
    %2080 = vmatpush1.msra.mxu0 %v123
    %2081 = vmatprep.subr.mxu0 %v128
    %2082 = vmatpush1.msra.mxu0 %v127
    %2083 = vmatprep.subr.mxu0 %v132
    %2084 = vmatpush1.msra.mxu0 %v131
    %2085 = vmatprep.subr.mxu0 %v136
    %2086 = vmatpush1.msra.mxu0 %v135
    %2087 = vmatprep.subr.mxu0 0.0
    %2088 = vmatpush1.msra.mxu0 0.0
    %2089 = vmatprep.subr.mxu0 0.0
    %2090 = vmatpush1.msra.mxu0 0.0
    %2091 = vmatprep.subr.mxu0 0.0
    %2092 = vmatpush1.msra.mxu0 0.0
    %2093 = vmatprep.subr.mxu0 0.0
    %2094 = vmatpush1.msra.mxu0 0.0
    %2095 = vmatprep.subr.mxu0 0.0
    %2096 = vmatpush1.msra.mxu0 0.0
    %2097 = vmatprep.subr.mxu0 0.0
    %2098 = vmatpush1.msra.mxu0 0.0
    %2099 = vmatprep.subr.mxu0 0.0
    %2100 = vmatpush1.msra.mxu0 0.0
    %2101 = vmatprep.subr.mxu0 0.0
    %2102 = vmatpush1.msra.mxu0 0.0
    %2103 = vmatprep.subr.mxu0 0.0
    %2104 = vmatpush1.msra.mxu0 0.0
    %2105 = vmatprep.subr.mxu0 0.0
    %2106 = vmatpush1.msra.mxu0 0.0
    %2107 = vmatprep.subr.mxu0 0.0
    %2108 = vmatpush1.msra.mxu0 0.0
    %2109 = vmatprep.subr.mxu0 0.0
    %2110 = vmatpush1.msra.mxu0 0.0
    %2111 = vmatprep.subr.mxu0 0.0
    %2112 = vmatpush1.msra.mxu0 0.0
    %2113 = vmatprep.subr.mxu0 0.0
    %2114 = vmatpush1.msra.mxu0 0.0
    %2115 = vmatprep.subr.mxu0 0.0
    %2116 = vmatpush1.msra.mxu0 0.0
    %2117 = vmatprep.subr.mxu0 0.0
    %2118 = vmatpush1.msra.mxu0 0.0
    %2119 = vmatprep.mubr.f32.mxu0 0.0
    %2120 = vmatmul.mubr.f32.gmra.mrb[0].mxu0 %v1741
    %v2121 = vpop.f32.mrb[0].mxu0
    %v2122 = vadd.f32 0.0, %v2121
    %v2123 = vpop.f32.mrb[0].mxu0
    %v2124 = vadd.f32 0.0, %v2123
    %2125 = vdwg.mxu0
    %2126 = vmatprep.subr.mxu0 %v78
    %2127 = vmatpush1.msra.mxu0 %v77
    %2128 = vmatprep.subr.mxu0 %v82
    %2129 = vmatpush1.msra.mxu0 %v81
    %2130 = vmatprep.subr.mxu0 %v86
    %2131 = vmatpush1.msra.mxu0 %v85
    %2132 = vmatprep.subr.mxu0 %v90
    %2133 = vmatpush1.msra.mxu0 %v89
    %2134 = vmatprep.subr.mxu0 %v94
    %2135 = vmatpush1.msra.mxu0 %v93
    %2136 = vmatprep.subr.mxu0 %v98
    %2137 = vmatpush1.msra.mxu0 %v97
    %2138 = vmatprep.subr.mxu0 %v102
    %2139 = vmatpush1.msra.mxu0 %v101
    %2140 = vmatprep.subr.mxu0 %v106
    %2141 = vmatpush1.msra.mxu0 %v105
    %2142 = vmatprep.subr.mxu0 %v110
    %2143 = vmatpush1.msra.mxu0 %v109
    %2144 = vmatprep.subr.mxu0 %v114
    %2145 = vmatpush1.msra.mxu0 %v113
    %2146 = vmatprep.subr.mxu0 %v118
    %2147 = vmatpush1.msra.mxu0 %v117
    %2148 = vmatprep.subr.mxu0 %v122
    %2149 = vmatpush1.msra.mxu0 %v121
    %2150 = vmatprep.subr.mxu0 %v126
    %2151 = vmatpush1.msra.mxu0 %v125
    %2152 = vmatprep.subr.mxu0 %v130
    %2153 = vmatpush1.msra.mxu0 %v129
    %2154 = vmatprep.subr.mxu0 %v134
    %2155 = vmatpush1.msra.mxu0 %v133
    %2156 = vmatprep.subr.mxu0 %v138
    %2157 = vmatpush1.msra.mxu0 %v137
    %2158 = vmatprep.subr.mxu0 0.0
    %2159 = vmatpush1.msra.mxu0 0.0
    %2160 = vmatprep.subr.mxu0 0.0
    %2161 = vmatpush1.msra.mxu0 0.0
    %2162 = vmatprep.subr.mxu0 0.0
    %2163 = vmatpush1.msra.mxu0 0.0
    %2164 = vmatprep.subr.mxu0 0.0
    %2165 = vmatpush1.msra.mxu0 0.0
    %2166 = vmatprep.subr.mxu0 0.0
    %2167 = vmatpush1.msra.mxu0 0.0
    %2168 = vmatprep.subr.mxu0 0.0
    %2169 = vmatpush1.msra.mxu0 0.0
    %2170 = vmatprep.subr.mxu0 0.0
    %2171 = vmatpush1.msra.mxu0 0.0
    %2172 = vmatprep.subr.mxu0 0.0
    %2173 = vmatpush1.msra.mxu0 0.0
    %2174 = vmatprep.subr.mxu0 0.0
    %2175 = vmatpush1.msra.mxu0 0.0
    %2176 = vmatprep.subr.mxu0 0.0
    %2177 = vmatpush1.msra.mxu0 0.0
    %2178 = vmatprep.subr.mxu0 0.0
    %2179 = vmatpush1.msra.mxu0 0.0
    %2180 = vmatprep.subr.mxu0 0.0
    %2181 = vmatpush1.msra.mxu0 0.0
    %2182 = vmatprep.subr.mxu0 0.0
    %2183 = vmatpush1.msra.mxu0 0.0
    %2184 = vmatprep.subr.mxu0 0.0
    %2185 = vmatpush1.msra.mxu0 0.0
    %2186 = vmatprep.subr.mxu0 0.0
    %2187 = vmatpush1.msra.mxu0 0.0
    %2188 = vmatprep.subr.mxu0 0.0
    %2189 = vmatpush1.msra.mxu0 0.0
    %2190 = vmatprep.mubr.f32.mxu0 0.0
    %2191 = vmatmul.mubr.f32.gmra.mrb[0].mxu0 %v1741
    %v2192 = vpop.f32.mrb[0].mxu0
    %v2193 = vadd.f32 0.0, %v2192
    %v2194 = vpop.f32.mrb[0].mxu0
    %v2195 = vadd.f32 0.0, %v2194
    %2196 = vdwg.mxu0
    %v2197 = vadd.f32 %v2051, %v2122
    %v2198 = vadd.f32 %v2052, %v2124
    %v2199 = vadd.f32 %v2053, %v2193
    %v2200 = vadd.f32 %v2054, %v2195
    %v2201 = vmul.f32 %v2197, 0.5
    %v2202 = vtanh.pop %v2201
    %v2203 = vmul.f32 %v2202, 0.5
    %v2204 = vadd.f32 %v2203, 0.5
    %v2205 = vmul.f32 %v2198, 0.5
    %v2206 = vtanh.pop %v2205
    %v2207 = vmul.f32 %v2206, 0.5
    %v2208 = vadd.f32 %v2207, 0.5
    %v2209 = vtanh.pop %v2199
    %v2210 = vmul.f32 %v2200, 0.5
    %v2211 = vtanh.pop %v2210
    %v2212 = vmul.f32 %v2211, 0.5
    %v2213 = vadd.f32 %v2212, 0.5
    %v2214 = vmul.f32 %v2208, %v1739
    %v2215 = vmul.f32 %v2204, %v2209
    %v2216 = vadd.f32 %v2214, %v2215
    %v2217 = vtanh.pop %v2216
    %v2218 = vmul.f32 %v2213, %v2217
    %2219 = vmatprep.subr.mxu0 %v140
    %2220 = vmatpush1.msra.mxu0 %v139
    %2221 = vmatprep.subr.mxu0 %v144
    %2222 = vmatpush1.msra.mxu0 %v143
    %2223 = vmatprep.subr.mxu0 %v148
    %2224 = vmatpush1.msra.mxu0 %v147
    %2225 = vmatprep.subr.mxu0 %v152
    %2226 = vmatpush1.msra.mxu0 %v151
    %2227 = vmatprep.subr.mxu0 %v156
    %2228 = vmatpush1.msra.mxu0 %v155
    %2229 = vmatprep.subr.mxu0 %v160
    %2230 = vmatpush1.msra.mxu0 %v159
    %2231 = vmatprep.subr.mxu0 %v164
    %2232 = vmatpush1.msra.mxu0 %v163
    %2233 = vmatprep.subr.mxu0 %v168
    %2234 = vmatpush1.msra.mxu0 %v167
    %2235 = vmatprep.subr.mxu0 %v172
    %2236 = vmatpush1.msra.mxu0 %v171
    %2237 = vmatprep.subr.mxu0 %v176
    %2238 = vmatpush1.msra.mxu0 %v175
    %2239 = vmatprep.subr.mxu0 %v180
    %2240 = vmatpush1.msra.mxu0 %v179
    %2241 = vmatprep.subr.mxu0 %v184
    %2242 = vmatpush1.msra.mxu0 %v183
    %2243 = vmatprep.subr.mxu0 %v188
    %2244 = vmatpush1.msra.mxu0 %v187
    %2245 = vmatprep.subr.mxu0 %v192
    %2246 = vmatpush1.msra.mxu0 %v191
    %2247 = vmatprep.subr.mxu0 %v196
    %2248 = vmatpush1.msra.mxu0 %v195
    %2249 = vmatprep.subr.mxu0 %v200
    %2250 = vmatpush1.msra.mxu0 %v199
    %2251 = vmatprep.subr.mxu0 0.0
    %2252 = vmatpush1.msra.mxu0 0.0
    %2253 = vmatprep.subr.mxu0 0.0
    %2254 = vmatpush1.msra.mxu0 0.0
    %2255 = vmatprep.subr.mxu0 0.0
    %2256 = vmatpush1.msra.mxu0 0.0
    %2257 = vmatprep.subr.mxu0 0.0
    %2258 = vmatpush1.msra.mxu0 0.0
    %2259 = vmatprep.subr.mxu0 0.0
    %2260 = vmatpush1.msra.mxu0 0.0
    %2261 = vmatprep.subr.mxu0 0.0
    %2262 = vmatpush1.msra.mxu0 0.0
    %2263 = vmatprep.subr.mxu0 0.0
    %2264 = vmatpush1.msra.mxu0 0.0
    %2265 = vmatprep.subr.mxu0 0.0
    %2266 = vmatpush1.msra.mxu0 0.0
    %2267 = vmatprep.subr.mxu0 0.0
    %2268 = vmatpush1.msra.mxu0 0.0
    %2269 = vmatprep.subr.mxu0 0.0
    %2270 = vmatpush1.msra.mxu0 0.0
    %2271 = vmatprep.subr.mxu0 0.0
    %2272 = vmatpush1.msra.mxu0 0.0
    %2273 = vmatprep.subr.mxu0 0.0
    %2274 = vmatpush1.msra.mxu0 0.0
    %2275 = vmatprep.subr.mxu0 0.0
    %2276 = vmatpush1.msra.mxu0 0.0
    %2277 = vmatprep.subr.mxu0 0.0
    %2278 = vmatpush1.msra.mxu0 0.0
    %2279 = vmatprep.subr.mxu0 0.0
    %2280 = vmatpush1.msra.mxu0 0.0
    %2281 = vmatprep.subr.mxu0 0.0
    %2282 = vmatpush1.msra.mxu0 0.0
    %2283 = vmatprep.mubr.f32.mxu0 0.0
    %2284 = vmatmul.mubr.f32.gmra.mrb[0].mxu0 %v2218
    %v2285 = vpop.f32.mrb[0].mxu0
    %v2286 = vadd.f32 0.0, %v2285
    %v2287 = vpop.f32.mrb[0].mxu0
    %v2288 = vadd.f32 0.0, %v2287
    %2289 = vdwg.mxu0
    %2290 = vmatprep.subr.mxu0 %v142
    %2291 = vmatpush1.msra.mxu0 %v141
    %2292 = vmatprep.subr.mxu0 %v146
    %2293 = vmatpush1.msra.mxu0 %v145
    %2294 = vmatprep.subr.mxu0 %v150
    %2295 = vmatpush1.msra.mxu0 %v149
    %2296 = vmatprep.subr.mxu0 %v154
    %2297 = vmatpush1.msra.mxu0 %v153
    %2298 = vmatprep.subr.mxu0 %v158
    %2299 = vmatpush1.msra.mxu0 %v157
    %2300 = vmatprep.subr.mxu0 %v162
    %2301 = vmatpush1.msra.mxu0 %v161
    %2302 = vmatprep.subr.mxu0 %v166
    %2303 = vmatpush1.msra.mxu0 %v165
    %2304 = vmatprep.subr.mxu0 %v170
    %2305 = vmatpush1.msra.mxu0 %v169
    %2306 = vmatprep.subr.mxu0 %v174
    %2307 = vmatpush1.msra.mxu0 %v173
    %2308 = vmatprep.subr.mxu0 %v178
    %2309 = vmatpush1.msra.mxu0 %v177
    %2310 = vmatprep.subr.mxu0 %v182
    %2311 = vmatpush1.msra.mxu0 %v181
    %2312 = vmatprep.subr.mxu0 %v186
    %2313 = vmatpush1.msra.mxu0 %v185
    %2314 = vmatprep.subr.mxu0 %v190
    %2315 = vmatpush1.msra.mxu0 %v189
    %2316 = vmatprep.subr.mxu0 %v194
    %2317 = vmatpush1.msra.mxu0 %v193
    %2318 = vmatprep.subr.mxu0 %v198
    %2319 = vmatpush1.msra.mxu0 %v197
    %2320 = vmatprep.subr.mxu0 %v202
    %2321 = vmatpush1.msra.mxu0 %v201
    %2322 = vmatprep.subr.mxu0 0.0
    %2323 = vmatpush1.msra.mxu0 0.0
    %2324 = vmatprep.subr.mxu0 0.0
    %2325 = vmatpush1.msra.mxu0 0.0
    %2326 = vmatprep.subr.mxu0 0.0
    %2327 = vmatpush1.msra.mxu0 0.0
    %2328 = vmatprep.subr.mxu0 0.0
    %2329 = vmatpush1.msra.mxu0 0.0
    %2330 = vmatprep.subr.mxu0 0.0
    %2331 = vmatpush1.msra.mxu0 0.0
    %2332 = vmatprep.subr.mxu0 0.0
    %2333 = vmatpush1.msra.mxu0 0.0
    %2334 = vmatprep.subr.mxu0 0.0
    %2335 = vmatpush1.msra.mxu0 0.0
    %2336 = vmatprep.subr.mxu0 0.0
    %2337 = vmatpush1.msra.mxu0 0.0
    %2338 = vmatprep.subr.mxu0 0.0
    %2339 = vmatpush1.msra.mxu0 0.0
    %2340 = vmatprep.subr.mxu0 0.0
    %2341 = vmatpush1.msra.mxu0 0.0
    %2342 = vmatprep.subr.mxu0 0.0
    %2343 = vmatpush1.msra.mxu0 0.0
    %2344 = vmatprep.subr.mxu0 0.0
    %2345 = vmatpush1.msra.mxu0 0.0
    %2346 = vmatprep.subr.mxu0 0.0
    %2347 = vmatpush1.msra.mxu0 0.0
    %2348 = vmatprep.subr.mxu0 0.0
    %2349 = vmatpush1.msra.mxu0 0.0
    %2350 = vmatprep.subr.mxu0 0.0
    %2351 = vmatpush1.msra.mxu0 0.0
    %2352 = vmatprep.subr.mxu0 0.0
    %2353 = vmatpush1.msra.mxu0 0.0
    %2354 = vmatprep.mubr.f32.mxu0 0.0
    %2355 = vmatmul.mubr.f32.gmra.mrb[0].mxu0 %v2218
    %v2356 = vpop.f32.mrb[0].mxu0
    %v2357 = vadd.f32 0.0, %v2356
    %v2358 = vpop.f32.mrb[0].mxu0
    %v2359 = vadd.f32 0.0, %v2358
    %2360 = vdwg.mxu0
    %2361 = vmatprep.subr.mxu0 %v204
    %2362 = vmatpush1.msra.mxu0 %v203
    %2363 = vmatprep.subr.mxu0 %v208
    %2364 = vmatpush1.msra.mxu0 %v207
    %2365 = vmatprep.subr.mxu0 %v212
    %2366 = vmatpush1.msra.mxu0 %v211
    %2367 = vmatprep.subr.mxu0 %v216
    %2368 = vmatpush1.msra.mxu0 %v215
    %2369 = vmatprep.subr.mxu0 %v220
    %2370 = vmatpush1.msra.mxu0 %v219
    %2371 = vmatprep.subr.mxu0 %v224
    %2372 = vmatpush1.msra.mxu0 %v223
    %2373 = vmatprep.subr.mxu0 %v228
    %2374 = vmatpush1.msra.mxu0 %v227
    %2375 = vmatprep.subr.mxu0 %v232
    %2376 = vmatpush1.msra.mxu0 %v231
    %2377 = vmatprep.subr.mxu0 %v236
    %2378 = vmatpush1.msra.mxu0 %v235
    %2379 = vmatprep.subr.mxu0 %v240
    %2380 = vmatpush1.msra.mxu0 %v239
    %2381 = vmatprep.subr.mxu0 %v244
    %2382 = vmatpush1.msra.mxu0 %v243
    %2383 = vmatprep.subr.mxu0 %v248
    %2384 = vmatpush1.msra.mxu0 %v247
    %2385 = vmatprep.subr.mxu0 %v252
    %2386 = vmatpush1.msra.mxu0 %v251
    %2387 = vmatprep.subr.mxu0 %v256
    %2388 = vmatpush1.msra.mxu0 %v255
    %2389 = vmatprep.subr.mxu0 %v260
    %2390 = vmatpush1.msra.mxu0 %v259
    %2391 = vmatprep.subr.mxu0 %v264
    %2392 = vmatpush1.msra.mxu0 %v263
    %2393 = vmatprep.subr.mxu0 0.0
    %2394 = vmatpush1.msra.mxu0 0.0
    %2395 = vmatprep.subr.mxu0 0.0
    %2396 = vmatpush1.msra.mxu0 0.0
    %2397 = vmatprep.subr.mxu0 0.0
    %2398 = vmatpush1.msra.mxu0 0.0
    %2399 = vmatprep.subr.mxu0 0.0
    %2400 = vmatpush1.msra.mxu0 0.0
    %2401 = vmatprep.subr.mxu0 0.0
    %2402 = vmatpush1.msra.mxu0 0.0
    %2403 = vmatprep.subr.mxu0 0.0
    %2404 = vmatpush1.msra.mxu0 0.0
    %2405 = vmatprep.subr.mxu0 0.0
    %2406 = vmatpush1.msra.mxu0 0.0
    %2407 = vmatprep.subr.mxu0 0.0
    %2408 = vmatpush1.msra.mxu0 0.0
    %2409 = vmatprep.subr.mxu0 0.0
    %2410 = vmatpush1.msra.mxu0 0.0
    %2411 = vmatprep.subr.mxu0 0.0
    %2412 = vmatpush1.msra.mxu0 0.0
    %2413 = vmatprep.subr.mxu0 0.0
    %2414 = vmatpush1.msra.mxu0 0.0
    %2415 = vmatprep.subr.mxu0 0.0
    %2416 = vmatpush1.msra.mxu0 0.0
    %2417 = vmatprep.subr.mxu0 0.0
    %2418 = vmatpush1.msra.mxu0 0.0
    %2419 = vmatprep.subr.mxu0 0.0
    %2420 = vmatpush1.msra.mxu0 0.0
    %2421 = vmatprep.subr.mxu0 0.0
    %2422 = vmatpush1.msra.mxu0 0.0
    %2423 = vmatprep.subr.mxu0 0.0
    %2424 = vmatpush1.msra.mxu0 0.0
    %2425 = vmatprep.mubr.f32.mxu0 0.0
    %2426 = vmatmul.mubr.f32.gmra.mrb[0].mxu0 %v2047
    %v2427 = vpop.f32.mrb[0].mxu0
    %v2428 = vadd.f32 %v2286, %v2427
    %v2429 = vpop.f32.mrb[0].mxu0
    %v2430 = vadd.f32 %v2288, %v2429
    %2431 = vdwg.mxu0
    %2432 = vmatprep.subr.mxu0 %v206
    %2433 = vmatpush1.msra.mxu0 %v205
    %2434 = vmatprep.subr.mxu0 %v210
    %2435 = vmatpush1.msra.mxu0 %v209
    %2436 = vmatprep.subr.mxu0 %v214
    %2437 = vmatpush1.msra.mxu0 %v213
    %2438 = vmatprep.subr.mxu0 %v218
    %2439 = vmatpush1.msra.mxu0 %v217
    %2440 = vmatprep.subr.mxu0 %v222
    %2441 = vmatpush1.msra.mxu0 %v221
    %2442 = vmatprep.subr.mxu0 %v226
    %2443 = vmatpush1.msra.mxu0 %v225
    %2444 = vmatprep.subr.mxu0 %v230
    %2445 = vmatpush1.msra.mxu0 %v229
    %2446 = vmatprep.subr.mxu0 %v234
    %2447 = vmatpush1.msra.mxu0 %v233
    %2448 = vmatprep.subr.mxu0 %v238
    %2449 = vmatpush1.msra.mxu0 %v237
    %2450 = vmatprep.subr.mxu0 %v242
    %2451 = vmatpush1.msra.mxu0 %v241
    %2452 = vmatprep.subr.mxu0 %v246
    %2453 = vmatpush1.msra.mxu0 %v245
    %2454 = vmatprep.subr.mxu0 %v250
    %2455 = vmatpush1.msra.mxu0 %v249
    %2456 = vmatprep.subr.mxu0 %v254
    %2457 = vmatpush1.msra.mxu0 %v253
    %2458 = vmatprep.subr.mxu0 %v258
    %2459 = vmatpush1.msra.mxu0 %v257
    %2460 = vmatprep.subr.mxu0 %v262
    %2461 = vmatpush1.msra.mxu0 %v261
    %2462 = vmatprep.subr.mxu0 %v266
    %2463 = vmatpush1.msra.mxu0 %v265
    %2464 = vmatprep.subr.mxu0 0.0
    %2465 = vmatpush1.msra.mxu0 0.0
    %2466 = vmatprep.subr.mxu0 0.0
    %2467 = vmatpush1.msra.mxu0 0.0
    %2468 = vmatprep.subr.mxu0 0.0
    %2469 = vmatpush1.msra.mxu0 0.0
    %2470 = vmatprep.subr.mxu0 0.0
    %2471 = vmatpush1.msra.mxu0 0.0
    %2472 = vmatprep.subr.mxu0 0.0
    %2473 = vmatpush1.msra.mxu0 0.0
    %2474 = vmatprep.subr.mxu0 0.0
    %2475 = vmatpush1.msra.mxu0 0.0
    %2476 = vmatprep.subr.mxu0 0.0
    %2477 = vmatpush1.msra.mxu0 0.0
    %2478 = vmatprep.subr.mxu0 0.0
    %2479 = vmatpush1.msra.mxu0 0.0
    %2480 = vmatprep.subr.mxu0 0.0
    %2481 = vmatpush1.msra.mxu0 0.0
    %2482 = vmatprep.subr.mxu0 0.0
    %2483 = vmatpush1.msra.mxu0 0.0
    %2484 = vmatprep.subr.mxu0 0.0
    %2485 = vmatpush1.msra.mxu0 0.0
    %2486 = vmatprep.subr.mxu0 0.0
    %2487 = vmatpush1.msra.mxu0 0.0
    %2488 = vmatprep.subr.mxu0 0.0
    %2489 = vmatpush1.msra.mxu0 0.0
    %2490 = vmatprep.subr.mxu0 0.0
    %2491 = vmatpush1.msra.mxu0 0.0
    %2492 = vmatprep.subr.mxu0 0.0
    %2493 = vmatpush1.msra.mxu0 0.0
    %2494 = vmatprep.subr.mxu0 0.0
    %2495 = vmatpush1.msra.mxu0 0.0
    %2496 = vmatprep.mubr.f32.mxu0 0.0
    %2497 = vmatmul.mubr.f32.gmra.mrb[0].mxu0 %v2047
    %v2498 = vpop.f32.mrb[0].mxu0
    %v2499 = vadd.f32 %v2357, %v2498
    %v2500 = vpop.f32.mrb[0].mxu0
    %v2501 = vadd.f32 %v2359, %v2500
    %2502 = vdwg.mxu0
    %v2503 = vadd.f32 %v2428, %v600
    %v2504 = vadd.f32 %v2430, %v604
    %v2505 = vadd.f32 %v2499, %v608
    %v2506 = vadd.f32 %v2501, %v612
    %v2507 = vmul.f32 %v2503, 0.5
    %v2508 = vtanh.pop %v2507
    %v2509 = vmul.f32 %v2508, 0.5
    %v2510 = vadd.f32 %v2509, 0.5
    %v2511 = vmul.f32 %v2504, 0.5
    %v2512 = vtanh.pop %v2511
    %v2513 = vmul.f32 %v2512, 0.5
    %v2514 = vadd.f32 %v2513, 0.5
    %v2515 = vtanh.pop %v2505
    %v2516 = vmul.f32 %v2506, 0.5
    %v2517 = vtanh.pop %v2516
    %v2518 = vmul.f32 %v2517, 0.5
    %v2519 = vadd.f32 %v2518, 0.5
    %v2520 = vmul.f32 %v2514, %v2045
    %v2521 = vmul.f32 %v2510, %v2515
    %v2522 = vadd.f32 %v2520, %v2521
    %v2523 = vtanh.pop %v2522
    %v2524 = vmul.f32 %v2519, %v2523
    %s2525 = smul.u32 4, 4
    %s2526 = smul.addr %s2525, 8
    %s2527 = scalar_lea.vmem [#allocation2], %s2526
    %v2528 = vld [vmem:[%s2527] sm:$0xff]
    %v2529 = vld [vmem:[%s2527 + $0x8] sm:$0xff]
    %v2530 = vld [vmem:[%s2527 + $0x10] sm:$0xff]
    %v2531 = vld [vmem:[%s2527 + $0x18] sm:$0xff]
    %2532 = vmatprep.subr.mxu0 %v76
    %2533 = vmatpush1.msra.mxu0 %v75
    %2534 = vmatprep.subr.mxu0 %v80
    %2535 = vmatpush1.msra.mxu0 %v79
    %2536 = vmatprep.subr.mxu0 %v84
    %2537 = vmatpush1.msra.mxu0 %v83
    %2538 = vmatprep.subr.mxu0 %v88
    %2539 = vmatpush1.msra.mxu0 %v87
    %2540 = vmatprep.subr.mxu0 %v92
    %2541 = vmatpush1.msra.mxu0 %v91
    %2542 = vmatprep.subr.mxu0 %v96
    %2543 = vmatpush1.msra.mxu0 %v95
    %2544 = vmatprep.subr.mxu0 %v100
    %2545 = vmatpush1.msra.mxu0 %v99
    %2546 = vmatprep.subr.mxu0 %v104
    %2547 = vmatpush1.msra.mxu0 %v103
    %2548 = vmatprep.subr.mxu0 %v108
    %2549 = vmatpush1.msra.mxu0 %v107
    %2550 = vmatprep.subr.mxu0 %v112
    %2551 = vmatpush1.msra.mxu0 %v111
    %2552 = vmatprep.subr.mxu0 %v116
    %2553 = vmatpush1.msra.mxu0 %v115
    %2554 = vmatprep.subr.mxu0 %v120
    %2555 = vmatpush1.msra.mxu0 %v119
    %2556 = vmatprep.subr.mxu0 %v124
    %2557 = vmatpush1.msra.mxu0 %v123
    %2558 = vmatprep.subr.mxu0 %v128
    %2559 = vmatpush1.msra.mxu0 %v127
    %2560 = vmatprep.subr.mxu0 %v132
    %2561 = vmatpush1.msra.mxu0 %v131
    %2562 = vmatprep.subr.mxu0 %v136
    %2563 = vmatpush1.msra.mxu0 %v135
    %2564 = vmatprep.subr.mxu0 0.0
    %2565 = vmatpush1.msra.mxu0 0.0
    %2566 = vmatprep.subr.mxu0 0.0
    %2567 = vmatpush1.msra.mxu0 0.0
    %2568 = vmatprep.subr.mxu0 0.0
    %2569 = vmatpush1.msra.mxu0 0.0
    %2570 = vmatprep.subr.mxu0 0.0
    %2571 = vmatpush1.msra.mxu0 0.0
    %2572 = vmatprep.subr.mxu0 0.0
    %2573 = vmatpush1.msra.mxu0 0.0
    %2574 = vmatprep.subr.mxu0 0.0
    %2575 = vmatpush1.msra.mxu0 0.0
    %2576 = vmatprep.subr.mxu0 0.0
    %2577 = vmatpush1.msra.mxu0 0.0
    %2578 = vmatprep.subr.mxu0 0.0
    %2579 = vmatpush1.msra.mxu0 0.0
    %2580 = vmatprep.subr.mxu0 0.0
    %2581 = vmatpush1.msra.mxu0 0.0
    %2582 = vmatprep.subr.mxu0 0.0
    %2583 = vmatpush1.msra.mxu0 0.0
    %2584 = vmatprep.subr.mxu0 0.0
    %2585 = vmatpush1.msra.mxu0 0.0
    %2586 = vmatprep.subr.mxu0 0.0
    %2587 = vmatpush1.msra.mxu0 0.0
    %2588 = vmatprep.subr.mxu0 0.0
    %2589 = vmatpush1.msra.mxu0 0.0
    %2590 = vmatprep.subr.mxu0 0.0
    %2591 = vmatpush1.msra.mxu0 0.0
    %2592 = vmatprep.subr.mxu0 0.0
    %2593 = vmatpush1.msra.mxu0 0.0
    %2594 = vmatprep.subr.mxu0 0.0
    %2595 = vmatpush1.msra.mxu0 0.0
    %2596 = vmatprep.mubr.f32.mxu0 0.0
    %2597 = vmatmul.mubr.f32.gmra.mrb[0].mxu0 %v2218
    %v2598 = vpop.f32.mrb[0].mxu0
    %v2599 = vadd.f32 0.0, %v2598
    %v2600 = vpop.f32.mrb[0].mxu0
    %v2601 = vadd.f32 0.0, %v2600
    %2602 = vdwg.mxu0
    %2603 = vmatprep.subr.mxu0 %v78
    %2604 = vmatpush1.msra.mxu0 %v77
    %2605 = vmatprep.subr.mxu0 %v82
    %2606 = vmatpush1.msra.mxu0 %v81
    %2607 = vmatprep.subr.mxu0 %v86
    %2608 = vmatpush1.msra.mxu0 %v85
    %2609 = vmatprep.subr.mxu0 %v90
    %2610 = vmatpush1.msra.mxu0 %v89
    %2611 = vmatprep.subr.mxu0 %v94
    %2612 = vmatpush1.msra.mxu0 %v93
    %2613 = vmatprep.subr.mxu0 %v98
    %2614 = vmatpush1.msra.mxu0 %v97
    %2615 = vmatprep.subr.mxu0 %v102
    %2616 = vmatpush1.msra.mxu0 %v101
    %2617 = vmatprep.subr.mxu0 %v106
    %2618 = vmatpush1.msra.mxu0 %v105
    %2619 = vmatprep.subr.mxu0 %v110
    %2620 = vmatpush1.msra.mxu0 %v109
    %2621 = vmatprep.subr.mxu0 %v114
    %2622 = vmatpush1.msra.mxu0 %v113
    %2623 = vmatprep.subr.mxu0 %v118
    %2624 = vmatpush1.msra.mxu0 %v117
    %2625 = vmatprep.subr.mxu0 %v122
    %2626 = vmatpush1.msra.mxu0 %v121
    %2627 = vmatprep.subr.mxu0 %v126
    %2628 = vmatpush1.msra.mxu0 %v125
    %2629 = vmatprep.subr.mxu0 %v130
    %2630 = vmatpush1.msra.mxu0 %v129
    %2631 = vmatprep.subr.mxu0 %v134
    %2632 = vmatpush1.msra.mxu0 %v133
    %2633 = vmatprep.subr.mxu0 %v138
    %2634 = vmatpush1.msra.mxu0 %v137
    %2635 = vmatprep.subr.mxu0 0.0
    %2636 = vmatpush1.msra.mxu0 0.0
    %2637 = vmatprep.subr.mxu0 0.0
    %2638 = vmatpush1.msra.mxu0 0.0
    %2639 = vmatprep.subr.mxu0 0.0
    %2640 = vmatpush1.msra.mxu0 0.0
    %2641 = vmatprep.subr.mxu0 0.0
    %2642 = vmatpush1.msra.mxu0 0.0
    %2643 = vmatprep.subr.mxu0 0.0
    %2644 = vmatpush1.msra.mxu0 0.0
    %2645 = vmatprep.subr.mxu0 0.0
    %2646 = vmatpush1.msra.mxu0 0.0
    %2647 = vmatprep.subr.mxu0 0.0
    %2648 = vmatpush1.msra.mxu0 0.0
    %2649 = vmatprep.subr.mxu0 0.0
    %2650 = vmatpush1.msra.mxu0 0.0
    %2651 = vmatprep.subr.mxu0 0.0
    %2652 = vmatpush1.msra.mxu0 0.0
    %2653 = vmatprep.subr.mxu0 0.0
    %2654 = vmatpush1.msra.mxu0 0.0
    %2655 = vmatprep.subr.mxu0 0.0
    %2656 = vmatpush1.msra.mxu0 0.0
    %2657 = vmatprep.subr.mxu0 0.0
    %2658 = vmatpush1.msra.mxu0 0.0
    %2659 = vmatprep.subr.mxu0 0.0
    %2660 = vmatpush1.msra.mxu0 0.0
    %2661 = vmatprep.subr.mxu0 0.0
    %2662 = vmatpush1.msra.mxu0 0.0
    %2663 = vmatprep.subr.mxu0 0.0
    %2664 = vmatpush1.msra.mxu0 0.0
    %2665 = vmatprep.subr.mxu0 0.0
    %2666 = vmatpush1.msra.mxu0 0.0
    %2667 = vmatprep.mubr.f32.mxu0 0.0
    %2668 = vmatmul.mubr.f32.gmra.mrb[0].mxu0 %v2218
    %v2669 = vpop.f32.mrb[0].mxu0
    %v2670 = vadd.f32 0.0, %v2669
    %v2671 = vpop.f32.mrb[0].mxu0
    %v2672 = vadd.f32 0.0, %v2671
    %2673 = vdwg.mxu0
    %v2674 = vadd.f32 %v2528, %v2599
    %v2675 = vadd.f32 %v2529, %v2601
    %v2676 = vadd.f32 %v2530, %v2670
    %v2677 = vadd.f32 %v2531, %v2672
    %v2678 = vmul.f32 %v2674, 0.5
    %v2679 = vtanh.pop %v2678
    %v2680 = vmul.f32 %v2679, 0.5
    %v2681 = vadd.f32 %v2680, 0.5
    %v2682 = vmul.f32 %v2675, 0.5
    %v2683 = vtanh.pop %v2682
    %v2684 = vmul.f32 %v2683, 0.5
    %v2685 = vadd.f32 %v2684, 0.5
    %v2686 = vtanh.pop %v2676
    %v2687 = vmul.f32 %v2677, 0.5
    %v2688 = vtanh.pop %v2687
    %v2689 = vmul.f32 %v2688, 0.5
    %v2690 = vadd.f32 %v2689, 0.5
    %v2691 = vmul.f32 %v2685, %v2216
    %v2692 = vmul.f32 %v2681, %v2686
    %v2693 = vadd.f32 %v2691, %v2692
    %v2694 = vtanh.pop %v2693
    %v2695 = vmul.f32 %v2690, %v2694
    %2696 = vmatprep.subr.mxu0 %v140
    %2697 = vmatpush1.msra.mxu0 %v139
    %2698 = vmatprep.subr.mxu0 %v144
    %2699 = vmatpush1.msra.mxu0 %v143
    %2700 = vmatprep.subr.mxu0 %v148
    %2701 = vmatpush1.msra.mxu0 %v147
    %2702 = vmatprep.subr.mxu0 %v152
    %2703 = vmatpush1.msra.mxu0 %v151
    %2704 = vmatprep.subr.mxu0 %v156
    %2705 = vmatpush1.msra.mxu0 %v155
    %2706 = vmatprep.subr.mxu0 %v160
    %2707 = vmatpush1.msra.mxu0 %v159
    %2708 = vmatprep.subr.mxu0 %v164
    %2709 = vmatpush1.msra.mxu0 %v163
    %2710 = vmatprep.subr.mxu0 %v168
    %2711 = vmatpush1.msra.mxu0 %v167
    %2712 = vmatprep.subr.mxu0 %v172
    %2713 = vmatpush1.msra.mxu0 %v171
    %2714 = vmatprep.subr.mxu0 %v176
    %2715 = vmatpush1.msra.mxu0 %v175
    %2716 = vmatprep.subr.mxu0 %v180
    %2717 = vmatpush1.msra.mxu0 %v179
    %2718 = vmatprep.subr.mxu0 %v184
    %2719 = vmatpush1.msra.mxu0 %v183
    %2720 = vmatprep.subr.mxu0 %v188
    %2721 = vmatpush1.msra.mxu0 %v187
    %2722 = vmatprep.subr.mxu0 %v192
    %2723 = vmatpush1.msra.mxu0 %v191
    %2724 = vmatprep.subr.mxu0 %v196
    %2725 = vmatpush1.msra.mxu0 %v195
    %2726 = vmatprep.subr.mxu0 %v200
    %2727 = vmatpush1.msra.mxu0 %v199
    %2728 = vmatprep.subr.mxu0 0.0
    %2729 = vmatpush1.msra.mxu0 0.0
    %2730 = vmatprep.subr.mxu0 0.0
    %2731 = vmatpush1.msra.mxu0 0.0
    %2732 = vmatprep.subr.mxu0 0.0
    %2733 = vmatpush1.msra.mxu0 0.0
    %2734 = vmatprep.subr.mxu0 0.0
    %2735 = vmatpush1.msra.mxu0 0.0
    %2736 = vmatprep.subr.mxu0 0.0
    %2737 = vmatpush1.msra.mxu0 0.0
    %2738 = vmatprep.subr.mxu0 0.0
    %2739 = vmatpush1.msra.mxu0 0.0
    %2740 = vmatprep.subr.mxu0 0.0
    %2741 = vmatpush1.msra.mxu0 0.0
    %2742 = vmatprep.subr.mxu0 0.0
    %2743 = vmatpush1.msra.mxu0 0.0
    %2744 = vmatprep.subr.mxu0 0.0
    %2745 = vmatpush1.msra.mxu0 0.0
    %2746 = vmatprep.subr.mxu0 0.0
    %2747 = vmatpush1.msra.mxu0 0.0
    %2748 = vmatprep.subr.mxu0 0.0
    %2749 = vmatpush1.msra.mxu0 0.0
    %2750 = vmatprep.subr.mxu0 0.0
    %2751 = vmatpush1.msra.mxu0 0.0
    %2752 = vmatprep.subr.mxu0 0.0
    %2753 = vmatpush1.msra.mxu0 0.0
    %2754 = vmatprep.subr.mxu0 0.0
    %2755 = vmatpush1.msra.mxu0 0.0
    %2756 = vmatprep.subr.mxu0 0.0
    %2757 = vmatpush1.msra.mxu0 0.0
    %2758 = vmatprep.subr.mxu0 0.0
    %2759 = vmatpush1.msra.mxu0 0.0
    %2760 = vmatprep.mubr.f32.mxu0 0.0
    %2761 = vmatmul.mubr.f32.gmra.mrb[0].mxu0 %v2695
    %v2762 = vpop.f32.mrb[0].mxu0
    %v2763 = vadd.f32 0.0, %v2762
    %v2764 = vpop.f32.mrb[0].mxu0
    %v2765 = vadd.f32 0.0, %v2764
    %2766 = vdwg.mxu0
    %2767 = vmatprep.subr.mxu0 %v142
    %2768 = vmatpush1.msra.mxu0 %v141
    %2769 = vmatprep.subr.mxu0 %v146
    %2770 = vmatpush1.msra.mxu0 %v145
    %2771 = vmatprep.subr.mxu0 %v150
    %2772 = vmatpush1.msra.mxu0 %v149
    %2773 = vmatprep.subr.mxu0 %v154
    %2774 = vmatpush1.msra.mxu0 %v153
    %2775 = vmatprep.subr.mxu0 %v158
    %2776 = vmatpush1.msra.mxu0 %v157
    %2777 = vmatprep.subr.mxu0 %v162
    %2778 = vmatpush1.msra.mxu0 %v161
    %2779 = vmatprep.subr.mxu0 %v166
    %2780 = vmatpush1.msra.mxu0 %v165
    %2781 = vmatprep.subr.mxu0 %v170
    %2782 = vmatpush1.msra.mxu0 %v169
    %2783 = vmatprep.subr.mxu0 %v174
    %2784 = vmatpush1.msra.mxu0 %v173
    %2785 = vmatprep.subr.mxu0 %v178
    %2786 = vmatpush1.msra.mxu0 %v177
    %2787 = vmatprep.subr.mxu0 %v182
    %2788 = vmatpush1.msra.mxu0 %v181
    %2789 = vmatprep.subr.mxu0 %v186
    %2790 = vmatpush1.msra.mxu0 %v185
    %2791 = vmatprep.subr.mxu0 %v190
    %2792 = vmatpush1.msra.mxu0 %v189
    %2793 = vmatprep.subr.mxu0 %v194
    %2794 = vmatpush1.msra.mxu0 %v193
    %2795 = vmatprep.subr.mxu0 %v198
    %2796 = vmatpush1.msra.mxu0 %v197
    %2797 = vmatprep.subr.mxu0 %v202
    %2798 = vmatpush1.msra.mxu0 %v201
    %2799 = vmatprep.subr.mxu0 0.0
    %2800 = vmatpush1.msra.mxu0 0.0
    %2801 = vmatprep.subr.mxu0 0.0
    %2802 = vmatpush1.msra.mxu0 0.0
    %2803 = vmatprep.subr.mxu0 0.0
    %2804 = vmatpush1.msra.mxu0 0.0
    %2805 = vmatprep.subr.mxu0 0.0
    %2806 = vmatpush1.msra.mxu0 0.0
    %2807 = vmatprep.subr.mxu0 0.0
    %2808 = vmatpush1.msra.mxu0 0.0
    %2809 = vmatprep.subr.mxu0 0.0
    %2810 = vmatpush1.msra.mxu0 0.0
    %2811 = vmatprep.subr.mxu0 0.0
    %2812 = vmatpush1.msra.mxu0 0.0
    %2813 = vmatprep.subr.mxu0 0.0
    %2814 = vmatpush1.msra.mxu0 0.0
    %2815 = vmatprep.subr.mxu0 0.0
    %2816 = vmatpush1.msra.mxu0 0.0
    %2817 = vmatprep.subr.mxu0 0.0
    %2818 = vmatpush1.msra.mxu0 0.0
    %2819 = vmatprep.subr.mxu0 0.0
    %2820 = vmatpush1.msra.mxu0 0.0
    %2821 = vmatprep.subr.mxu0 0.0
    %2822 = vmatpush1.msra.mxu0 0.0
    %2823 = vmatprep.subr.mxu0 0.0
    %2824 = vmatpush1.msra.mxu0 0.0
    %2825 = vmatprep.subr.mxu0 0.0
    %2826 = vmatpush1.msra.mxu0 0.0
    %2827 = vmatprep.subr.mxu0 0.0
    %2828 = vmatpush1.msra.mxu0 0.0
    %2829 = vmatprep.subr.mxu0 0.0
    %2830 = vmatpush1.msra.mxu0 0.0
    %2831 = vmatprep.mubr.f32.mxu0 0.0
    %2832 = vmatmul.mubr.f32.gmra.mrb[0].mxu0 %v2695
    %v2833 = vpop.f32.mrb[0].mxu0
    %v2834 = vadd.f32 0.0, %v2833
    %v2835 = vpop.f32.mrb[0].mxu0
    %v2836 = vadd.f32 0.0, %v2835
    %2837 = vdwg.mxu0
    %2838 = vmatprep.subr.mxu0 %v204
    %2839 = vmatpush1.msra.mxu0 %v203
    %2840 = vmatprep.subr.mxu0 %v208
    %2841 = vmatpush1.msra.mxu0 %v207
    %2842 = vmatprep.subr.mxu0 %v212
    %2843 = vmatpush1.msra.mxu0 %v211
    %2844 = vmatprep.subr.mxu0 %v216
    %2845 = vmatpush1.msra.mxu0 %v215
    %2846 = vmatprep.subr.mxu0 %v220
    %2847 = vmatpush1.msra.mxu0 %v219
    %2848 = vmatprep.subr.mxu0 %v224
    %2849 = vmatpush1.msra.mxu0 %v223
    %2850 = vmatprep.subr.mxu0 %v228
    %2851 = vmatpush1.msra.mxu0 %v227
    %2852 = vmatprep.subr.mxu0 %v232
    %2853 = vmatpush1.msra.mxu0 %v231
    %2854 = vmatprep.subr.mxu0 %v236
    %2855 = vmatpush1.msra.mxu0 %v235
    %2856 = vmatprep.subr.mxu0 %v240
    %2857 = vmatpush1.msra.mxu0 %v239
    %2858 = vmatprep.subr.mxu0 %v244
    %2859 = vmatpush1.msra.mxu0 %v243
    %2860 = vmatprep.subr.mxu0 %v248
    %2861 = vmatpush1.msra.mxu0 %v247
    %2862 = vmatprep.subr.mxu0 %v252
    %2863 = vmatpush1.msra.mxu0 %v251
    %2864 = vmatprep.subr.mxu0 %v256
    %2865 = vmatpush1.msra.mxu0 %v255
    %2866 = vmatprep.subr.mxu0 %v260
    %2867 = vmatpush1.msra.mxu0 %v259
    %2868 = vmatprep.subr.mxu0 %v264
    %2869 = vmatpush1.msra.mxu0 %v263
    %2870 = vmatprep.subr.mxu0 0.0
    %2871 = vmatpush1.msra.mxu0 0.0
    %2872 = vmatprep.subr.mxu0 0.0
    %2873 = vmatpush1.msra.mxu0 0.0
    %2874 = vmatprep.subr.mxu0 0.0
    %2875 = vmatpush1.msra.mxu0 0.0
    %2876 = vmatprep.subr.mxu0 0.0
    %2877 = vmatpush1.msra.mxu0 0.0
    %2878 = vmatprep.subr.mxu0 0.0
    %2879 = vmatpush1.msra.mxu0 0.0
    %2880 = vmatprep.subr.mxu0 0.0
    %2881 = vmatpush1.msra.mxu0 0.0
    %2882 = vmatprep.subr.mxu0 0.0
    %2883 = vmatpush1.msra.mxu0 0.0
    %2884 = vmatprep.subr.mxu0 0.0
    %2885 = vmatpush1.msra.mxu0 0.0
    %2886 = vmatprep.subr.mxu0 0.0
    %2887 = vmatpush1.msra.mxu0 0.0
    %2888 = vmatprep.subr.mxu0 0.0
    %2889 = vmatpush1.msra.mxu0 0.0
    %2890 = vmatprep.subr.mxu0 0.0
    %2891 = vmatpush1.msra.mxu0 0.0
    %2892 = vmatprep.subr.mxu0 0.0
    %2893 = vmatpush1.msra.mxu0 0.0
    %2894 = vmatprep.subr.mxu0 0.0
    %2895 = vmatpush1.msra.mxu0 0.0
    %2896 = vmatprep.subr.mxu0 0.0
    %2897 = vmatpush1.msra.mxu0 0.0
    %2898 = vmatprep.subr.mxu0 0.0
    %2899 = vmatpush1.msra.mxu0 0.0
    %2900 = vmatprep.subr.mxu0 0.0
    %2901 = vmatpush1.msra.mxu0 0.0
    %2902 = vmatprep.mubr.f32.mxu0 0.0
    %2903 = vmatmul.mubr.f32.gmra.mrb[0].mxu0 %v2524
    %v2904 = vpop.f32.mrb[0].mxu0
    %v2905 = vadd.f32 %v2763, %v2904
    %v2906 = vpop.f32.mrb[0].mxu0
    %v2907 = vadd.f32 %v2765, %v2906
    %2908 = vdwg.mxu0
    %2909 = vmatprep.subr.mxu0 %v206
    %2910 = vmatpush1.msra.mxu0 %v205
    %2911 = vmatprep.subr.mxu0 %v210
    %2912 = vmatpush1.msra.mxu0 %v209
    %2913 = vmatprep.subr.mxu0 %v214
    %2914 = vmatpush1.msra.mxu0 %v213
    %2915 = vmatprep.subr.mxu0 %v218
    %2916 = vmatpush1.msra.mxu0 %v217
    %2917 = vmatprep.subr.mxu0 %v222
    %2918 = vmatpush1.msra.mxu0 %v221
    %2919 = vmatprep.subr.mxu0 %v226
    %2920 = vmatpush1.msra.mxu0 %v225
    %2921 = vmatprep.subr.mxu0 %v230
    %2922 = vmatpush1.msra.mxu0 %v229
    %2923 = vmatprep.subr.mxu0 %v234
    %2924 = vmatpush1.msra.mxu0 %v233
    %2925 = vmatprep.subr.mxu0 %v238
    %2926 = vmatpush1.msra.mxu0 %v237
    %2927 = vmatprep.subr.mxu0 %v242
    %2928 = vmatpush1.msra.mxu0 %v241
    %2929 = vmatprep.subr.mxu0 %v246
    %2930 = vmatpush1.msra.mxu0 %v245
    %2931 = vmatprep.subr.mxu0 %v250
    %2932 = vmatpush1.msra.mxu0 %v249
    %2933 = vmatprep.subr.mxu0 %v254
    %2934 = vmatpush1.msra.mxu0 %v253
    %2935 = vmatprep.subr.mxu0 %v258
    %2936 = vmatpush1.msra.mxu0 %v257
    %2937 = vmatprep.subr.mxu0 %v262
    %2938 = vmatpush1.msra.mxu0 %v261
    %2939 = vmatprep.subr.mxu0 %v266
    %2940 = vmatpush1.msra.mxu0 %v265
    %2941 = vmatprep.subr.mxu0 0.0
    %2942 = vmatpush1.msra.mxu0 0.0
    %2943 = vmatprep.subr.mxu0 0.0
    %2944 = vmatpush1.msra.mxu0 0.0
    %2945 = vmatprep.subr.mxu0 0.0
    %2946 = vmatpush1.msra.mxu0 0.0
    %2947 = vmatprep.subr.mxu0 0.0
    %2948 = vmatpush1.msra.mxu0 0.0
    %2949 = vmatprep.subr.mxu0 0.0
    %2950 = vmatpush1.msra.mxu0 0.0
    %2951 = vmatprep.subr.mxu0 0.0
    %2952 = vmatpush1.msra.mxu0 0.0
    %2953 = vmatprep.subr.mxu0 0.0
    %2954 = vmatpush1.msra.mxu0 0.0
    %2955 = vmatprep.subr.mxu0 0.0
    %2956 = vmatpush1.msra.mxu0 0.0
    %2957 = vmatprep.subr.mxu0 0.0
    %2958 = vmatpush1.msra.mxu0 0.0
    %2959 = vmatprep.subr.mxu0 0.0
    %2960 = vmatpush1.msra.mxu0 0.0
    %2961 = vmatprep.subr.mxu0 0.0
    %2962 = vmatpush1.msra.mxu0 0.0
    %2963 = vmatprep.subr.mxu0 0.0
    %2964 = vmatpush1.msra.mxu0 0.0
    %2965 = vmatprep.subr.mxu0 0.0
    %2966 = vmatpush1.msra.mxu0 0.0
    %2967 = vmatprep.subr.mxu0 0.0
    %2968 = vmatpush1.msra.mxu0 0.0
    %2969 = vmatprep.subr.mxu0 0.0
    %2970 = vmatpush1.msra.mxu0 0.0
    %2971 = vmatprep.subr.mxu0 0.0
    %2972 = vmatpush1.msra.mxu0 0.0
    %2973 = vmatprep.mubr.f32.mxu0 0.0
    %2974 = vmatmul.mubr.f32.gmra.mrb[0].mxu0 %v2524
    %v2975 = vpop.f32.mrb[0].mxu0
    %v2976 = vadd.f32 %v2834, %v2975
    %v2977 = vpop.f32.mrb[0].mxu0
    %v2978 = vadd.f32 %v2836, %v2977
    %2979 = vdwg.mxu0
    %v2980 = vadd.f32 %v2905, %v600
    %v2981 = vadd.f32 %v2907, %v604
    %v2982 = vadd.f32 %v2976, %v608
    %v2983 = vadd.f32 %v2978, %v612
    %v2984 = vmul.f32 %v2980, 0.5
    %v2985 = vtanh.pop %v2984
    %v2986 = vmul.f32 %v2985, 0.5
    %v2987 = vadd.f32 %v2986, 0.5
    %v2988 = vmul.f32 %v2981, 0.5
    %v2989 = vtanh.pop %v2988
    %v2990 = vmul.f32 %v2989, 0.5
    %v2991 = vadd.f32 %v2990, 0.5
    %v2992 = vtanh.pop %v2982
    %v2993 = vmul.f32 %v2983, 0.5
    %v2994 = vtanh.pop %v2993
    %v2995 = vmul.f32 %v2994, 0.5
    %v2996 = vadd.f32 %v2995, 0.5
    %v2997 = vmul.f32 %v2991, %v2522
    %v2998 = vmul.f32 %v2987, %v2992
    %v2999 = vadd.f32 %v2997, %v2998
    %v3000 = vtanh.pop %v2999
    %v3001 = vmul.f32 %v2996, %v3000
    %s3002 = smul.u32 5, 4
    %s3003 = smul.addr %s3002, 8
    %s3004 = scalar_lea.vmem [#allocation2], %s3003
    %v3005 = vld [vmem:[%s3004] sm:$0xff]
    %v3006 = vld [vmem:[%s3004 + $0x8] sm:$0xff]
    %v3007 = vld [vmem:[%s3004 + $0x10] sm:$0xff]
    %v3008 = vld [vmem:[%s3004 + $0x18] sm:$0xff]
    %3009 = vmatprep.subr.mxu0 %v76
    %3010 = vmatpush1.msra.mxu0 %v75
    %3011 = vmatprep.subr.mxu0 %v80
    %3012 = vmatpush1.msra.mxu0 %v79
    %3013 = vmatprep.subr.mxu0 %v84
    %3014 = vmatpush1.msra.mxu0 %v83
    %3015 = vmatprep.subr.mxu0 %v88
    %3016 = vmatpush1.msra.mxu0 %v87
    %3017 = vmatprep.subr.mxu0 %v92
    %3018 = vmatpush1.msra.mxu0 %v91
    %3019 = vmatprep.subr.mxu0 %v96
    %3020 = vmatpush1.msra.mxu0 %v95
    %3021 = vmatprep.subr.mxu0 %v100
    %3022 = vmatpush1.msra.mxu0 %v99
    %3023 = vmatprep.subr.mxu0 %v104
    %3024 = vmatpush1.msra.mxu0 %v103
    %3025 = vmatprep.subr.mxu0 %v108
    %3026 = vmatpush1.msra.mxu0 %v107
    %3027 = vmatprep.subr.mxu0 %v112
    %3028 = vmatpush1.msra.mxu0 %v111
    %3029 = vmatprep.subr.mxu0 %v116
    %3030 = vmatpush1.msra.mxu0 %v115
    %3031 = vmatprep.subr.mxu0 %v120
    %3032 = vmatpush1.msra.mxu0 %v119
    %3033 = vmatprep.subr.mxu0 %v124
    %3034 = vmatpush1.msra.mxu0 %v123
    %3035 = vmatprep.subr.mxu0 %v128
    %3036 = vmatpush1.msra.mxu0 %v127
    %3037 = vmatprep.subr.mxu0 %v132
    %3038 = vmatpush1.msra.mxu0 %v131
    %3039 = vmatprep.subr.mxu0 %v136
    %3040 = vmatpush1.msra.mxu0 %v135
    %3041 = vmatprep.subr.mxu0 0.0
    %3042 = vmatpush1.msra.mxu0 0.0
    %3043 = vmatprep.subr.mxu0 0.0
    %3044 = vmatpush1.msra.mxu0 0.0
    %3045 = vmatprep.subr.mxu0 0.0
    %3046 = vmatpush1.msra.mxu0 0.0
    %3047 = vmatprep.subr.mxu0 0.0
    %3048 = vmatpush1.msra.mxu0 0.0
    %3049 = vmatprep.subr.mxu0 0.0
    %3050 = vmatpush1.msra.mxu0 0.0
    %3051 = vmatprep.subr.mxu0 0.0
    %3052 = vmatpush1.msra.mxu0 0.0
    %3053 = vmatprep.subr.mxu0 0.0
    %3054 = vmatpush1.msra.mxu0 0.0
    %3055 = vmatprep.subr.mxu0 0.0
    %3056 = vmatpush1.msra.mxu0 0.0
    %3057 = vmatprep.subr.mxu0 0.0
    %3058 = vmatpush1.msra.mxu0 0.0
    %3059 = vmatprep.subr.mxu0 0.0
    %3060 = vmatpush1.msra.mxu0 0.0
    %3061 = vmatprep.subr.mxu0 0.0
    %3062 = vmatpush1.msra.mxu0 0.0
    %3063 = vmatprep.subr.mxu0 0.0
    %3064 = vmatpush1.msra.mxu0 0.0
    %3065 = vmatprep.subr.mxu0 0.0
    %3066 = vmatpush1.msra.mxu0 0.0
    %3067 = vmatprep.subr.mxu0 0.0
    %3068 = vmatpush1.msra.mxu0 0.0
    %3069 = vmatprep.subr.mxu0 0.0
    %3070 = vmatpush1.msra.mxu0 0.0
    %3071 = vmatprep.subr.mxu0 0.0
    %3072 = vmatpush1.msra.mxu0 0.0
    %3073 = vmatprep.mubr.f32.mxu0 0.0
    %3074 = vmatmul.mubr.f32.gmra.mrb[0].mxu0 %v2695
    %v3075 = vpop.f32.mrb[0].mxu0
    %v3076 = vadd.f32 0.0, %v3075
    %v3077 = vpop.f32.mrb[0].mxu0
    %v3078 = vadd.f32 0.0, %v3077
    %3079 = vdwg.mxu0
    %3080 = vmatprep.subr.mxu0 %v78
    %3081 = vmatpush1.msra.mxu0 %v77
    %3082 = vmatprep.subr.mxu0 %v82
    %3083 = vmatpush1.msra.mxu0 %v81
    %3084 = vmatprep.subr.mxu0 %v86
    %3085 = vmatpush1.msra.mxu0 %v85
    %3086 = vmatprep.subr.mxu0 %v90
    %3087 = vmatpush1.msra.mxu0 %v89
    %3088 = vmatprep.subr.mxu0 %v94
    %3089 = vmatpush1.msra.mxu0 %v93
    %3090 = vmatprep.subr.mxu0 %v98
    %3091 = vmatpush1.msra.mxu0 %v97
    %3092 = vmatprep.subr.mxu0 %v102
    %3093 = vmatpush1.msra.mxu0 %v101
    %3094 = vmatprep.subr.mxu0 %v106
    %3095 = vmatpush1.msra.mxu0 %v105
    %3096 = vmatprep.subr.mxu0 %v110
    %3097 = vmatpush1.msra.mxu0 %v109
    %3098 = vmatprep.subr.mxu0 %v114
    %3099 = vmatpush1.msra.mxu0 %v113
    %3100 = vmatprep.subr.mxu0 %v118
    %3101 = vmatpush1.msra.mxu0 %v117
    %3102 = vmatprep.subr.mxu0 %v122
    %3103 = vmatpush1.msra.mxu0 %v121
    %3104 = vmatprep.subr.mxu0 %v126
    %3105 = vmatpush1.msra.mxu0 %v125
    %3106 = vmatprep.subr.mxu0 %v130
    %3107 = vmatpush1.msra.mxu0 %v129
    %3108 = vmatprep.subr.mxu0 %v134
    %3109 = vmatpush1.msra.mxu0 %v133
    %3110 = vmatprep.subr.mxu0 %v138
    %3111 = vmatpush1.msra.mxu0 %v137
    %3112 = vmatprep.subr.mxu0 0.0
    %3113 = vmatpush1.msra.mxu0 0.0
    %3114 = vmatprep.subr.mxu0 0.0
    %3115 = vmatpush1.msra.mxu0 0.0
    %3116 = vmatprep.subr.mxu0 0.0
    %3117 = vmatpush1.msra.mxu0 0.0
    %3118 = vmatprep.subr.mxu0 0.0
    %3119 = vmatpush1.msra.mxu0 0.0
    %3120 = vmatprep.subr.mxu0 0.0
    %3121 = vmatpush1.msra.mxu0 0.0
    %3122 = vmatprep.subr.mxu0 0.0
    %3123 = vmatpush1.msra.mxu0 0.0
    %3124 = vmatprep.subr.mxu0 0.0
    %3125 = vmatpush1.msra.mxu0 0.0
    %3126 = vmatprep.subr.mxu0 0.0
    %3127 = vmatpush1.msra.mxu0 0.0
    %3128 = vmatprep.subr.mxu0 0.0
    %3129 = vmatpush1.msra.mxu0 0.0
    %3130 = vmatprep.subr.mxu0 0.0
    %3131 = vmatpush1.msra.mxu0 0.0
    %3132 = vmatprep.subr.mxu0 0.0
    %3133 = vmatpush1.msra.mxu0 0.0
    %3134 = vmatprep.subr.mxu0 0.0
    %3135 = vmatpush1.msra.mxu0 0.0
    %3136 = vmatprep.subr.mxu0 0.0
    %3137 = vmatpush1.msra.mxu0 0.0
    %3138 = vmatprep.subr.mxu0 0.0
    %3139 = vmatpush1.msra.mxu0 0.0
    %3140 = vmatprep.subr.mxu0 0.0
    %3141 = vmatpush1.msra.mxu0 0.0
    %3142 = vmatprep.subr.mxu0 0.0
    %3143 = vmatpush1.msra.mxu0 0.0
    %3144 = vmatprep.mubr.f32.mxu0 0.0
    %3145 = vmatmul.mubr.f32.gmra.mrb[0].mxu0 %v2695
    %v3146 = vpop.f32.mrb[0].mxu0
    %v3147 = vadd.f32 0.0, %v3146
    %v3148 = vpop.f32.mrb[0].mxu0
    %v3149 = vadd.f32 0.0, %v3148
    %3150 = vdwg.mxu0
    %v3151 = vadd.f32 %v3005, %v3076
    %v3152 = vadd.f32 %v3006, %v3078
    %v3153 = vadd.f32 %v3007, %v3147
    %v3154 = vadd.f32 %v3008, %v3149
    %v3155 = vmul.f32 %v3151, 0.5
    %v3156 = vtanh.pop %v3155
    %v3157 = vmul.f32 %v3156, 0.5
    %v3158 = vadd.f32 %v3157, 0.5
    %v3159 = vmul.f32 %v3152, 0.5
    %v3160 = vtanh.pop %v3159
    %v3161 = vmul.f32 %v3160, 0.5
    %v3162 = vadd.f32 %v3161, 0.5
    %v3163 = vtanh.pop %v3153
    %v3164 = vmul.f32 %v3154, 0.5
    %v3165 = vtanh.pop %v3164
    %v3166 = vmul.f32 %v3165, 0.5
    %v3167 = vadd.f32 %v3166, 0.5
    %v3168 = vmul.f32 %v3162, %v2693
    %v3169 = vmul.f32 %v3158, %v3163
    %v3170 = vadd.f32 %v3168, %v3169
    %v3171 = vtanh.pop %v3170
    %v3172 = vmul.f32 %v3167, %v3171
    %3173 = vmatprep.subr.mxu0 %v140
    %3174 = vmatpush1.msra.mxu0 %v139
    %3175 = vmatprep.subr.mxu0 %v144
    %3176 = vmatpush1.msra.mxu0 %v143
    %3177 = vmatprep.subr.mxu0 %v148
    %3178 = vmatpush1.msra.mxu0 %v147
    %3179 = vmatprep.subr.mxu0 %v152
    %3180 = vmatpush1.msra.mxu0 %v151
    %3181 = vmatprep.subr.mxu0 %v156
    %3182 = vmatpush1.msra.mxu0 %v155
    %3183 = vmatprep.subr.mxu0 %v160
    %3184 = vmatpush1.msra.mxu0 %v159
    %3185 = vmatprep.subr.mxu0 %v164
    %3186 = vmatpush1.msra.mxu0 %v163
    %3187 = vmatprep.subr.mxu0 %v168
    %3188 = vmatpush1.msra.mxu0 %v167
    %3189 = vmatprep.subr.mxu0 %v172
    %3190 = vmatpush1.msra.mxu0 %v171
    %3191 = vmatprep.subr.mxu0 %v176
    %3192 = vmatpush1.msra.mxu0 %v175
    %3193 = vmatprep.subr.mxu0 %v180
    %3194 = vmatpush1.msra.mxu0 %v179
    %3195 = vmatprep.subr.mxu0 %v184
    %3196 = vmatpush1.msra.mxu0 %v183
    %3197 = vmatprep.subr.mxu0 %v188
    %3198 = vmatpush1.msra.mxu0 %v187
    %3199 = vmatprep.subr.mxu0 %v192
    %3200 = vmatpush1.msra.mxu0 %v191
    %3201 = vmatprep.subr.mxu0 %v196
    %3202 = vmatpush1.msra.mxu0 %v195
    %3203 = vmatprep.subr.mxu0 %v200
    %3204 = vmatpush1.msra.mxu0 %v199
    %3205 = vmatprep.subr.mxu0 0.0
    %3206 = vmatpush1.msra.mxu0 0.0
    %3207 = vmatprep.subr.mxu0 0.0
    %3208 = vmatpush1.msra.mxu0 0.0
    %3209 = vmatprep.subr.mxu0 0.0
    %3210 = vmatpush1.msra.mxu0 0.0
    %3211 = vmatprep.subr.mxu0 0.0
    %3212 = vmatpush1.msra.mxu0 0.0
    %3213 = vmatprep.subr.mxu0 0.0
    %3214 = vmatpush1.msra.mxu0 0.0
    %3215 = vmatprep.subr.mxu0 0.0
    %3216 = vmatpush1.msra.mxu0 0.0
    %3217 = vmatprep.subr.mxu0 0.0
    %3218 = vmatpush1.msra.mxu0 0.0
    %3219 = vmatprep.subr.mxu0 0.0
    %3220 = vmatpush1.msra.mxu0 0.0
    %3221 = vmatprep.subr.mxu0 0.0
    %3222 = vmatpush1.msra.mxu0 0.0
    %3223 = vmatprep.subr.mxu0 0.0
    %3224 = vmatpush1.msra.mxu0 0.0
    %3225 = vmatprep.subr.mxu0 0.0
    %3226 = vmatpush1.msra.mxu0 0.0
    %3227 = vmatprep.subr.mxu0 0.0
    %3228 = vmatpush1.msra.mxu0 0.0
    %3229 = vmatprep.subr.mxu0 0.0
    %3230 = vmatpush1.msra.mxu0 0.0
    %3231 = vmatprep.subr.mxu0 0.0
    %3232 = vmatpush1.msra.mxu0 0.0
    %3233 = vmatprep.subr.mxu0 0.0
    %3234 = vmatpush1.msra.mxu0 0.0
    %3235 = vmatprep.subr.mxu0 0.0
    %3236 = vmatpush1.msra.mxu0 0.0
    %3237 = vmatprep.mubr.f32.mxu0 0.0
    %3238 = vmatmul.mubr.f32.gmra.mrb[0].mxu0 %v3172
    %v3239 = vpop.f32.mrb[0].mxu0
    %v3240 = vadd.f32 0.0, %v3239
    %v3241 = vpop.f32.mrb[0].mxu0
    %v3242 = vadd.f32 0.0, %v3241
    %3243 = vdwg.mxu0
    %3244 = vmatprep.subr.mxu0 %v142
    %3245 = vmatpush1.msra.mxu0 %v141
    %3246 = vmatprep.subr.mxu0 %v146
    %3247 = vmatpush1.msra.mxu0 %v145
    %3248 = vmatprep.subr.mxu0 %v150
    %3249 = vmatpush1.msra.mxu0 %v149
    %3250 = vmatprep.subr.mxu0 %v154
    %3251 = vmatpush1.msra.mxu0 %v153
    %3252 = vmatprep.subr.mxu0 %v158
    %3253 = vmatpush1.msra.mxu0 %v157
    %3254 = vmatprep.subr.mxu0 %v162
    %3255 = vmatpush1.msra.mxu0 %v161
    %3256 = vmatprep.subr.mxu0 %v166
    %3257 = vmatpush1.msra.mxu0 %v165
    %3258 = vmatprep.subr.mxu0 %v170
    %3259 = vmatpush1.msra.mxu0 %v169
    %3260 = vmatprep.subr.mxu0 %v174
    %3261 = vmatpush1.msra.mxu0 %v173
    %3262 = vmatprep.subr.mxu0 %v178
    %3263 = vmatpush1.msra.mxu0 %v177
    %3264 = vmatprep.subr.mxu0 %v182
    %3265 = vmatpush1.msra.mxu0 %v181
    %3266 = vmatprep.subr.mxu0 %v186
    %3267 = vmatpush1.msra.mxu0 %v185
    %3268 = vmatprep.subr.mxu0 %v190
    %3269 = vmatpush1.msra.mxu0 %v189
    %3270 = vmatprep.subr.mxu0 %v194
    %3271 = vmatpush1.msra.mxu0 %v193
    %3272 = vmatprep.subr.mxu0 %v198
    %3273 = vmatpush1.msra.mxu0 %v197
    %3274 = vmatprep.subr.mxu0 %v202
    %3275 = vmatpush1.msra.mxu0 %v201
    %3276 = vmatprep.subr.mxu0 0.0
    %3277 = vmatpush1.msra.mxu0 0.0
    %3278 = vmatprep.subr.mxu0 0.0
    %3279 = vmatpush1.msra.mxu0 0.0
    %3280 = vmatprep.subr.mxu0 0.0
    %3281 = vmatpush1.msra.mxu0 0.0
    %3282 = vmatprep.subr.mxu0 0.0
    %3283 = vmatpush1.msra.mxu0 0.0
    %3284 = vmatprep.subr.mxu0 0.0
    %3285 = vmatpush1.msra.mxu0 0.0
    %3286 = vmatprep.subr.mxu0 0.0
    %3287 = vmatpush1.msra.mxu0 0.0
    %3288 = vmatprep.subr.mxu0 0.0
    %3289 = vmatpush1.msra.mxu0 0.0
    %3290 = vmatprep.subr.mxu0 0.0
    %3291 = vmatpush1.msra.mxu0 0.0
    %3292 = vmatprep.subr.mxu0 0.0
    %3293 = vmatpush1.msra.mxu0 0.0
    %3294 = vmatprep.subr.mxu0 0.0
    %3295 = vmatpush1.msra.mxu0 0.0
    %3296 = vmatprep.subr.mxu0 0.0
    %3297 = vmatpush1.msra.mxu0 0.0
    %3298 = vmatprep.subr.mxu0 0.0
    %3299 = vmatpush1.msra.mxu0 0.0
    %3300 = vmatprep.subr.mxu0 0.0
    %3301 = vmatpush1.msra.mxu0 0.0
    %3302 = vmatprep.subr.mxu0 0.0
    %3303 = vmatpush1.msra.mxu0 0.0
    %3304 = vmatprep.subr.mxu0 0.0
    %3305 = vmatpush1.msra.mxu0 0.0
    %3306 = vmatprep.subr.mxu0 0.0
    %3307 = vmatpush1.msra.mxu0 0.0
    %3308 = vmatprep.mubr.f32.mxu0 0.0
    %3309 = vmatmul.mubr.f32.gmra.mrb[0].mxu0 %v3172
    %v3310 = vpop.f32.mrb[0].mxu0
    %v3311 = vadd.f32 0.0, %v3310
    %v3312 = vpop.f32.mrb[0].mxu0
    %v3313 = vadd.f32 0.0, %v3312
    %3314 = vdwg.mxu0
    %3315 = vmatprep.subr.mxu0 %v204
    %3316 = vmatpush1.msra.mxu0 %v203
    %3317 = vmatprep.subr.mxu0 %v208
    %3318 = vmatpush1.msra.mxu0 %v207
    %3319 = vmatprep.subr.mxu0 %v212
    %3320 = vmatpush1.msra.mxu0 %v211
    %3321 = vmatprep.subr.mxu0 %v216
    %3322 = vmatpush1.msra.mxu0 %v215
    %3323 = vmatprep.subr.mxu0 %v220
    %3324 = vmatpush1.msra.mxu0 %v219
    %3325 = vmatprep.subr.mxu0 %v224
    %3326 = vmatpush1.msra.mxu0 %v223
    %3327 = vmatprep.subr.mxu0 %v228
    %3328 = vmatpush1.msra.mxu0 %v227
    %3329 = vmatprep.subr.mxu0 %v232
    %3330 = vmatpush1.msra.mxu0 %v231
    %3331 = vmatprep.subr.mxu0 %v236
    %3332 = vmatpush1.msra.mxu0 %v235
    %3333 = vmatprep.subr.mxu0 %v240
    %3334 = vmatpush1.msra.mxu0 %v239
    %3335 = vmatprep.subr.mxu0 %v244
    %3336 = vmatpush1.msra.mxu0 %v243
    %3337 = vmatprep.subr.mxu0 %v248
    %3338 = vmatpush1.msra.mxu0 %v247
    %3339 = vmatprep.subr.mxu0 %v252
    %3340 = vmatpush1.msra.mxu0 %v251
    %3341 = vmatprep.subr.mxu0 %v256
    %3342 = vmatpush1.msra.mxu0 %v255
    %3343 = vmatprep.subr.mxu0 %v260
    %3344 = vmatpush1.msra.mxu0 %v259
    %3345 = vmatprep.subr.mxu0 %v264
    %3346 = vmatpush1.msra.mxu0 %v263
    %3347 = vmatprep.subr.mxu0 0.0
    %3348 = vmatpush1.msra.mxu0 0.0
    %3349 = vmatprep.subr.mxu0 0.0
    %3350 = vmatpush1.msra.mxu0 0.0
    %3351 = vmatprep.subr.mxu0 0.0
    %3352 = vmatpush1.msra.mxu0 0.0
    %3353 = vmatprep.subr.mxu0 0.0
    %3354 = vmatpush1.msra.mxu0 0.0
    %3355 = vmatprep.subr.mxu0 0.0
    %3356 = vmatpush1.msra.mxu0 0.0
    %3357 = vmatprep.subr.mxu0 0.0
    %3358 = vmatpush1.msra.mxu0 0.0
    %3359 = vmatprep.subr.mxu0 0.0
    %3360 = vmatpush1.msra.mxu0 0.0
    %3361 = vmatprep.subr.mxu0 0.0
    %3362 = vmatpush1.msra.mxu0 0.0
    %3363 = vmatprep.subr.mxu0 0.0
    %3364 = vmatpush1.msra.mxu0 0.0
    %3365 = vmatprep.subr.mxu0 0.0
    %3366 = vmatpush1.msra.mxu0 0.0
    %3367 = vmatprep.subr.mxu0 0.0
    %3368 = vmatpush1.msra.mxu0 0.0
    %3369 = vmatprep.subr.mxu0 0.0
    %3370 = vmatpush1.msra.mxu0 0.0
    %3371 = vmatprep.subr.mxu0 0.0
    %3372 = vmatpush1.msra.mxu0 0.0
    %3373 = vmatprep.subr.mxu0 0.0
    %3374 = vmatpush1.msra.mxu0 0.0
    %3375 = vmatprep.subr.mxu0 0.0
    %3376 = vmatpush1.msra.mxu0 0.0
    %3377 = vmatprep.subr.mxu0 0.0
    %3378 = vmatpush1.msra.mxu0 0.0
    %3379 = vmatprep.mubr.f32.mxu0 0.0
    %3380 = vmatmul.mubr.f32.gmra.mrb[0].mxu0 %v3001
    %v3381 = vpop.f32.mrb[0].mxu0
    %v3382 = vadd.f32 %v3240, %v3381
    %v3383 = vpop.f32.mrb[0].mxu0
    %v3384 = vadd.f32 %v3242, %v3383
    %3385 = vdwg.mxu0
    %3386 = vmatprep.subr.mxu0 %v206
    %3387 = vmatpush1.msra.mxu0 %v205
    %3388 = vmatprep.subr.mxu0 %v210
    %3389 = vmatpush1.msra.mxu0 %v209
    %3390 = vmatprep.subr.mxu0 %v214
    %3391 = vmatpush1.msra.mxu0 %v213
    %3392 = vmatprep.subr.mxu0 %v218
    %3393 = vmatpush1.msra.mxu0 %v217
    %3394 = vmatprep.subr.mxu0 %v222
    %3395 = vmatpush1.msra.mxu0 %v221
    %3396 = vmatprep.subr.mxu0 %v226
    %3397 = vmatpush1.msra.mxu0 %v225
    %3398 = vmatprep.subr.mxu0 %v230
    %3399 = vmatpush1.msra.mxu0 %v229
    %3400 = vmatprep.subr.mxu0 %v234
    %3401 = vmatpush1.msra.mxu0 %v233
    %3402 = vmatprep.subr.mxu0 %v238
    %3403 = vmatpush1.msra.mxu0 %v237
    %3404 = vmatprep.subr.mxu0 %v242
    %3405 = vmatpush1.msra.mxu0 %v241
    %3406 = vmatprep.subr.mxu0 %v246
    %3407 = vmatpush1.msra.mxu0 %v245
    %3408 = vmatprep.subr.mxu0 %v250
    %3409 = vmatpush1.msra.mxu0 %v249
    %3410 = vmatprep.subr.mxu0 %v254
    %3411 = vmatpush1.msra.mxu0 %v253
    %3412 = vmatprep.subr.mxu0 %v258
    %3413 = vmatpush1.msra.mxu0 %v257
    %3414 = vmatprep.subr.mxu0 %v262
    %3415 = vmatpush1.msra.mxu0 %v261
    %3416 = vmatprep.subr.mxu0 %v266
    %3417 = vmatpush1.msra.mxu0 %v265
    %3418 = vmatprep.subr.mxu0 0.0
    %3419 = vmatpush1.msra.mxu0 0.0
    %3420 = vmatprep.subr.mxu0 0.0
    %3421 = vmatpush1.msra.mxu0 0.0
    %3422 = vmatprep.subr.mxu0 0.0
    %3423 = vmatpush1.msra.mxu0 0.0
    %3424 = vmatprep.subr.mxu0 0.0
    %3425 = vmatpush1.msra.mxu0 0.0
    %3426 = vmatprep.subr.mxu0 0.0
    %3427 = vmatpush1.msra.mxu0 0.0
    %3428 = vmatprep.subr.mxu0 0.0
    %3429 = vmatpush1.msra.mxu0 0.0
    %3430 = vmatprep.subr.mxu0 0.0
    %3431 = vmatpush1.msra.mxu0 0.0
    %3432 = vmatprep.subr.mxu0 0.0
    %3433 = vmatpush1.msra.mxu0 0.0
    %3434 = vmatprep.subr.mxu0 0.0
    %3435 = vmatpush1.msra.mxu0 0.0
    %3436 = vmatprep.subr.mxu0 0.0
    %3437 = vmatpush1.msra.mxu0 0.0
    %3438 = vmatprep.subr.mxu0 0.0
    %3439 = vmatpush1.msra.mxu0 0.0
    %3440 = vmatprep.subr.mxu0 0.0
    %3441 = vmatpush1.msra.mxu0 0.0
    %3442 = vmatprep.subr.mxu0 0.0
    %3443 = vmatpush1.msra.mxu0 0.0
    %3444 = vmatprep.subr.mxu0 0.0
    %3445 = vmatpush1.msra.mxu0 0.0
    %3446 = vmatprep.subr.mxu0 0.0
    %3447 = vmatpush1.msra.mxu0 0.0
    %3448 = vmatprep.subr.mxu0 0.0
    %3449 = vmatpush1.msra.mxu0 0.0
    %3450 = vmatprep.mubr.f32.mxu0 0.0
    %3451 = vmatmul.mubr.f32.gmra.mrb[0].mxu0 %v3001
    %v3452 = vpop.f32.mrb[0].mxu0
    %v3453 = vadd.f32 %v3311, %v3452
    %v3454 = vpop.f32.mrb[0].mxu0
    %v3455 = vadd.f32 %v3313, %v3454
    %3456 = vdwg.mxu0
    %v3457 = vadd.f32 %v3382, %v600
    %v3458 = vadd.f32 %v3384, %v604
    %v3459 = vadd.f32 %v3453, %v608
    %v3460 = vadd.f32 %v3455, %v612
    %v3461 = vmul.f32 %v3457, 0.5
    %v3462 = vtanh.pop %v3461
    %v3463 = vmul.f32 %v3462, 0.5
    %v3464 = vadd.f32 %v3463, 0.5
    %v3465 = vmul.f32 %v3458, 0.5
    %v3466 = vtanh.pop %v3465
    %v3467 = vmul.f32 %v3466, 0.5
    %v3468 = vadd.f32 %v3467, 0.5
    %v3469 = vtanh.pop %v3459
    %v3470 = vmul.f32 %v3460, 0.5
    %v3471 = vtanh.pop %v3470
    %v3472 = vmul.f32 %v3471, 0.5
    %v3473 = vadd.f32 %v3472, 0.5
    %v3474 = vmul.f32 %v3468, %v2999
    %v3475 = vmul.f32 %v3464, %v3469
    %v3476 = vadd.f32 %v3474, %v3475
    %v3477 = vtanh.pop %v3476
    %v3478 = vmul.f32 %v3473, %v3477
    %s3479 = smul.u32 6, 4
    %s3480 = smul.addr %s3479, 8
    %s3481 = scalar_lea.vmem [#allocation2], %s3480
    %v3482 = vld [vmem:[%s3481] sm:$0xff]
    %v3483 = vld [vmem:[%s3481 + $0x8] sm:$0xff]
    %v3484 = vld [vmem:[%s3481 + $0x10] sm:$0xff]
    %v3485 = vld [vmem:[%s3481 + $0x18] sm:$0xff]
    %3486 = vmatprep.subr.mxu0 %v76
    %3487 = vmatpush1.msra.mxu0 %v75
    %3488 = vmatprep.subr.mxu0 %v80
    %3489 = vmatpush1.msra.mxu0 %v79
    %3490 = vmatprep.subr.mxu0 %v84
    %3491 = vmatpush1.msra.mxu0 %v83
    %3492 = vmatprep.subr.mxu0 %v88
    %3493 = vmatpush1.msra.mxu0 %v87
    %3494 = vmatprep.subr.mxu0 %v92
    %3495 = vmatpush1.msra.mxu0 %v91
    %3496 = vmatprep.subr.mxu0 %v96
    %3497 = vmatpush1.msra.mxu0 %v95
    %3498 = vmatprep.subr.mxu0 %v100
    %3499 = vmatpush1.msra.mxu0 %v99
    %3500 = vmatprep.subr.mxu0 %v104
    %3501 = vmatpush1.msra.mxu0 %v103
    %3502 = vmatprep.subr.mxu0 %v108
    %3503 = vmatpush1.msra.mxu0 %v107
    %3504 = vmatprep.subr.mxu0 %v112
    %3505 = vmatpush1.msra.mxu0 %v111
    %3506 = vmatprep.subr.mxu0 %v116
    %3507 = vmatpush1.msra.mxu0 %v115
    %3508 = vmatprep.subr.mxu0 %v120
    %3509 = vmatpush1.msra.mxu0 %v119
    %3510 = vmatprep.subr.mxu0 %v124
    %3511 = vmatpush1.msra.mxu0 %v123
    %3512 = vmatprep.subr.mxu0 %v128
    %3513 = vmatpush1.msra.mxu0 %v127
    %3514 = vmatprep.subr.mxu0 %v132
    %3515 = vmatpush1.msra.mxu0 %v131
    %3516 = vmatprep.subr.mxu0 %v136
    %3517 = vmatpush1.msra.mxu0 %v135
    %3518 = vmatprep.subr.mxu0 0.0
    %3519 = vmatpush1.msra.mxu0 0.0
    %3520 = vmatprep.subr.mxu0 0.0
    %3521 = vmatpush1.msra.mxu0 0.0
    %3522 = vmatprep.subr.mxu0 0.0
    %3523 = vmatpush1.msra.mxu0 0.0
    %3524 = vmatprep.subr.mxu0 0.0
    %3525 = vmatpush1.msra.mxu0 0.0
    %3526 = vmatprep.subr.mxu0 0.0
    %3527 = vmatpush1.msra.mxu0 0.0
    %3528 = vmatprep.subr.mxu0 0.0
    %3529 = vmatpush1.msra.mxu0 0.0
    %3530 = vmatprep.subr.mxu0 0.0
    %3531 = vmatpush1.msra.mxu0 0.0
    %3532 = vmatprep.subr.mxu0 0.0
    %3533 = vmatpush1.msra.mxu0 0.0
    %3534 = vmatprep.subr.mxu0 0.0
    %3535 = vmatpush1.msra.mxu0 0.0
    %3536 = vmatprep.subr.mxu0 0.0
    %3537 = vmatpush1.msra.mxu0 0.0
    %3538 = vmatprep.subr.mxu0 0.0
    %3539 = vmatpush1.msra.mxu0 0.0
    %3540 = vmatprep.subr.mxu0 0.0
    %3541 = vmatpush1.msra.mxu0 0.0
    %3542 = vmatprep.subr.mxu0 0.0
    %3543 = vmatpush1.msra.mxu0 0.0
    %3544 = vmatprep.subr.mxu0 0.0
    %3545 = vmatpush1.msra.mxu0 0.0
    %3546 = vmatprep.subr.mxu0 0.0
    %3547 = vmatpush1.msra.mxu0 0.0
    %3548 = vmatprep.subr.mxu0 0.0
    %3549 = vmatpush1.msra.mxu0 0.0
    %3550 = vmatprep.mubr.f32.mxu0 0.0
    %3551 = vmatmul.mubr.f32.gmra.mrb[0].mxu0 %v3172
    %v3552 = vpop.f32.mrb[0].mxu0
    %v3553 = vadd.f32 0.0, %v3552
    %v3554 = vpop.f32.mrb[0].mxu0
    %v3555 = vadd.f32 0.0, %v3554
    %3556 = vdwg.mxu0
    %3557 = vmatprep.subr.mxu0 %v78
    %3558 = vmatpush1.msra.mxu0 %v77
    %3559 = vmatprep.subr.mxu0 %v82
    %3560 = vmatpush1.msra.mxu0 %v81
    %3561 = vmatprep.subr.mxu0 %v86
    %3562 = vmatpush1.msra.mxu0 %v85
    %3563 = vmatprep.subr.mxu0 %v90
    %3564 = vmatpush1.msra.mxu0 %v89
    %3565 = vmatprep.subr.mxu0 %v94
    %3566 = vmatpush1.msra.mxu0 %v93
    %3567 = vmatprep.subr.mxu0 %v98
    %3568 = vmatpush1.msra.mxu0 %v97
    %3569 = vmatprep.subr.mxu0 %v102
    %3570 = vmatpush1.msra.mxu0 %v101
    %3571 = vmatprep.subr.mxu0 %v106
    %3572 = vmatpush1.msra.mxu0 %v105
    %3573 = vmatprep.subr.mxu0 %v110
    %3574 = vmatpush1.msra.mxu0 %v109
    %3575 = vmatprep.subr.mxu0 %v114
    %3576 = vmatpush1.msra.mxu0 %v113
    %3577 = vmatprep.subr.mxu0 %v118
    %3578 = vmatpush1.msra.mxu0 %v117
    %3579 = vmatprep.subr.mxu0 %v122
    %3580 = vmatpush1.msra.mxu0 %v121
    %3581 = vmatprep.subr.mxu0 %v126
    %3582 = vmatpush1.msra.mxu0 %v125
    %3583 = vmatprep.subr.mxu0 %v130
    %3584 = vmatpush1.msra.mxu0 %v129
    %3585 = vmatprep.subr.mxu0 %v134
    %3586 = vmatpush1.msra.mxu0 %v133
    %3587 = vmatprep.subr.mxu0 %v138
    %3588 = vmatpush1.msra.mxu0 %v137
    %3589 = vmatprep.subr.mxu0 0.0
    %3590 = vmatpush1.msra.mxu0 0.0
    %3591 = vmatprep.subr.mxu0 0.0
    %3592 = vmatpush1.msra.mxu0 0.0
    %3593 = vmatprep.subr.mxu0 0.0
    %3594 = vmatpush1.msra.mxu0 0.0
    %3595 = vmatprep.subr.mxu0 0.0
    %3596 = vmatpush1.msra.mxu0 0.0
    %3597 = vmatprep.subr.mxu0 0.0
    %3598 = vmatpush1.msra.mxu0 0.0
    %3599 = vmatprep.subr.mxu0 0.0
    %3600 = vmatpush1.msra.mxu0 0.0
    %3601 = vmatprep.subr.mxu0 0.0
    %3602 = vmatpush1.msra.mxu0 0.0
    %3603 = vmatprep.subr.mxu0 0.0
    %3604 = vmatpush1.msra.mxu0 0.0
    %3605 = vmatprep.subr.mxu0 0.0
    %3606 = vmatpush1.msra.mxu0 0.0
    %3607 = vmatprep.subr.mxu0 0.0
    %3608 = vmatpush1.msra.mxu0 0.0
    %3609 = vmatprep.subr.mxu0 0.0
    %3610 = vmatpush1.msra.mxu0 0.0
    %3611 = vmatprep.subr.mxu0 0.0
    %3612 = vmatpush1.msra.mxu0 0.0
    %3613 = vmatprep.subr.mxu0 0.0
    %3614 = vmatpush1.msra.mxu0 0.0
    %3615 = vmatprep.subr.mxu0 0.0
    %3616 = vmatpush1.msra.mxu0 0.0
    %3617 = vmatprep.subr.mxu0 0.0
    %3618 = vmatpush1.msra.mxu0 0.0
    %3619 = vmatprep.subr.mxu0 0.0
    %3620 = vmatpush1.msra.mxu0 0.0
    %3621 = vmatprep.mubr.f32.mxu0 0.0
    %3622 = vmatmul.mubr.f32.gmra.mrb[0].mxu0 %v3172
    %v3623 = vpop.f32.mrb[0].mxu0
    %v3624 = vadd.f32 0.0, %v3623
    %v3625 = vpop.f32.mrb[0].mxu0
    %v3626 = vadd.f32 0.0, %v3625
    %3627 = vdwg.mxu0
    %v3628 = vadd.f32 %v3482, %v3553
    %v3629 = vadd.f32 %v3483, %v3555
    %v3630 = vadd.f32 %v3484, %v3624
    %v3631 = vadd.f32 %v3485, %v3626
    %v3632 = vmul.f32 %v3628, 0.5
    %v3633 = vtanh.pop %v3632
    %v3634 = vmul.f32 %v3633, 0.5
    %v3635 = vadd.f32 %v3634, 0.5
    %v3636 = vmul.f32 %v3629, 0.5
    %v3637 = vtanh.pop %v3636
    %v3638 = vmul.f32 %v3637, 0.5
    %v3639 = vadd.f32 %v3638, 0.5
    %v3640 = vtanh.pop %v3630
    %v3641 = vmul.f32 %v3631, 0.5
    %v3642 = vtanh.pop %v3641
    %v3643 = vmul.f32 %v3642, 0.5
    %v3644 = vadd.f32 %v3643, 0.5
    %v3645 = vmul.f32 %v3639, %v3170
    %v3646 = vmul.f32 %v3635, %v3640
    %v3647 = vadd.f32 %v3645, %v3646
    %v3648 = vtanh.pop %v3647
    %v3649 = vmul.f32 %v3644, %v3648
    %3650 = vmatprep.subr.mxu0 %v140
    %3651 = vmatpush1.msra.mxu0 %v139
    %3652 = vmatprep.subr.mxu0 %v144
    %3653 = vmatpush1.msra.mxu0 %v143
    %3654 = vmatprep.subr.mxu0 %v148
    %3655 = vmatpush1.msra.mxu0 %v147
    %3656 = vmatprep.subr.mxu0 %v152
    %3657 = vmatpush1.msra.mxu0 %v151
    %3658 = vmatprep.subr.mxu0 %v156
    %3659 = vmatpush1.msra.mxu0 %v155
    %3660 = vmatprep.subr.mxu0 %v160
    %3661 = vmatpush1.msra.mxu0 %v159
    %3662 = vmatprep.subr.mxu0 %v164
    %3663 = vmatpush1.msra.mxu0 %v163
    %3664 = vmatprep.subr.mxu0 %v168
    %3665 = vmatpush1.msra.mxu0 %v167
    %3666 = vmatprep.subr.mxu0 %v172
    %3667 = vmatpush1.msra.mxu0 %v171
    %3668 = vmatprep.subr.mxu0 %v176
    %3669 = vmatpush1.msra.mxu0 %v175
    %3670 = vmatprep.subr.mxu0 %v180
    %3671 = vmatpush1.msra.mxu0 %v179
    %3672 = vmatprep.subr.mxu0 %v184
    %3673 = vmatpush1.msra.mxu0 %v183
    %3674 = vmatprep.subr.mxu0 %v188
    %3675 = vmatpush1.msra.mxu0 %v187
    %3676 = vmatprep.subr.mxu0 %v192
    %3677 = vmatpush1.msra.mxu0 %v191
    %3678 = vmatprep.subr.mxu0 %v196
    %3679 = vmatpush1.msra.mxu0 %v195
    %3680 = vmatprep.subr.mxu0 %v200
    %3681 = vmatpush1.msra.mxu0 %v199
    %3682 = vmatprep.subr.mxu0 0.0
    %3683 = vmatpush1.msra.mxu0 0.0
    %3684 = vmatprep.subr.mxu0 0.0
    %3685 = vmatpush1.msra.mxu0 0.0
    %3686 = vmatprep.subr.mxu0 0.0
    %3687 = vmatpush1.msra.mxu0 0.0
    %3688 = vmatprep.subr.mxu0 0.0
    %3689 = vmatpush1.msra.mxu0 0.0
    %3690 = vmatprep.subr.mxu0 0.0
    %3691 = vmatpush1.msra.mxu0 0.0
    %3692 = vmatprep.subr.mxu0 0.0
    %3693 = vmatpush1.msra.mxu0 0.0
    %3694 = vmatprep.subr.mxu0 0.0
    %3695 = vmatpush1.msra.mxu0 0.0
    %3696 = vmatprep.subr.mxu0 0.0
    %3697 = vmatpush1.msra.mxu0 0.0
    %3698 = vmatprep.subr.mxu0 0.0
    %3699 = vmatpush1.msra.mxu0 0.0
    %3700 = vmatprep.subr.mxu0 0.0
    %3701 = vmatpush1.msra.mxu0 0.0
    %3702 = vmatprep.subr.mxu0 0.0
    %3703 = vmatpush1.msra.mxu0 0.0
    %3704 = vmatprep.subr.mxu0 0.0
    %3705 = vmatpush1.msra.mxu0 0.0
    %3706 = vmatprep.subr.mxu0 0.0
    %3707 = vmatpush1.msra.mxu0 0.0
    %3708 = vmatprep.subr.mxu0 0.0
    %3709 = vmatpush1.msra.mxu0 0.0
    %3710 = vmatprep.subr.mxu0 0.0
    %3711 = vmatpush1.msra.mxu0 0.0
    %3712 = vmatprep.subr.mxu0 0.0
    %3713 = vmatpush1.msra.mxu0 0.0
    %3714 = vmatprep.mubr.f32.mxu0 0.0
    %3715 = vmatmul.mubr.f32.gmra.mrb[0].mxu0 %v3649
    %v3716 = vpop.f32.mrb[0].mxu0
    %v3717 = vadd.f32 0.0, %v3716
    %v3718 = vpop.f32.mrb[0].mxu0
    %v3719 = vadd.f32 0.0, %v3718
    %3720 = vdwg.mxu0
    %3721 = vmatprep.subr.mxu0 %v142
    %3722 = vmatpush1.msra.mxu0 %v141
    %3723 = vmatprep.subr.mxu0 %v146
    %3724 = vmatpush1.msra.mxu0 %v145
    %3725 = vmatprep.subr.mxu0 %v150
    %3726 = vmatpush1.msra.mxu0 %v149
    %3727 = vmatprep.subr.mxu0 %v154
    %3728 = vmatpush1.msra.mxu0 %v153
    %3729 = vmatprep.subr.mxu0 %v158
    %3730 = vmatpush1.msra.mxu0 %v157
    %3731 = vmatprep.subr.mxu0 %v162
    %3732 = vmatpush1.msra.mxu0 %v161
    %3733 = vmatprep.subr.mxu0 %v166
    %3734 = vmatpush1.msra.mxu0 %v165
    %3735 = vmatprep.subr.mxu0 %v170
    %3736 = vmatpush1.msra.mxu0 %v169
    %3737 = vmatprep.subr.mxu0 %v174
    %3738 = vmatpush1.msra.mxu0 %v173
    %3739 = vmatprep.subr.mxu0 %v178
    %3740 = vmatpush1.msra.mxu0 %v177
    %3741 = vmatprep.subr.mxu0 %v182
    %3742 = vmatpush1.msra.mxu0 %v181
    %3743 = vmatprep.subr.mxu0 %v186
    %3744 = vmatpush1.msra.mxu0 %v185
    %3745 = vmatprep.subr.mxu0 %v190
    %3746 = vmatpush1.msra.mxu0 %v189
    %3747 = vmatprep.subr.mxu0 %v194
    %3748 = vmatpush1.msra.mxu0 %v193
    %3749 = vmatprep.subr.mxu0 %v198
    %3750 = vmatpush1.msra.mxu0 %v197
    %3751 = vmatprep.subr.mxu0 %v202
    %3752 = vmatpush1.msra.mxu0 %v201
    %3753 = vmatprep.subr.mxu0 0.0
    %3754 = vmatpush1.msra.mxu0 0.0
    %3755 = vmatprep.subr.mxu0 0.0
    %3756 = vmatpush1.msra.mxu0 0.0
    %3757 = vmatprep.subr.mxu0 0.0
    %3758 = vmatpush1.msra.mxu0 0.0
    %3759 = vmatprep.subr.mxu0 0.0
    %3760 = vmatpush1.msra.mxu0 0.0
    %3761 = vmatprep.subr.mxu0 0.0
    %3762 = vmatpush1.msra.mxu0 0.0
    %3763 = vmatprep.subr.mxu0 0.0
    %3764 = vmatpush1.msra.mxu0 0.0
    %3765 = vmatprep.subr.mxu0 0.0
    %3766 = vmatpush1.msra.mxu0 0.0
    %3767 = vmatprep.subr.mxu0 0.0
    %3768 = vmatpush1.msra.mxu0 0.0
    %3769 = vmatprep.subr.mxu0 0.0
    %3770 = vmatpush1.msra.mxu0 0.0
    %3771 = vmatprep.subr.mxu0 0.0
    %3772 = vmatpush1.msra.mxu0 0.0
    %3773 = vmatprep.subr.mxu0 0.0
    %3774 = vmatpush1.msra.mxu0 0.0
    %3775 = vmatprep.subr.mxu0 0.0
    %3776 = vmatpush1.msra.mxu0 0.0
    %3777 = vmatprep.subr.mxu0 0.0
    %3778 = vmatpush1.msra.mxu0 0.0
    %3779 = vmatprep.subr.mxu0 0.0
    %3780 = vmatpush1.msra.mxu0 0.0
    %3781 = vmatprep.subr.mxu0 0.0
    %3782 = vmatpush1.msra.mxu0 0.0
    %3783 = vmatprep.subr.mxu0 0.0
    %3784 = vmatpush1.msra.mxu0 0.0
    %3785 = vmatprep.mubr.f32.mxu0 0.0
    %3786 = vmatmul.mubr.f32.gmra.mrb[0].mxu0 %v3649
    %v3787 = vpop.f32.mrb[0].mxu0
    %v3788 = vadd.f32 0.0, %v3787
    %v3789 = vpop.f32.mrb[0].mxu0
    %v3790 = vadd.f32 0.0, %v3789
    %3791 = vdwg.mxu0
    %3792 = vmatprep.subr.mxu0 %v204
    %3793 = vmatpush1.msra.mxu0 %v203
    %3794 = vmatprep.subr.mxu0 %v208
    %3795 = vmatpush1.msra.mxu0 %v207
    %3796 = vmatprep.subr.mxu0 %v212
    %3797 = vmatpush1.msra.mxu0 %v211
    %3798 = vmatprep.subr.mxu0 %v216
    %3799 = vmatpush1.msra.mxu0 %v215
    %3800 = vmatprep.subr.mxu0 %v220
    %3801 = vmatpush1.msra.mxu0 %v219
    %3802 = vmatprep.subr.mxu0 %v224
    %3803 = vmatpush1.msra.mxu0 %v223
    %3804 = vmatprep.subr.mxu0 %v228
    %3805 = vmatpush1.msra.mxu0 %v227
    %3806 = vmatprep.subr.mxu0 %v232
    %3807 = vmatpush1.msra.mxu0 %v231
    %3808 = vmatprep.subr.mxu0 %v236
    %3809 = vmatpush1.msra.mxu0 %v235
    %3810 = vmatprep.subr.mxu0 %v240
    %3811 = vmatpush1.msra.mxu0 %v239
    %3812 = vmatprep.subr.mxu0 %v244
    %3813 = vmatpush1.msra.mxu0 %v243
    %3814 = vmatprep.subr.mxu0 %v248
    %3815 = vmatpush1.msra.mxu0 %v247
    %3816 = vmatprep.subr.mxu0 %v252
    %3817 = vmatpush1.msra.mxu0 %v251
    %3818 = vmatprep.subr.mxu0 %v256
    %3819 = vmatpush1.msra.mxu0 %v255
    %3820 = vmatprep.subr.mxu0 %v260
    %3821 = vmatpush1.msra.mxu0 %v259
    %3822 = vmatprep.subr.mxu0 %v264
    %3823 = vmatpush1.msra.mxu0 %v263
    %3824 = vmatprep.subr.mxu0 0.0
    %3825 = vmatpush1.msra.mxu0 0.0
    %3826 = vmatprep.subr.mxu0 0.0
    %3827 = vmatpush1.msra.mxu0 0.0
    %3828 = vmatprep.subr.mxu0 0.0
    %3829 = vmatpush1.msra.mxu0 0.0
    %3830 = vmatprep.subr.mxu0 0.0
    %3831 = vmatpush1.msra.mxu0 0.0
    %3832 = vmatprep.subr.mxu0 0.0
    %3833 = vmatpush1.msra.mxu0 0.0
    %3834 = vmatprep.subr.mxu0 0.0
    %3835 = vmatpush1.msra.mxu0 0.0
    %3836 = vmatprep.subr.mxu0 0.0
    %3837 = vmatpush1.msra.mxu0 0.0
    %3838 = vmatprep.subr.mxu0 0.0
    %3839 = vmatpush1.msra.mxu0 0.0
    %3840 = vmatprep.subr.mxu0 0.0
    %3841 = vmatpush1.msra.mxu0 0.0
    %3842 = vmatprep.subr.mxu0 0.0
    %3843 = vmatpush1.msra.mxu0 0.0
    %3844 = vmatprep.subr.mxu0 0.0
    %3845 = vmatpush1.msra.mxu0 0.0
    %3846 = vmatprep.subr.mxu0 0.0
    %3847 = vmatpush1.msra.mxu0 0.0
    %3848 = vmatprep.subr.mxu0 0.0
    %3849 = vmatpush1.msra.mxu0 0.0
    %3850 = vmatprep.subr.mxu0 0.0
    %3851 = vmatpush1.msra.mxu0 0.0
    %3852 = vmatprep.subr.mxu0 0.0
    %3853 = vmatpush1.msra.mxu0 0.0
    %3854 = vmatprep.subr.mxu0 0.0
    %3855 = vmatpush1.msra.mxu0 0.0
    %3856 = vmatprep.mubr.f32.mxu0 0.0
    %3857 = vmatmul.mubr.f32.gmra.mrb[0].mxu0 %v3478
    %v3858 = vpop.f32.mrb[0].mxu0
    %v3859 = vadd.f32 %v3717, %v3858
    %v3860 = vpop.f32.mrb[0].mxu0
    %v3861 = vadd.f32 %v3719, %v3860
    %3862 = vdwg.mxu0
    %3863 = vmatprep.subr.mxu0 %v206
    %3864 = vmatpush1.msra.mxu0 %v205
    %3865 = vmatprep.subr.mxu0 %v210
    %3866 = vmatpush1.msra.mxu0 %v209
    %3867 = vmatprep.subr.mxu0 %v214
    %3868 = vmatpush1.msra.mxu0 %v213
    %3869 = vmatprep.subr.mxu0 %v218
    %3870 = vmatpush1.msra.mxu0 %v217
    %3871 = vmatprep.subr.mxu0 %v222
    %3872 = vmatpush1.msra.mxu0 %v221
    %3873 = vmatprep.subr.mxu0 %v226
    %3874 = vmatpush1.msra.mxu0 %v225
    %3875 = vmatprep.subr.mxu0 %v230
    %3876 = vmatpush1.msra.mxu0 %v229
    %3877 = vmatprep.subr.mxu0 %v234
    %3878 = vmatpush1.msra.mxu0 %v233
    %3879 = vmatprep.subr.mxu0 %v238
    %3880 = vmatpush1.msra.mxu0 %v237
    %3881 = vmatprep.subr.mxu0 %v242
    %3882 = vmatpush1.msra.mxu0 %v241
    %3883 = vmatprep.subr.mxu0 %v246
    %3884 = vmatpush1.msra.mxu0 %v245
    %3885 = vmatprep.subr.mxu0 %v250
    %3886 = vmatpush1.msra.mxu0 %v249
    %3887 = vmatprep.subr.mxu0 %v254
    %3888 = vmatpush1.msra.mxu0 %v253
    %3889 = vmatprep.subr.mxu0 %v258
    %3890 = vmatpush1.msra.mxu0 %v257
    %3891 = vmatprep.subr.mxu0 %v262
    %3892 = vmatpush1.msra.mxu0 %v261
    %3893 = vmatprep.subr.mxu0 %v266
    %3894 = vmatpush1.msra.mxu0 %v265
    %3895 = vmatprep.subr.mxu0 0.0
    %3896 = vmatpush1.msra.mxu0 0.0
    %3897 = vmatprep.subr.mxu0 0.0
    %3898 = vmatpush1.msra.mxu0 0.0
    %3899 = vmatprep.subr.mxu0 0.0
    %3900 = vmatpush1.msra.mxu0 0.0
    %3901 = vmatprep.subr.mxu0 0.0
    %3902 = vmatpush1.msra.mxu0 0.0
    %3903 = vmatprep.subr.mxu0 0.0
    %3904 = vmatpush1.msra.mxu0 0.0
    %3905 = vmatprep.subr.mxu0 0.0
    %3906 = vmatpush1.msra.mxu0 0.0
    %3907 = vmatprep.subr.mxu0 0.0
    %3908 = vmatpush1.msra.mxu0 0.0
    %3909 = vmatprep.subr.mxu0 0.0
    %3910 = vmatpush1.msra.mxu0 0.0
    %3911 = vmatprep.subr.mxu0 0.0
    %3912 = vmatpush1.msra.mxu0 0.0
    %3913 = vmatprep.subr.mxu0 0.0
    %3914 = vmatpush1.msra.mxu0 0.0
    %3915 = vmatprep.subr.mxu0 0.0
    %3916 = vmatpush1.msra.mxu0 0.0
    %3917 = vmatprep.subr.mxu0 0.0
    %3918 = vmatpush1.msra.mxu0 0.0
    %3919 = vmatprep.subr.mxu0 0.0
    %3920 = vmatpush1.msra.mxu0 0.0
    %3921 = vmatprep.subr.mxu0 0.0
    %3922 = vmatpush1.msra.mxu0 0.0
    %3923 = vmatprep.subr.mxu0 0.0
    %3924 = vmatpush1.msra.mxu0 0.0
    %3925 = vmatprep.subr.mxu0 0.0
    %3926 = vmatpush1.msra.mxu0 0.0
    %3927 = vmatprep.mubr.f32.mxu0 0.0
    %3928 = vmatmul.mubr.f32.gmra.mrb[0].mxu0 %v3478
    %v3929 = vpop.f32.mrb[0].mxu0
    %v3930 = vadd.f32 %v3788, %v3929
    %v3931 = vpop.f32.mrb[0].mxu0
    %v3932 = vadd.f32 %v3790, %v3931
    %3933 = vdwg.mxu0
    %v3934 = vadd.f32 %v3859, %v600
    %v3935 = vadd.f32 %v3861, %v604
    %v3936 = vadd.f32 %v3930, %v608
    %v3937 = vadd.f32 %v3932, %v612
    %v3938 = vmul.f32 %v3934, 0.5
    %v3939 = vtanh.pop %v3938
    %v3940 = vmul.f32 %v3939, 0.5
    %v3941 = vadd.f32 %v3940, 0.5
    %v3942 = vmul.f32 %v3935, 0.5
    %v3943 = vtanh.pop %v3942
    %v3944 = vmul.f32 %v3943, 0.5
    %v3945 = vadd.f32 %v3944, 0.5
    %v3946 = vtanh.pop %v3936
    %v3947 = vmul.f32 %v3937, 0.5
    %v3948 = vtanh.pop %v3947
    %v3949 = vmul.f32 %v3948, 0.5
    %v3950 = vadd.f32 %v3949, 0.5
    %v3951 = vmul.f32 %v3945, %v3476
    %v3952 = vmul.f32 %v3941, %v3946
    %v3953 = vadd.f32 %v3951, %v3952
    %v3954 = vtanh.pop %v3953
    %v3955 = vmul.f32 %v3950, %v3954
    %s3956 = smul.u32 7, 4
    %s3957 = smul.addr %s3956, 8
    %s3958 = scalar_lea.vmem [#allocation2], %s3957
    %v3959 = vld [vmem:[%s3958] sm:$0xff]
    %v3960 = vld [vmem:[%s3958 + $0x8] sm:$0xff]
    %v3961 = vld [vmem:[%s3958 + $0x10] sm:$0xff]
    %v3962 = vld [vmem:[%s3958 + $0x18] sm:$0xff]
    %3963 = vmatprep.subr.mxu0 %v76
    %3964 = vmatpush1.msra.mxu0 %v75
    %3965 = vmatprep.subr.mxu0 %v80
    %3966 = vmatpush1.msra.mxu0 %v79
    %3967 = vmatprep.subr.mxu0 %v84
    %3968 = vmatpush1.msra.mxu0 %v83
    %3969 = vmatprep.subr.mxu0 %v88
    %3970 = vmatpush1.msra.mxu0 %v87
    %3971 = vmatprep.subr.mxu0 %v92
    %3972 = vmatpush1.msra.mxu0 %v91
    %3973 = vmatprep.subr.mxu0 %v96
    %3974 = vmatpush1.msra.mxu0 %v95
    %3975 = vmatprep.subr.mxu0 %v100
    %3976 = vmatpush1.msra.mxu0 %v99
    %3977 = vmatprep.subr.mxu0 %v104
    %3978 = vmatpush1.msra.mxu0 %v103
    %3979 = vmatprep.subr.mxu0 %v108
    %3980 = vmatpush1.msra.mxu0 %v107
    %3981 = vmatprep.subr.mxu0 %v112
    %3982 = vmatpush1.msra.mxu0 %v111
    %3983 = vmatprep.subr.mxu0 %v116
    %3984 = vmatpush1.msra.mxu0 %v115
    %3985 = vmatprep.subr.mxu0 %v120
    %3986 = vmatpush1.msra.mxu0 %v119
    %3987 = vmatprep.subr.mxu0 %v124
    %3988 = vmatpush1.msra.mxu0 %v123
    %3989 = vmatprep.subr.mxu0 %v128
    %3990 = vmatpush1.msra.mxu0 %v127
    %3991 = vmatprep.subr.mxu0 %v132
    %3992 = vmatpush1.msra.mxu0 %v131
    %3993 = vmatprep.subr.mxu0 %v136
    %3994 = vmatpush1.msra.mxu0 %v135
    %3995 = vmatprep.subr.mxu0 0.0
    %3996 = vmatpush1.msra.mxu0 0.0
    %3997 = vmatprep.subr.mxu0 0.0
    %3998 = vmatpush1.msra.mxu0 0.0
    %3999 = vmatprep.subr.mxu0 0.0
    %4000 = vmatpush1.msra.mxu0 0.0
    %4001 = vmatprep.subr.mxu0 0.0
    %4002 = vmatpush1.msra.mxu0 0.0
    %4003 = vmatprep.subr.mxu0 0.0
    %4004 = vmatpush1.msra.mxu0 0.0
    %4005 = vmatprep.subr.mxu0 0.0
    %4006 = vmatpush1.msra.mxu0 0.0
    %4007 = vmatprep.subr.mxu0 0.0
    %4008 = vmatpush1.msra.mxu0 0.0
    %4009 = vmatprep.subr.mxu0 0.0
    %4010 = vmatpush1.msra.mxu0 0.0
    %4011 = vmatprep.subr.mxu0 0.0
    %4012 = vmatpush1.msra.mxu0 0.0
    %4013 = vmatprep.subr.mxu0 0.0
    %4014 = vmatpush1.msra.mxu0 0.0
    %4015 = vmatprep.subr.mxu0 0.0
    %4016 = vmatpush1.msra.mxu0 0.0
    %4017 = vmatprep.subr.mxu0 0.0
    %4018 = vmatpush1.msra.mxu0 0.0
    %4019 = vmatprep.subr.mxu0 0.0
    %4020 = vmatpush1.msra.mxu0 0.0
    %4021 = vmatprep.subr.mxu0 0.0
    %4022 = vmatpush1.msra.mxu0 0.0
    %4023 = vmatprep.subr.mxu0 0.0
    %4024 = vmatpush1.msra.mxu0 0.0
    %4025 = vmatprep.subr.mxu0 0.0
    %4026 = vmatpush1.msra.mxu0 0.0
    %4027 = vmatprep.mubr.f32.mxu0 0.0
    %4028 = vmatmul.mubr.f32.gmra.mrb[0].mxu0 %v3649
    %v4029 = vpop.f32.mrb[0].mxu0
    %v4030 = vadd.f32 0.0, %v4029
    %v4031 = vpop.f32.mrb[0].mxu0
    %v4032 = vadd.f32 0.0, %v4031
    %4033 = vdwg.mxu0
    %4034 = vmatprep.subr.mxu0 %v78
    %4035 = vmatpush1.msra.mxu0 %v77
    %4036 = vmatprep.subr.mxu0 %v82
    %4037 = vmatpush1.msra.mxu0 %v81
    %4038 = vmatprep.subr.mxu0 %v86
    %4039 = vmatpush1.msra.mxu0 %v85
    %4040 = vmatprep.subr.mxu0 %v90
    %4041 = vmatpush1.msra.mxu0 %v89
    %4042 = vmatprep.subr.mxu0 %v94
    %4043 = vmatpush1.msra.mxu0 %v93
    %4044 = vmatprep.subr.mxu0 %v98
    %4045 = vmatpush1.msra.mxu0 %v97
    %4046 = vmatprep.subr.mxu0 %v102
    %4047 = vmatpush1.msra.mxu0 %v101
    %4048 = vmatprep.subr.mxu0 %v106
    %4049 = vmatpush1.msra.mxu0 %v105
    %4050 = vmatprep.subr.mxu0 %v110
    %4051 = vmatpush1.msra.mxu0 %v109
    %4052 = vmatprep.subr.mxu0 %v114
    %4053 = vmatpush1.msra.mxu0 %v113
    %4054 = vmatprep.subr.mxu0 %v118
    %4055 = vmatpush1.msra.mxu0 %v117
    %4056 = vmatprep.subr.mxu0 %v122
    %4057 = vmatpush1.msra.mxu0 %v121
    %4058 = vmatprep.subr.mxu0 %v126
    %4059 = vmatpush1.msra.mxu0 %v125
    %4060 = vmatprep.subr.mxu0 %v130
    %4061 = vmatpush1.msra.mxu0 %v129
    %4062 = vmatprep.subr.mxu0 %v134
    %4063 = vmatpush1.msra.mxu0 %v133
    %4064 = vmatprep.subr.mxu0 %v138
    %4065 = vmatpush1.msra.mxu0 %v137
    %4066 = vmatprep.subr.mxu0 0.0
    %4067 = vmatpush1.msra.mxu0 0.0
    %4068 = vmatprep.subr.mxu0 0.0
    %4069 = vmatpush1.msra.mxu0 0.0
    %4070 = vmatprep.subr.mxu0 0.0
    %4071 = vmatpush1.msra.mxu0 0.0
    %4072 = vmatprep.subr.mxu0 0.0
    %4073 = vmatpush1.msra.mxu0 0.0
    %4074 = vmatprep.subr.mxu0 0.0
    %4075 = vmatpush1.msra.mxu0 0.0
    %4076 = vmatprep.subr.mxu0 0.0
    %4077 = vmatpush1.msra.mxu0 0.0
    %4078 = vmatprep.subr.mxu0 0.0
    %4079 = vmatpush1.msra.mxu0 0.0
    %4080 = vmatprep.subr.mxu0 0.0
    %4081 = vmatpush1.msra.mxu0 0.0
    %4082 = vmatprep.subr.mxu0 0.0
    %4083 = vmatpush1.msra.mxu0 0.0
    %4084 = vmatprep.subr.mxu0 0.0
    %4085 = vmatpush1.msra.mxu0 0.0
    %4086 = vmatprep.subr.mxu0 0.0
    %4087 = vmatpush1.msra.mxu0 0.0
    %4088 = vmatprep.subr.mxu0 0.0
    %4089 = vmatpush1.msra.mxu0 0.0
    %4090 = vmatprep.subr.mxu0 0.0
    %4091 = vmatpush1.msra.mxu0 0.0
    %4092 = vmatprep.subr.mxu0 0.0
    %4093 = vmatpush1.msra.mxu0 0.0
    %4094 = vmatprep.subr.mxu0 0.0
    %4095 = vmatpush1.msra.mxu0 0.0
    %4096 = vmatprep.subr.mxu0 0.0
    %4097 = vmatpush1.msra.mxu0 0.0
    %4098 = vmatprep.mubr.f32.mxu0 0.0
    %4099 = vmatmul.mubr.f32.gmra.mrb[0].mxu0 %v3649
    %v4100 = vpop.f32.mrb[0].mxu0
    %v4101 = vadd.f32 0.0, %v4100
    %v4102 = vpop.f32.mrb[0].mxu0
    %v4103 = vadd.f32 0.0, %v4102
    %4104 = vdwg.mxu0
    %v4105 = vadd.f32 %v3959, %v4030
    %v4106 = vadd.f32 %v3960, %v4032
    %v4107 = vadd.f32 %v3961, %v4101
    %v4108 = vadd.f32 %v3962, %v4103
    %v4109 = vmul.f32 %v4105, 0.5
    %v4110 = vtanh.pop %v4109
    %v4111 = vmul.f32 %v4110, 0.5
    %v4112 = vadd.f32 %v4111, 0.5
    %v4113 = vmul.f32 %v4106, 0.5
    %v4114 = vtanh.pop %v4113
    %v4115 = vmul.f32 %v4114, 0.5
    %v4116 = vadd.f32 %v4115, 0.5
    %v4117 = vtanh.pop %v4107
    %v4118 = vmul.f32 %v4108, 0.5
    %v4119 = vtanh.pop %v4118
    %v4120 = vmul.f32 %v4119, 0.5
    %v4121 = vadd.f32 %v4120, 0.5
    %v4122 = vmul.f32 %v4116, %v3647
    %v4123 = vmul.f32 %v4112, %v4117
    %v4124 = vadd.f32 %v4122, %v4123
    %v4125 = vtanh.pop %v4124
    %v4126 = vmul.f32 %v4121, %v4125
    %4127 = vmatprep.subr.mxu0 %v140
    %4128 = vmatpush1.msra.mxu0 %v139
    %4129 = vmatprep.subr.mxu0 %v144
    %4130 = vmatpush1.msra.mxu0 %v143
    %4131 = vmatprep.subr.mxu0 %v148
    %4132 = vmatpush1.msra.mxu0 %v147
    %4133 = vmatprep.subr.mxu0 %v152
    %4134 = vmatpush1.msra.mxu0 %v151
    %4135 = vmatprep.subr.mxu0 %v156
    %4136 = vmatpush1.msra.mxu0 %v155
    %4137 = vmatprep.subr.mxu0 %v160
    %4138 = vmatpush1.msra.mxu0 %v159
    %4139 = vmatprep.subr.mxu0 %v164
    %4140 = vmatpush1.msra.mxu0 %v163
    %4141 = vmatprep.subr.mxu0 %v168
    %4142 = vmatpush1.msra.mxu0 %v167
    %4143 = vmatprep.subr.mxu0 %v172
    %4144 = vmatpush1.msra.mxu0 %v171
    %4145 = vmatprep.subr.mxu0 %v176
    %4146 = vmatpush1.msra.mxu0 %v175
    %4147 = vmatprep.subr.mxu0 %v180
    %4148 = vmatpush1.msra.mxu0 %v179
    %4149 = vmatprep.subr.mxu0 %v184
    %4150 = vmatpush1.msra.mxu0 %v183
    %4151 = vmatprep.subr.mxu0 %v188
    %4152 = vmatpush1.msra.mxu0 %v187
    %4153 = vmatprep.subr.mxu0 %v192
    %4154 = vmatpush1.msra.mxu0 %v191
    %4155 = vmatprep.subr.mxu0 %v196
    %4156 = vmatpush1.msra.mxu0 %v195
    %4157 = vmatprep.subr.mxu0 %v200
    %4158 = vmatpush1.msra.mxu0 %v199
    %4159 = vmatprep.subr.mxu0 0.0
    %4160 = vmatpush1.msra.mxu0 0.0
    %4161 = vmatprep.subr.mxu0 0.0
    %4162 = vmatpush1.msra.mxu0 0.0
    %4163 = vmatprep.subr.mxu0 0.0
    %4164 = vmatpush1.msra.mxu0 0.0
    %4165 = vmatprep.subr.mxu0 0.0
    %4166 = vmatpush1.msra.mxu0 0.0
    %4167 = vmatprep.subr.mxu0 0.0
    %4168 = vmatpush1.msra.mxu0 0.0
    %4169 = vmatprep.subr.mxu0 0.0
    %4170 = vmatpush1.msra.mxu0 0.0
    %4171 = vmatprep.subr.mxu0 0.0
    %4172 = vmatpush1.msra.mxu0 0.0
    %4173 = vmatprep.subr.mxu0 0.0
    %4174 = vmatpush1.msra.mxu0 0.0
    %4175 = vmatprep.subr.mxu0 0.0
    %4176 = vmatpush1.msra.mxu0 0.0
    %4177 = vmatprep.subr.mxu0 0.0
    %4178 = vmatpush1.msra.mxu0 0.0
    %4179 = vmatprep.subr.mxu0 0.0
    %4180 = vmatpush1.msra.mxu0 0.0
    %4181 = vmatprep.subr.mxu0 0.0
    %4182 = vmatpush1.msra.mxu0 0.0
    %4183 = vmatprep.subr.mxu0 0.0
    %4184 = vmatpush1.msra.mxu0 0.0
    %4185 = vmatprep.subr.mxu0 0.0
    %4186 = vmatpush1.msra.mxu0 0.0
    %4187 = vmatprep.subr.mxu0 0.0
    %4188 = vmatpush1.msra.mxu0 0.0
    %4189 = vmatprep.subr.mxu0 0.0
    %4190 = vmatpush1.msra.mxu0 0.0
    %4191 = vmatprep.mubr.f32.mxu0 0.0
    %4192 = vmatmul.mubr.f32.gmra.mrb[0].mxu0 %v4126
    %v4193 = vpop.f32.mrb[0].mxu0
    %v4194 = vadd.f32 0.0, %v4193
    %v4195 = vpop.f32.mrb[0].mxu0
    %v4196 = vadd.f32 0.0, %v4195
    %4197 = vdwg.mxu0
    %4198 = vmatprep.subr.mxu0 %v142
    %4199 = vmatpush1.msra.mxu0 %v141
    %4200 = vmatprep.subr.mxu0 %v146
    %4201 = vmatpush1.msra.mxu0 %v145
    %4202 = vmatprep.subr.mxu0 %v150
    %4203 = vmatpush1.msra.mxu0 %v149
    %4204 = vmatprep.subr.mxu0 %v154
    %4205 = vmatpush1.msra.mxu0 %v153
    %4206 = vmatprep.subr.mxu0 %v158
    %4207 = vmatpush1.msra.mxu0 %v157
    %4208 = vmatprep.subr.mxu0 %v162
    %4209 = vmatpush1.msra.mxu0 %v161
    %4210 = vmatprep.subr.mxu0 %v166
    %4211 = vmatpush1.msra.mxu0 %v165
    %4212 = vmatprep.subr.mxu0 %v170
    %4213 = vmatpush1.msra.mxu0 %v169
    %4214 = vmatprep.subr.mxu0 %v174
    %4215 = vmatpush1.msra.mxu0 %v173
    %4216 = vmatprep.subr.mxu0 %v178
    %4217 = vmatpush1.msra.mxu0 %v177
    %4218 = vmatprep.subr.mxu0 %v182
    %4219 = vmatpush1.msra.mxu0 %v181
    %4220 = vmatprep.subr.mxu0 %v186
    %4221 = vmatpush1.msra.mxu0 %v185
    %4222 = vmatprep.subr.mxu0 %v190
    %4223 = vmatpush1.msra.mxu0 %v189
    %4224 = vmatprep.subr.mxu0 %v194
    %4225 = vmatpush1.msra.mxu0 %v193
    %4226 = vmatprep.subr.mxu0 %v198
    %4227 = vmatpush1.msra.mxu0 %v197
    %4228 = vmatprep.subr.mxu0 %v202
    %4229 = vmatpush1.msra.mxu0 %v201
    %4230 = vmatprep.subr.mxu0 0.0
    %4231 = vmatpush1.msra.mxu0 0.0
    %4232 = vmatprep.subr.mxu0 0.0
    %4233 = vmatpush1.msra.mxu0 0.0
    %4234 = vmatprep.subr.mxu0 0.0
    %4235 = vmatpush1.msra.mxu0 0.0
    %4236 = vmatprep.subr.mxu0 0.0
    %4237 = vmatpush1.msra.mxu0 0.0
    %4238 = vmatprep.subr.mxu0 0.0
    %4239 = vmatpush1.msra.mxu0 0.0
    %4240 = vmatprep.subr.mxu0 0.0
    %4241 = vmatpush1.msra.mxu0 0.0
    %4242 = vmatprep.subr.mxu0 0.0
    %4243 = vmatpush1.msra.mxu0 0.0
    %4244 = vmatprep.subr.mxu0 0.0
    %4245 = vmatpush1.msra.mxu0 0.0
    %4246 = vmatprep.subr.mxu0 0.0
    %4247 = vmatpush1.msra.mxu0 0.0
    %4248 = vmatprep.subr.mxu0 0.0
    %4249 = vmatpush1.msra.mxu0 0.0
    %4250 = vmatprep.subr.mxu0 0.0
    %4251 = vmatpush1.msra.mxu0 0.0
    %4252 = vmatprep.subr.mxu0 0.0
    %4253 = vmatpush1.msra.mxu0 0.0
    %4254 = vmatprep.subr.mxu0 0.0
    %4255 = vmatpush1.msra.mxu0 0.0
    %4256 = vmatprep.subr.mxu0 0.0
    %4257 = vmatpush1.msra.mxu0 0.0
    %4258 = vmatprep.subr.mxu0 0.0
    %4259 = vmatpush1.msra.mxu0 0.0
    %4260 = vmatprep.subr.mxu0 0.0
    %4261 = vmatpush1.msra.mxu0 0.0
    %4262 = vmatprep.mubr.f32.mxu0 0.0
    %4263 = vmatmul.mubr.f32.gmra.mrb[0].mxu0 %v4126
    %v4264 = vpop.f32.mrb[0].mxu0
    %v4265 = vadd.f32 0.0, %v4264
    %v4266 = vpop.f32.mrb[0].mxu0
    %v4267 = vadd.f32 0.0, %v4266
    %4268 = vdwg.mxu0
    %4269 = vmatprep.subr.mxu0 %v204
    %4270 = vmatpush1.msra.mxu0 %v203
    %4271 = vmatprep.subr.mxu0 %v208
    %4272 = vmatpush1.msra.mxu0 %v207
    %4273 = vmatprep.subr.mxu0 %v212
    %4274 = vmatpush1.msra.mxu0 %v211
    %4275 = vmatprep.subr.mxu0 %v216
    %4276 = vmatpush1.msra.mxu0 %v215
    %4277 = vmatprep.subr.mxu0 %v220
    %4278 = vmatpush1.msra.mxu0 %v219
    %4279 = vmatprep.subr.mxu0 %v224
    %4280 = vmatpush1.msra.mxu0 %v223
    %4281 = vmatprep.subr.mxu0 %v228
    %4282 = vmatpush1.msra.mxu0 %v227
    %4283 = vmatprep.subr.mxu0 %v232
    %4284 = vmatpush1.msra.mxu0 %v231
    %4285 = vmatprep.subr.mxu0 %v236
    %4286 = vmatpush1.msra.mxu0 %v235
    %4287 = vmatprep.subr.mxu0 %v240
    %4288 = vmatpush1.msra.mxu0 %v239
    %4289 = vmatprep.subr.mxu0 %v244
    %4290 = vmatpush1.msra.mxu0 %v243
    %4291 = vmatprep.subr.mxu0 %v248
    %4292 = vmatpush1.msra.mxu0 %v247
    %4293 = vmatprep.subr.mxu0 %v252
    %4294 = vmatpush1.msra.mxu0 %v251
    %4295 = vmatprep.subr.mxu0 %v256
    %4296 = vmatpush1.msra.mxu0 %v255
    %4297 = vmatprep.subr.mxu0 %v260
    %4298 = vmatpush1.msra.mxu0 %v259
    %4299 = vmatprep.subr.mxu0 %v264
    %4300 = vmatpush1.msra.mxu0 %v263
    %4301 = vmatprep.subr.mxu0 0.0
    %4302 = vmatpush1.msra.mxu0 0.0
    %4303 = vmatprep.subr.mxu0 0.0
    %4304 = vmatpush1.msra.mxu0 0.0
    %4305 = vmatprep.subr.mxu0 0.0
    %4306 = vmatpush1.msra.mxu0 0.0
    %4307 = vmatprep.subr.mxu0 0.0
    %4308 = vmatpush1.msra.mxu0 0.0
    %4309 = vmatprep.subr.mxu0 0.0
    %4310 = vmatpush1.msra.mxu0 0.0
    %4311 = vmatprep.subr.mxu0 0.0
    %4312 = vmatpush1.msra.mxu0 0.0
    %4313 = vmatprep.subr.mxu0 0.0
    %4314 = vmatpush1.msra.mxu0 0.0
    %4315 = vmatprep.subr.mxu0 0.0
    %4316 = vmatpush1.msra.mxu0 0.0
    %4317 = vmatprep.subr.mxu0 0.0
    %4318 = vmatpush1.msra.mxu0 0.0
    %4319 = vmatprep.subr.mxu0 0.0
    %4320 = vmatpush1.msra.mxu0 0.0
    %4321 = vmatprep.subr.mxu0 0.0
    %4322 = vmatpush1.msra.mxu0 0.0
    %4323 = vmatprep.subr.mxu0 0.0
    %4324 = vmatpush1.msra.mxu0 0.0
    %4325 = vmatprep.subr.mxu0 0.0
    %4326 = vmatpush1.msra.mxu0 0.0
    %4327 = vmatprep.subr.mxu0 0.0
    %4328 = vmatpush1.msra.mxu0 0.0
    %4329 = vmatprep.subr.mxu0 0.0
    %4330 = vmatpush1.msra.mxu0 0.0
    %4331 = vmatprep.subr.mxu0 0.0
    %4332 = vmatpush1.msra.mxu0 0.0
    %4333 = vmatprep.mubr.f32.mxu0 0.0
    %4334 = vmatmul.mubr.f32.gmra.mrb[0].mxu0 %v3955
    %v4335 = vpop.f32.mrb[0].mxu0
    %v4336 = vadd.f32 %v4194, %v4335
    %v4337 = vpop.f32.mrb[0].mxu0
    %v4338 = vadd.f32 %v4196, %v4337
    %4339 = vdwg.mxu0
    %4340 = vmatprep.subr.mxu0 %v206
    %4341 = vmatpush1.msra.mxu0 %v205
    %4342 = vmatprep.subr.mxu0 %v210
    %4343 = vmatpush1.msra.mxu0 %v209
    %4344 = vmatprep.subr.mxu0 %v214
    %4345 = vmatpush1.msra.mxu0 %v213
    %4346 = vmatprep.subr.mxu0 %v218
    %4347 = vmatpush1.msra.mxu0 %v217
    %4348 = vmatprep.subr.mxu0 %v222
    %4349 = vmatpush1.msra.mxu0 %v221
    %4350 = vmatprep.subr.mxu0 %v226
    %4351 = vmatpush1.msra.mxu0 %v225
    %4352 = vmatprep.subr.mxu0 %v230
    %4353 = vmatpush1.msra.mxu0 %v229
    %4354 = vmatprep.subr.mxu0 %v234
    %4355 = vmatpush1.msra.mxu0 %v233
    %4356 = vmatprep.subr.mxu0 %v238
    %4357 = vmatpush1.msra.mxu0 %v237
    %4358 = vmatprep.subr.mxu0 %v242
    %4359 = vmatpush1.msra.mxu0 %v241
    %4360 = vmatprep.subr.mxu0 %v246
    %4361 = vmatpush1.msra.mxu0 %v245
    %4362 = vmatprep.subr.mxu0 %v250
    %4363 = vmatpush1.msra.mxu0 %v249
    %4364 = vmatprep.subr.mxu0 %v254
    %4365 = vmatpush1.msra.mxu0 %v253
    %4366 = vmatprep.subr.mxu0 %v258
    %4367 = vmatpush1.msra.mxu0 %v257
    %4368 = vmatprep.subr.mxu0 %v262
    %4369 = vmatpush1.msra.mxu0 %v261
    %4370 = vmatprep.subr.mxu0 %v266
    %4371 = vmatpush1.msra.mxu0 %v265
    %4372 = vmatprep.subr.mxu0 0.0
    %4373 = vmatpush1.msra.mxu0 0.0
    %4374 = vmatprep.subr.mxu0 0.0
    %4375 = vmatpush1.msra.mxu0 0.0
    %4376 = vmatprep.subr.mxu0 0.0
    %4377 = vmatpush1.msra.mxu0 0.0
    %4378 = vmatprep.subr.mxu0 0.0
    %4379 = vmatpush1.msra.mxu0 0.0
    %4380 = vmatprep.subr.mxu0 0.0
    %4381 = vmatpush1.msra.mxu0 0.0
    %4382 = vmatprep.subr.mxu0 0.0
    %4383 = vmatpush1.msra.mxu0 0.0
    %4384 = vmatprep.subr.mxu0 0.0
    %4385 = vmatpush1.msra.mxu0 0.0
    %4386 = vmatprep.subr.mxu0 0.0
    %4387 = vmatpush1.msra.mxu0 0.0
    %4388 = vmatprep.subr.mxu0 0.0
    %4389 = vmatpush1.msra.mxu0 0.0
    %4390 = vmatprep.subr.mxu0 0.0
    %4391 = vmatpush1.msra.mxu0 0.0
    %4392 = vmatprep.subr.mxu0 0.0
    %4393 = vmatpush1.msra.mxu0 0.0
    %4394 = vmatprep.subr.mxu0 0.0
    %4395 = vmatpush1.msra.mxu0 0.0
    %4396 = vmatprep.subr.mxu0 0.0
    %4397 = vmatpush1.msra.mxu0 0.0
    %4398 = vmatprep.subr.mxu0 0.0
    %4399 = vmatpush1.msra.mxu0 0.0
    %4400 = vmatprep.subr.mxu0 0.0
    %4401 = vmatpush1.msra.mxu0 0.0
    %4402 = vmatprep.subr.mxu0 0.0
    %4403 = vmatpush1.msra.mxu0 0.0
    %4404 = vmatprep.mubr.f32.mxu0 0.0
    %4405 = vmatmul.mubr.f32.gmra.mrb[0].mxu0 %v3955
    %v4406 = vpop.f32.mrb[0].mxu0
    %v4407 = vadd.f32 %v4265, %v4406
    %v4408 = vpop.f32.mrb[0].mxu0
    %v4409 = vadd.f32 %v4267, %v4408
    %4410 = vdwg.mxu0
    %v4411 = vadd.f32 %v4336, %v600
    %v4412 = vadd.f32 %v4338, %v604
    %v4413 = vadd.f32 %v4407, %v608
    %v4414 = vadd.f32 %v4409, %v612
    %v4415 = vmul.f32 %v4411, 0.5
    %v4416 = vtanh.pop %v4415
    %v4417 = vmul.f32 %v4416, 0.5
    %v4418 = vadd.f32 %v4417, 0.5
    %v4419 = vmul.f32 %v4412, 0.5
    %v4420 = vtanh.pop %v4419
    %v4421 = vmul.f32 %v4420, 0.5
    %v4422 = vadd.f32 %v4421, 0.5
    %v4423 = vtanh.pop %v4413
    %v4424 = vmul.f32 %v4414, 0.5
    %v4425 = vtanh.pop %v4424
    %v4426 = vmul.f32 %v4425, 0.5
    %v4427 = vadd.f32 %v4426, 0.5
    %v4428 = vmul.f32 %v4422, %v3953
    %v4429 = vmul.f32 %v4418, %v4423
    %v4430 = vadd.f32 %v4428, %v4429
    %v4431 = vtanh.pop %v4430
    %v4432 = vmul.f32 %v4427, %v4431
    %v4433 = vld [vmem:[%s7] sm:$0x1]
    %v4435 = vlaneseq
    %v4436 = vshrl.u32 %v4435, 7
    %v4437 = vsub.s32 0, %v4436
    %v4438 = vrot.slane %v4433, %v4437
    %v4440 = vmul.f32 %v4432, %v4438
    %4441 = vadd.xlane.f32.xlu0 %v4440
    %v4442 = vpop.xlane.xlu0 %4441
    %v4443 = vld [vmem:[#allocation3] sm:$0x1]
    %v4445 = vlaneseq
    %v4446 = vshrl.u32 %v4445, 7
    %v4447 = vsub.s32 0, %v4446
    %v4448 = vrot.slane %v4443, %v4447
    %v4450 = vadd.f32 %v4442, %v4448
    %vm4451 = vcmask 7168
    %4452 = vst.msk [vmem:[%s9] sm:$0xff] %vm4451, %v4450
    // Predicated region
    $region50: #{tpu_custom_call.1} parent=1 // pred_check
      _
    $region51: #{tpu_custom_call.1} parent=1 // pred_check_branch
      %4454 = sbr.rel (0) target = $region53
    $region52: #{tpu_custom_call.1} parent=1 // pred_region
      _
    $region53: #{tpu_custom_call.1} parent=1 // pred_fallthru
      _
    // Predicated region
    $region54: #{tpu_custom_call.1} parent=1 // pred_check
      _
    $region55: #{tpu_custom_call.1} parent=1 // pred_check_branch
      %4456 = sbr.rel (0) target = $region57
    $region56: #{tpu_custom_call.1} parent=1 // pred_region
      _
    $region57: #{tpu_custom_call.1} parent=1 // pred_fallthru
      _
    %4457 = vsyncpa [#allocation5], 1
    %4458 = vsyncpa [#allocation7], 1

</llo_original>
